<compile_context>
chip_gen: v6e
topology: v6e:2x2x1
jax: 0.10.0
libtpu: 0.0.40
codegen_flags: <defaults>
</compile_context>

<pallas_src>
import functools

import jax
import jax.numpy as jnp
import numpy as np
from jax.experimental import pallas as pl
from jax.experimental.pallas import tpu as pltpu

_NEG_INF = float("-inf")


def _pick_tile(dim, pref, align):
    """Largest tile <= pref that divides dim; must stay `align`-aligned unless it
    spans the whole dim (demo shapes are aligned; unaligned shapes should be
    padded by the caller)."""
    t = min(dim, pref)
    while dim % t:
        t -= 1
    assert t == dim or t % align == 0, (
        f"tile {t} for dim {dim} violates {align}-alignment; pad the input")
    return t


# ----------------------------------------------------------------------------
# Tiled linear:  out = x @ w (+ b)    (bf16 MXU operands, f32 accumulation)
# ----------------------------------------------------------------------------
def _linear_bias_kernel(x_ref, w_ref, b_ref, o_ref, acc_ref):
    @pl.when(pl.program_id(2) == 0)
    def _init():
        acc_ref[...] = jnp.zeros_like(acc_ref)

    acc_ref[...] += jnp.dot(x_ref[...], w_ref[...],
                            preferred_element_type=jnp.float32)

    @pl.when(pl.program_id(2) == pl.num_programs(2) - 1)
    def _finalize():
        o_ref[...] = (acc_ref[...] + b_ref[...]).astype(o_ref.dtype)


def _linear_nobias_kernel(x_ref, w_ref, o_ref, acc_ref):
    @pl.when(pl.program_id(2) == 0)
    def _init():
        acc_ref[...] = jnp.zeros_like(acc_ref)

    acc_ref[...] += jnp.dot(x_ref[...], w_ref[...],
                            preferred_element_type=jnp.float32)

    @pl.when(pl.program_id(2) == pl.num_programs(2) - 1)
    def _finalize():
        o_ref[...] = acc_ref[...].astype(o_ref.dtype)


def linear(x, w, b=None, *, tm=256, tn=512, tk=512, out_dtype=jnp.bfloat16):
    M, K = x.shape
    K2, N = w.shape
    assert K == K2
    tm = _pick_tile(M, tm, 8)
    tn = _pick_tile(N, tn, 128)
    tk = _pick_tile(K, tk, 128)
    grid = (M // tm, N // tn, K // tk)

    x_spec = pl.BlockSpec((tm, tk), lambda i, j, k: (i, k))
    w_spec = pl.BlockSpec((tk, tn), lambda i, j, k: (k, j))
    o_spec = pl.BlockSpec((tm, tn), lambda i, j, k: (i, j))
    scratch = [pltpu.VMEM((tm, tn), jnp.float32)]
    params = pltpu.CompilerParams(
        dimension_semantics=("parallel", "parallel", "arbitrary"))

    if b is None:
        return pl.pallas_call(
            _linear_nobias_kernel,
            out_shape=jax.ShapeDtypeStruct((M, N), out_dtype),
            grid=grid,
            in_specs=[x_spec, w_spec],
            out_specs=o_spec,
            scratch_shapes=scratch,
            compiler_params=params,
        )(x, w)

    b2 = b.reshape(1, N).astype(jnp.float32)
    b_spec = pl.BlockSpec((1, tn), lambda i, j, k: (0, j))
    return pl.pallas_call(
        _linear_bias_kernel,
        out_shape=jax.ShapeDtypeStruct((M, N), out_dtype),
        grid=grid,
        in_specs=[x_spec, w_spec, b_spec],
        out_specs=o_spec,
        scratch_shapes=scratch,
        compiler_params=params,
    )(x, w, b2)


# ----------------------------------------------------------------------------
# RoPE tables (NeoX-style rotate-half, rotary_dim == head_dim)
# ----------------------------------------------------------------------------
def rope_tables(positions, head_dim, base=10000.0):
    inv_freq = 1.0 / (base ** (jnp.arange(0, head_dim, 2, dtype=jnp.float32)
                               / head_dim))
    angles = positions.astype(jnp.float32)[:, None] * inv_freq[None, :]  # [S, d/2]
    cos = jnp.concatenate([jnp.cos(angles), jnp.cos(angles)], axis=-1)   # [S, d]
    sin = jnp.concatenate([jnp.sin(angles), jnp.sin(angles)], axis=-1)   # [S, d]
    return cos, sin


# ----------------------------------------------------------------------------
# Split packed QKV into head-major [nh, S, d] with RoPE + Q-scaling fused in.
# Runs once per token (strided column reads paid a single time), so that the
# flash-attention inner loop reads contiguous head-major K/V and does no RoPE.
# ----------------------------------------------------------------------------
def _rotate_half(x):
    d = x.shape[-1]
    return jnp.concatenate([-x[:, d // 2:], x[:, :d // 2]], axis=-1)


def _split_rope_kernel(q_ref, k_ref, v_ref, cos_ref, sin_ref,
                       qo_ref, ko_ref, vo_ref, *, scale):
    cos = cos_ref[...]
    sin = sin_ref[...]
    qf = q_ref[...].astype(jnp.float32)
    kf = k_ref[...].astype(jnp.float32)
    q_rope = qf * cos + _rotate_half(qf) * sin
    k_rope = kf * cos + _rotate_half(kf) * sin
    qo_ref[0] = (q_rope * scale).astype(qo_ref.dtype)   # fold 1/sqrt(d) into Q
    ko_ref[0] = k_rope.astype(ko_ref.dtype)
    vo_ref[0] = v_ref[...]


def split_heads_rope(qkv, cos, sin, *, num_heads, head_dim, scale, block_s=512):
    S, three_h = qkv.shape
    nh, d = num_heads, head_dim
    assert three_h == 3 * nh * d
    bs = _pick_tile(S, block_s, 8)
    grid = (nh, S // bs)

    q_in = pl.BlockSpec((bs, d), lambda h, si: (si, h))
    k_in = pl.BlockSpec((bs, d), lambda h, si: (si, nh + h))
    v_in = pl.BlockSpec((bs, d), lambda h, si: (si, 2 * nh + h))
    cs_in = pl.BlockSpec((bs, d), lambda h, si: (si, 0))
    out_spec = pl.BlockSpec((1, bs, d), lambda h, si: (h, si, 0))
    out_shape = jax.ShapeDtypeStruct((nh, S, d), jnp.bfloat16)

    q, k, v = pl.pallas_call(
        functools.partial(_split_rope_kernel, scale=scale),
        out_shape=(out_shape, out_shape, out_shape),
        grid=grid,
        in_specs=[q_in, k_in, v_in, cs_in, cs_in],
        out_specs=(out_spec, out_spec, out_spec),
        compiler_params=pltpu.CompilerParams(
            dimension_semantics=("parallel", "parallel")),
    )(qkv, qkv, qkv, cos, sin)
    return q, k, v


# ----------------------------------------------------------------------------
# Causal flash attention over head-major Q/K/V (already roped, Q pre-scaled)
# ----------------------------------------------------------------------------
def _flash_kernel(q_ref, k_ref, v_ref, o_ref, m_sc, l_sc, acc_sc, *, bq, bkv):
    qi = pl.program_id(1)
    ki = pl.program_id(2)

    @pl.when(ki == 0)
    def _init():
        m_sc[...] = jnp.full_like(m_sc, _NEG_INF)
        l_sc[...] = jnp.zeros_like(l_sc)
        acc_sc[...] = jnp.zeros_like(acc_sc)

    q_first_row = qi * bq
    q_last_row = qi * bq + bq - 1
    k_first_col = ki * bkv
    k_last_col = ki * bkv + bkv - 1

    def step(apply_mask):
        # s[q, k] = q_scaled . k   (contract last dims; no k.T materialized)
        s = jax.lax.dot_general(q_ref[0], k_ref[0], (((1,), (1,)), ((), ())),
                                preferred_element_type=jnp.float32)
        if apply_mask:
            row = q_first_row + jax.lax.broadcasted_iota(jnp.int32, (bq, bkv), 0)
            col = k_first_col + jax.lax.broadcasted_iota(jnp.int32, (bq, bkv), 1)
            s = jnp.where(col <= row, s, _NEG_INF)
        m_prev = m_sc[...]
        m_new = jnp.maximum(m_prev, jnp.max(s, axis=-1, keepdims=True))
        alpha = jnp.exp(m_prev - m_new)
        p = jnp.exp(s - m_new)                              # f32 softmax stats
        l_sc[...] = alpha * l_sc[...] + jnp.sum(p, axis=-1, keepdims=True)
        acc_sc[...] = alpha * acc_sc[...] + jnp.dot(
            p.astype(jnp.bfloat16), v_ref[0], preferred_element_type=jnp.float32)
        m_sc[...] = m_new

    # Does this KV block intersect the causal lower triangle at all?
    in_triangle = k_first_col <= q_last_row
    # Does it straddle the diagonal (only then is a per-element mask needed)?
    needs_mask = k_last_col > q_first_row

    @pl.when(jnp.logical_and(in_triangle, needs_mask))
    def _masked():
        step(apply_mask=True)

    @pl.when(jnp.logical_and(in_triangle, jnp.logical_not(needs_mask)))
    def _unmasked():
        step(apply_mask=False)

    @pl.when(ki == pl.num_programs(2) - 1)
    def _finalize():
        o_ref[...] = (acc_sc[...] / l_sc[...]).astype(o_ref.dtype)


def flash_attention(q, k, v, *, block_q=256, block_kv=512,
                    out_dtype=jnp.bfloat16):
    """q, k, v: [num_heads, S, head_dim] (q pre-scaled + roped, k roped).
    Returns causal attention output as [S, num_heads*head_dim]."""
    nh, S, d = q.shape
    bq = _pick_tile(S, block_q, 8)
    bkv = _pick_tile(S, block_kv, 128)
    grid = (nh, S // bq, S // bkv)

    def kv_index(h, qi, ki):
        # Clamp fully-masked (above-diagonal) steps to the last causally-valid
        # block: consecutive identical block indices -> no extra DMA is issued.
        last_valid = (qi * bq + bq - 1) // bkv
        return (h, jnp.minimum(ki, last_valid), 0)

    q_spec = pl.BlockSpec((1, bq, d), lambda h, qi, ki: (h, qi, 0))
    k_spec = pl.BlockSpec((1, bkv, d), kv_index)
    v_spec = pl.BlockSpec((1, bkv, d), kv_index)
    o_spec = pl.BlockSpec((bq, d), lambda h, qi, ki: (qi, h))

    kern = functools.partial(_flash_kernel, bq=bq, bkv=bkv)
    return pl.pallas_call(
        kern,
        out_shape=jax.ShapeDtypeStruct((S, nh * d), out_dtype),
        grid=grid,
        in_specs=[q_spec, k_spec, v_spec],
        out_specs=o_spec,
        scratch_shapes=[
            pltpu.VMEM((bq, 1), jnp.float32),   # running max m_i
            pltpu.VMEM((bq, 1), jnp.float32),   # running sum l_i
            pltpu.VMEM((bq, d), jnp.float32),   # output accumulator
        ],
        compiler_params=pltpu.CompilerParams(
            dimension_semantics=("parallel", "parallel", "arbitrary")),
    )(q, k, v)


# ----------------------------------------------------------------------------
# QWenAttention forward
# ----------------------------------------------------------------------------
class QWenAttentionPallas:
    def __init__(self, hidden_size, num_heads, max_position_embeddings, key):
        self.hidden_size = hidden_size
        self.num_heads = num_heads
        self.head_dim = hidden_size // num_heads
        self.scaling = self.head_dim ** -0.5
        self.max_position = max_position_embeddings
        k1, k2, k3 = jax.random.split(key, 3)
        scale = 0.02
        self.w_attn = (scale * jax.random.normal(
            k1, (hidden_size, 3 * hidden_size), dtype=jnp.float32)
            ).astype(jnp.bfloat16)
        self.b_attn = scale * jax.random.normal(
            k2, (3 * hidden_size,), dtype=jnp.float32)
        self.w_proj = (scale * jax.random.normal(
            k3, (hidden_size, hidden_size), dtype=jnp.float32)
            ).astype(jnp.bfloat16)

    def __call__(self, positions, hidden_states, kv_cache=None):
        # TODO(synk): kv_cache / InputMetadata paged decode path not implemented;
        # this is the prefill (prompt) forward with a causal mask.
        x = hidden_states.astype(jnp.bfloat16)
        qkv = linear(x, self.w_attn, self.b_attn)                 # [S, 3H] bf16
        cos, sin = rope_tables(positions, self.head_dim)
        q, k, v = split_heads_rope(
            qkv, cos, sin, num_heads=self.num_heads, head_dim=self.head_dim,
            scale=self.scaling)                                   # [nh, S, d]
        attn_out = flash_attention(q, k, v)                       # [S, H] bf16
        return linear(attn_out, self.w_proj, None)                # [S, H] bf16


# ----------------------------------------------------------------------------
# Pure-JAX reference (f32) for a loose numerical sanity check
# ----------------------------------------------------------------------------
def _reference(module, positions, hidden_states):
    x = hidden_states.astype(jnp.bfloat16).astype(jnp.float32)
    w_attn = module.w_attn.astype(jnp.float32)
    w_proj = module.w_proj.astype(jnp.float32)
    S = x.shape[0]
    nh, d = module.num_heads, module.head_dim
    qkv = x @ w_attn + module.b_attn
    q, k, v = jnp.split(qkv, 3, axis=-1)
    to_heads = lambda t: t.reshape(S, nh, d).transpose(1, 0, 2)
    q, k, v = to_heads(q), to_heads(k), to_heads(v)
    cos, sin = rope_tables(positions, d)

    def rope(t):
        t1, t2 = t[..., : d // 2], t[..., d // 2:]
        rot = jnp.concatenate([-t2, t1], axis=-1)
        return t * cos[None] + rot * sin[None]

    q, k = rope(q), rope(k)
    s = jnp.einsum("hqd,hkd->hqk", q, k) * module.scaling
    row = jnp.arange(S)[:, None]
    col = jnp.arange(S)[None, :]
    s = jnp.where(col <= row, s, -jnp.inf)
    p = jax.nn.softmax(s, axis=-1)
    o = jnp.einsum("hqk,hkd->hqd", p, v)
    o = o.transpose(1, 0, 2).reshape(S, nh * d)
    return o @ w_proj


if __name__ == "__main__":
    # Small but TPU-aligned shapes: head_dim = 128 (lane dim), seq multiple of 128.
    hidden_size = 512
    num_heads = 4
    seq = 256
    max_position = 1024

    key = jax.random.PRNGKey(0)
    k_params, k_x = jax.random.split(key)

    module = QWenAttentionPallas(hidden_size, num_heads, max_position, k_params)

    hidden_states = jax.random.normal(k_x, (seq, hidden_size), dtype=jnp.float32)
    positions = jnp.arange(seq, dtype=jnp.int32)

    # dummy kv cache (unused on the prefill path)
    head_dim = hidden_size // num_heads
    k_cache = jnp.zeros((num_heads, max_position, head_dim), dtype=jnp.bfloat16)
    v_cache = jnp.zeros((num_heads, max_position, head_dim), dtype=jnp.bfloat16)

    out = module(positions, hidden_states, kv_cache=(k_cache, v_cache))
    out = jax.block_until_ready(out)
    assert out.shape == (seq, hidden_size)

    ref = _reference(module, positions, hidden_states)
    np.testing.assert_allclose(np.asarray(out, dtype=np.float32),
                               np.asarray(ref, dtype=np.float32),
                               rtol=5e-2, atol=5e-2)
    print("KERNEL_OK")
</pallas_src>

<mosaic_0001>
module attributes {stable_mosaic.version = 11 : i64} {
  func.func @_linear_bias_kernel(%arg0: i32, %arg1: i32, %arg2: i32, %arg3: memref<256x512xbf16, #tpu.memory_space<vmem>>, %arg4: memref<512x512xbf16, #tpu.memory_space<vmem>>, %arg5: memref<1x512xf32, #tpu.memory_space<vmem>>, %arg6: memref<256x512xbf16, #tpu.memory_space<vmem>>, %arg7: memref<256x512xf32, #tpu.memory_space<vmem>>) attributes {dimension_semantics = [#tpu.dimension_semantics<parallel>, #tpu.dimension_semantics<parallel>, #tpu.dimension_semantics<arbitrary>], iteration_bounds = array<i64: 1, 3, 1>, scalar_prefetch = 0 : i64, scratch_operands = 1 : i64, tpu.core_type = #tpu.core_type<tc>, window_params = [{transform_indices = @transform_0, window_bounds = array<i64: 256, 512>}, {transform_indices = @transform_1, window_bounds = array<i64: 512, 512>}, {transform_indices = @transform_2, window_bounds = array<i64: 1, 512>}, {transform_indices = @transform_3, window_bounds = array<i64: 256, 512>}]} {
    %c0_i32 = arith.constant 0 : i32
    %0 = arith.cmpi eq, %arg2, %c0_i32 : i32
    %1 = arith.extui %0 : i1 to i32
    %c0_i32_0 = arith.constant 0 : i32
    %2 = arith.cmpi ne, %1, %c0_i32_0 : i32
    scf.if %2 {
      %cst_10 = arith.constant 0.000000e+00 : f32
      %12 = vector.broadcast %cst_10 : f32 to vector<256x512xf32>
      %c0_11 = arith.constant 0 : index
      %c0_12 = arith.constant 0 : index
      %13 = vector.load %arg7[%c0_11, %c0_12] : memref<256x512xf32, #tpu.memory_space<vmem>>, vector<256x512xf32>
      tpu.vector_store %arg7[%c0_11, %c0_12], %12 {strides = array<i32>} : memref<256x512xf32, #tpu.memory_space<vmem>>, vector<256x512xf32>,
    } else {
    }
    %c0 = arith.constant 0 : index
    %c0_1 = arith.constant 0 : index
    %3 = vector.load %arg7[%c0, %c0_1] : memref<256x512xf32, #tpu.memory_space<vmem>>, vector<256x512xf32>
    %c0_2 = arith.constant 0 : index
    %c0_3 = arith.constant 0 : index
    %4 = vector.load %arg3[%c0_2, %c0_3] : memref<256x512xbf16, #tpu.memory_space<vmem>>, vector<256x512xbf16>
    %c0_4 = arith.constant 0 : index
    %c0_5 = arith.constant 0 : index
    %5 = vector.load %arg4[%c0_4, %c0_5] : memref<512x512xbf16, #tpu.memory_space<vmem>>, vector<512x512xbf16>
    %cst = arith.constant dense<0.000000e+00> : vector<256x512xf32>
    %6 = tpu.matmul %4, %5, %cst {dimension_numbers = #tpu.dot_dimension_numbers<[1], [0], [0], [1], [0, 0, 1, 1], [], []>} : vector<256x512xbf16>, vector<512x512xbf16>, vector<256x512xf32> -> vector<256x512xf32>
    %7 = arith.addf %3, %6 : vector<256x512xf32>
    %c0_6 = arith.constant 0 : index
    %c0_7 = arith.constant 0 : index
    %8 = vector.load %arg7[%c0_6, %c0_7] : memref<256x512xf32, #tpu.memory_space<vmem>>, vector<256x512xf32>
    tpu.vector_store %arg7[%c0_6, %c0_7], %7 {strides = array<i32>} : memref<256x512xf32, #tpu.memory_space<vmem>>, vector<256x512xf32>,
    %c0_i32_8 = arith.constant 0 : i32
    %9 = arith.cmpi eq, %arg2, %c0_i32_8 : i32
    %10 = arith.extui %9 : i1 to i32
    %c0_i32_9 = arith.constant 0 : i32
    %11 = arith.cmpi ne, %10, %c0_i32_9 : i32
    scf.if %11 {
      %c0_10 = arith.constant 0 : index
      %c0_11 = arith.constant 0 : index
      %12 = vector.load %arg7[%c0_10, %c0_11] : memref<256x512xf32, #tpu.memory_space<vmem>>, vector<256x512xf32>
      %c0_12 = arith.constant 0 : index
      %c0_13 = arith.constant 0 : index
      %13 = vector.load %arg5[%c0_12, %c0_13] : memref<1x512xf32, #tpu.memory_space<vmem>>, vector<1x512xf32>
      %14 = vector.broadcast %13 : vector<1x512xf32> to vector<256x512xf32>
      %15 = arith.addf %12, %14 : vector<256x512xf32>
      %16 = arith.truncf %15 : vector<256x512xf32> to vector<256x512xbf16>
      %c0_14 = arith.constant 0 : index
      %c0_15 = arith.constant 0 : index
      %17 = vector.load %arg6[%c0_14, %c0_15] : memref<256x512xbf16, #tpu.memory_space<vmem>>, vector<256x512xbf16>
      tpu.vector_store %arg6[%c0_14, %c0_15], %16 {strides = array<i32>} : memref<256x512xbf16, #tpu.memory_space<vmem>>, vector<256x512xbf16>,
    } else {
    }
    return
  }
  func.func @transform_0(%arg0: i32, %arg1: i32, %arg2: i32) -> (i32, i32) {
    %c0_i32 = arith.constant 0 : i32
    return %arg0, %arg2 : i32, i32
  }
  func.func @transform_1(%arg0: i32, %arg1: i32, %arg2: i32) -> (i32, i32) {
    %c0_i32 = arith.constant 0 : i32
    return %arg2, %arg1 : i32, i32
  }
  func.func @transform_2(%arg0: i32, %arg1: i32, %arg2: i32) -> (i32, i32) {
    %c0_i32 = arith.constant 0 : i32
    %c0_i32_0 = arith.constant 0 : i32
    return %c0_i32, %arg1 : i32, i32
  }
  func.func @transform_3(%arg0: i32, %arg1: i32, %arg2: i32) -> (i32, i32) {
    %c0_i32 = arith.constant 0 : i32
    return %arg0, %arg1 : i32, i32
  }
}

</mosaic_0001>

<llo_original>
// kernel: tpu_custom_call.1
$region0: #{tpu_custom_call.1}
  #allocation0 [shape = 'u32[]', space=smem, size = 0x4, offset = 0x4, fixed_abs, tag = 'smem constant byte address 0x4 - core index']
  #allocation1 [shape = 'u32[144,128]{1,0:T(1,128)}', space=vmem, size = 0x12000, scoped, tag = 'internal scratch']
  #allocation2 [shape = 'f32[256,512]{1,0:T(8,128)}', space=vmem, size = 0x80000, scoped, tag = 'scratch operand']
  %s0 = inlined_call_operand.hbm [shape: bf16[256,512], index: 0, kind: input, shape index: {}]
  %s1 = inlined_call_operand.hbm [shape: bf16[512,1536], index: 1, kind: input, shape index: {}]
  %s2 = inlined_call_operand.hbm [shape: f32[1,1536], index: 2, kind: input, shape index: {}]
  %s3 = inlined_call_operand.hbm [shape: bf16[256,1536], index: 3, kind: output, shape index: {}]
  %s4 = sld [smem:[#allocation0]]
  $region65: #{tpu_custom_call.1} parent=0
    _
  %s6 = ssub.s32 1, %s4
  %s7 = scalar_select 0, %s6, %s4
  $region1: #{tpu_custom_call.1} parent=0
    #allocation3 [shape = 'u8[262144]{0}', space=vmem, size = 0x40000, scoped, tag = 'input window, operand 0, single buffered']
    #allocation4 [shape = 's32[2]{0}', space=sflag, size = 0x8, scoped, tag = 'scoped memory for tpu_custom_call.1']
    #allocation5 [shape = 's32[2]{0}', space=sflag, size = 0x8, scoped, tag = 'scoped memory for tpu_custom_call.1']
    #allocation6 [shape = 'u8[1048576]{0}', space=vmem, size = 0x100000, scoped, tag = 'input window, operand 1']
    #allocation7 [shape = 's32[2]{0}', space=sflag, size = 0x8, scoped, tag = 'scoped memory for tpu_custom_call.1']
    #allocation8 [shape = 'u8[4096]{0}', space=vmem, size = 0x1000, scoped, tag = 'input window, operand 2']
    #allocation9 [shape = 'u8[524288]{0}', space=vmem, size = 0x80000, scoped, tag = 'output window, operand 0']
    %8 = vsyncpa [#allocation4], 0
    %9 = vsyncpa [#allocation7], 0
    %s10 = scalar_lea.sflag [#allocation7], 1
    %11 = vsyncpa %s10, 0
    %12 = vsyncpa [#allocation5], 0
    %s13 = scalar_lea.sflag [#allocation5], 1
    %14 = vsyncpa %s13, 0
    loop: start=0, step=1, limit=5
    $region2: #{tpu_custom_call.1} parent=1 // loop_pre_header
      _
    $region3: #{tpu_custom_call.1} parent=1 // loop_header
      %s16 = sphi 0, %s20
      %p17 = scmp.ge.s32.totalorder %s16, 5
      %s23 = sphi 0, %s42
      %s24 = sphi 0, %s38
      %s25 = sphi 0, %s34
      %s26 = sphi 0, %s23
      %s27 = sphi 0, %s24
      %s28 = sphi 0, %s25
      %s29 = sphi 0, %s26
      %s30 = sphi 0, %s27
      %s31 = sphi 0, %s28
      %s47 = sphi 0, %s49
      %s50 = sphi 0, %s47
      %s51 = sphi 0, %s50
      %s67 = sphi 0, %s51
      %s75 = sphi 0, %s77
      %s78 = sphi 0, %s75
      %s79 = sphi 0, %s78
      %s95 = sphi 0, %s79
      %s101 = sphi 0, %s103
      %s104 = sphi 0, %s101
      %s105 = sphi 0, %s104
      %s121 = sphi 0, %s105
      %s129 = sphi 0, %s131
      %s132 = sphi 0, %s129
      %s133 = sphi 0, %s132
      %s149 = sphi 0, %s133
    $region4: #{tpu_custom_call.1} parent=1 // loop_header_branch
      %19 = sbr.rel (%p17) target = $region8
    $region5: #{tpu_custom_call.1} parent=1 // loop_body
      %s21 = ssub.s32 %s16, 1
      %s22 = ssub.s32 %s16, 2
      %s32 = sadd.s32 1, %s25
      %p33 = scmp.ge.s32.totalorder %s32, 1
      %s34 = scalar_select %p33, 0, %s32
      %s35 = sadd.s32 1, %s24
      %s36 = scalar_select %p33, %s35, %s24
      %p37 = scmp.ge.s32.totalorder %s36, 3
      %s38 = scalar_select %p37, 0, %s36
      %s39 = sadd.s32 1, %s23
      %s40 = scalar_select %p37, %s39, %s23
      %p41 = scmp.ge.s32.totalorder %s40, 1
      %s42 = scalar_select %p41, 0, %s40
      %s43 = ssub.s32 %s23, %s42
      %s44 = ssub.s32 %s25, %s34
      %s45 = sor.u32 %s43, %s44
      %p46 = scmp.eq.s32.totalorder %s45, 0
      %s48 = sadd.s32 %s47, 1
      %s49 = scalar_select %p46, %s47, %s48
      %p52 = pneg %p46
      %p53 = scmp.eq.s32.totalorder %s16, 2
      %p54 = por %p52, %p53
      %p55 = scmp.ne.s32.totalorder %s47, %s50
      %p56 = scmp.eq.s32.totalorder %s16, 0
      %p57 = por %p55, %p56
      %p58 = scmp.ne.s32.totalorder %s47, %s50
      %p59 = scmp.eq.s32.totalorder %s21, 2
      %p60 = por %p58, %p59
      %p61 = scmp.ne.s32.totalorder %s50, %s51
      %p62 = scmp.eq.s32.totalorder %s21, 0
      %p63 = por %p61, %p62
      %p64 = scmp.ne.s32.totalorder %s50, %s51
      %p65 = scmp.eq.s32.totalorder %s22, 2
      %p66 = por %p64, %p65
      %p68 = scmp.ne.s32.totalorder %s51, %s67
      %p69 = scmp.eq.s32.totalorder %s22, 0
      %p70 = por %p68, %p69
      %s71 = ssub.s32 %s25, %s34
      %s72 = ssub.s32 %s24, %s38
      %s73 = sor.u32 %s71, %s72
      %p74 = scmp.eq.s32.totalorder %s73, 0
      %s76 = sadd.s32 %s75, 1
      %s77 = scalar_select %p74, %s75, %s76
      %p80 = pneg %p74
      %p81 = scmp.eq.s32.totalorder %s16, 2
      %p82 = por %p80, %p81
      %p83 = scmp.ne.s32.totalorder %s75, %s78
      %p84 = scmp.eq.s32.totalorder %s16, 0
      %p85 = por %p83, %p84
      %p86 = scmp.ne.s32.totalorder %s75, %s78
      %p87 = scmp.eq.s32.totalorder %s21, 2
      %p88 = por %p86, %p87
      %p89 = scmp.ne.s32.totalorder %s78, %s79
      %p90 = scmp.eq.s32.totalorder %s21, 0
      %p91 = por %p89, %p90
      %p92 = scmp.ne.s32.totalorder %s78, %s79
      %p93 = scmp.eq.s32.totalorder %s22, 2
      %p94 = por %p92, %p93
      %p96 = scmp.ne.s32.totalorder %s79, %s95
      %p97 = scmp.eq.s32.totalorder %s22, 0
      %p98 = por %p96, %p97
      %s99 = ssub.s32 %s24, %s38
      %p100 = scmp.eq.s32.totalorder %s99, 0
      %s102 = sadd.s32 %s101, 1
      %s103 = scalar_select %p100, %s101, %s102
      %p106 = pneg %p100
      %p107 = scmp.eq.s32.totalorder %s16, 2
      %p108 = por %p106, %p107
      %p109 = scmp.ne.s32.totalorder %s101, %s104
      %p110 = scmp.eq.s32.totalorder %s16, 0
      %p111 = por %p109, %p110
      %p112 = scmp.ne.s32.totalorder %s101, %s104
      %p113 = scmp.eq.s32.totalorder %s21, 2
      %p114 = por %p112, %p113
      %p115 = scmp.ne.s32.totalorder %s104, %s105
      %p116 = scmp.eq.s32.totalorder %s21, 0
      %p117 = por %p115, %p116
      %p118 = scmp.ne.s32.totalorder %s104, %s105
      %p119 = scmp.eq.s32.totalorder %s22, 2
      %p120 = por %p118, %p119
      %p122 = scmp.ne.s32.totalorder %s105, %s121
      %p123 = scmp.eq.s32.totalorder %s22, 0
      %p124 = por %p122, %p123
      %s125 = ssub.s32 %s23, %s42
      %s126 = ssub.s32 %s24, %s38
      %s127 = sor.u32 %s125, %s126
      %p128 = scmp.eq.s32.totalorder %s127, 0
      %s130 = sadd.s32 %s129, 1
      %s131 = scalar_select %p128, %s129, %s130
      %p134 = pneg %p128
      %p135 = scmp.eq.s32.totalorder %s16, 2
      %p136 = por %p134, %p135
      %p137 = scmp.ne.s32.totalorder %s129, %s132
      %p138 = scmp.eq.s32.totalorder %s16, 0
      %p139 = por %p137, %p138
      %p140 = scmp.ne.s32.totalorder %s129, %s132
      %p141 = scmp.eq.s32.totalorder %s21, 2
      %p142 = por %p140, %p141
      %p143 = scmp.ne.s32.totalorder %s132, %s133
      %p144 = scmp.eq.s32.totalorder %s21, 0
      %p145 = por %p143, %p144
      %p146 = scmp.ne.s32.totalorder %s132, %s133
      %p147 = scmp.eq.s32.totalorder %s22, 2
      %p148 = por %p146, %p147
      %p150 = scmp.ne.s32.totalorder %s133, %s149
      %p151 = scmp.eq.s32.totalorder %s22, 0
      %p152 = por %p150, %p151
      %p153 = scmp.le.s32.totalorder 1, %s16
      %p154 = scmp.lt.s32.totalorder %s16, 4
      %p155 = pnand %p153, %p154
      %p156 = pneg %p155
      // Predicated region
      $region9: #{tpu_custom_call.1} parent=5 // pred_check
        _
      $region10: #{tpu_custom_call.1} parent=5 // pred_check_branch
        %158 = sbr.rel (%p155) target = $region12
      $region11: #{tpu_custom_call.1} parent=5 // pred_region
        %s159 = ssub.s32 %s16, 1
        // Predicated region
        $region13: #{tpu_custom_call.1} parent=11 // pred_check
          %p160 = pneg %p63
        $region14: #{tpu_custom_call.1} parent=11 // pred_check_branch
          %162 = sbr.rel (%p160) target = $region16
        $region15: #{tpu_custom_call.1} parent=11 // pred_region
          %s163 = smul.u32 32, %s26
          %s164 = smul.u32 4, %s28
          %s166 = ssub.s32 8192, 8192
          %167 = vsyncadd [#allocation4], %s166
          %s168 = smul.addr %s163, 4
          %s169 = sadd.s32 %s164, %s168
          %s170 = smul.addr %s169, 64
          %s171 = scalar_lea.hbm %s0, %s170
          %s172 = sshll.u32 [#allocation3], 4
          %s173 = int_to_ptr.vmem [resolvable:$true] %s172
          %178 = dma.hbm_to_vmem [thread:$0]  %s171, 8192, %s173, [#allocation4], 256, 256, 16
        $region16: #{tpu_custom_call.1} parent=11 // pred_fallthru
          _
      $region12: #{tpu_custom_call.1} parent=5 // pred_fallthru
        _
      %p179 = scmp.lt.s32.totalorder %s16, 3
      // Predicated region
      $region17: #{tpu_custom_call.1} parent=5 // pred_check
        %p180 = pneg %p179
      $region18: #{tpu_custom_call.1} parent=5 // pred_check_branch
        %182 = sbr.rel (%p180) target = $region20
      $region19: #{tpu_custom_call.1} parent=5 // pred_region
        // Predicated region
        $region21: #{tpu_custom_call.1} parent=19 // pred_check
          %p183 = pneg %p85
        $region22: #{tpu_custom_call.1} parent=19 // pred_check_branch
          %185 = sbr.rel (%p183) target = $region24
        $region23: #{tpu_custom_call.1} parent=19 // pred_region
          %s186 = sand.u32 %s16, 1
          %s187 = scalar_lea.sflag [#allocation7], %s186
          %s188 = sand.u32 %s75, 1
          %s189 = smul.addr %s188, 1024
          %s190 = scalar_lea.vmem [#allocation6], %s189
          %s191 = smul.u32 64, %s25
          %s192 = smul.u32 4, %s24
          %s194 = ssub.s32 16384, 16384
          %195 = vsyncadd %s187, %s194
          %s196 = smul.addr %s191, 12
          %s197 = sadd.s32 %s192, %s196
          %s198 = smul.addr %s197, 64
          %s199 = scalar_lea.hbm %s1, %s198
          %s200 = sshll.u32 %s190, 4
          %s201 = int_to_ptr.vmem [resolvable:$true] %s200
          %206 = dma.hbm_to_vmem [thread:$0]  %s199, 16384, %s201, %s187, 768, 256, 16
        $region24: #{tpu_custom_call.1} parent=19 // pred_fallthru
          _
        // Predicated region
        $region25: #{tpu_custom_call.1} parent=19 // pred_check
          %p207 = pneg %p111
        $region26: #{tpu_custom_call.1} parent=19 // pred_check_branch
          %209 = sbr.rel (%p207) target = $region28
        $region27: #{tpu_custom_call.1} parent=19 // pred_region
          %s210 = sand.u32 %s16, 1
          %s211 = scalar_lea.sflag [#allocation7], %s210
          %s212 = sand.u32 %s101, 1
          %s213 = smul.addr %s212, 4
          %s214 = scalar_lea.vmem [#allocation8], %s213
          %s215 = smul.u32 4, %s24
          %s217 = ssub.s32 64, 64
          %218 = vsyncadd %s211, %s217
          %s219 = smul.addr %s215, 16
          %s220 = scalar_lea.hbm %s2, %s219
          %s222 = sshll.u32 %s214, 4
          %s223 = int_to_ptr.vmem [resolvable:$true] %s222
          %225 = dma.hbm_to_vmem [thread:$0]  %s220, 64, %s223, %s211
        $region28: #{tpu_custom_call.1} parent=19 // pred_fallthru
          _
      $region20: #{tpu_custom_call.1} parent=5 // pred_fallthru
        _
      %p226 = scmp.le.s32.totalorder 1, %s16
      %p227 = scmp.lt.s32.totalorder %s16, 4
      %p228 = pnand %p226, %p227
      %p229 = pneg %p228
      // Predicated region
      $region29: #{tpu_custom_call.1} parent=5 // pred_check
        _
      $region30: #{tpu_custom_call.1} parent=5 // pred_check_branch
        %231 = sbr.rel (%p228) target = $region32
      $region31: #{tpu_custom_call.1} parent=5 // pred_region
        %s232 = ssub.s32 %s16, 1
        // Predicated region
        $region33: #{tpu_custom_call.1} parent=31 // pred_check
          %p233 = pneg %p63
        $region34: #{tpu_custom_call.1} parent=31 // pred_check_branch
          %235 = sbr.rel (%p233) target = $region36
        $region35: #{tpu_custom_call.1} parent=31 // pred_region
          %236 = dma.done [#allocation4], 8192
        $region36: #{tpu_custom_call.1} parent=31 // pred_fallthru
          _
        %s237 = sand.u32 %s21, 1
        %s238 = scalar_lea.sflag [#allocation7], %s237
        %s239 = sand.u32 %s78, 1
        %s240 = smul.addr %s239, 1024
        %s241 = scalar_lea.vmem [#allocation6], %s240
        // Predicated region
        $region37: #{tpu_custom_call.1} parent=31 // pred_check
          %p242 = pneg %p91
        $region38: #{tpu_custom_call.1} parent=31 // pred_check_branch
          %244 = sbr.rel (%p242) target = $region40
        $region39: #{tpu_custom_call.1} parent=31 // pred_region
          %245 = dma.done %s238, 16384
        $region40: #{tpu_custom_call.1} parent=31 // pred_fallthru
          _
        %s246 = sand.u32 %s21, 1
        %s247 = scalar_lea.sflag [#allocation7], %s246
        %s248 = sand.u32 %s104, 1
        %s249 = smul.addr %s248, 4
        %s250 = scalar_lea.vmem [#allocation8], %s249
        // Predicated region
        $region41: #{tpu_custom_call.1} parent=31 // pred_check
          %p251 = pneg %p117
        $region42: #{tpu_custom_call.1} parent=31 // pred_check_branch
          %253 = sbr.rel (%p251) target = $region44
        $region43: #{tpu_custom_call.1} parent=31 // pred_region
          %254 = dma.done %s247, 64
        $region44: #{tpu_custom_call.1} parent=31 // pred_fallthru
          _
        %p255 = pneg %p63
        %p256 = pneg %p60
        %s257 = sand.u32 %s21, 1
        %s258 = scalar_lea.sflag [#allocation7], %s257
        %s259 = sand.u32 %s78, 1
        %s260 = smul.addr %s259, 1024
        %s261 = scalar_lea.vmem [#allocation6], %s260
        %p262 = pneg %p91
        %p263 = pneg %p88
        %s264 = sand.u32 %s21, 1
        %s265 = scalar_lea.sflag [#allocation7], %s264
        %s266 = sand.u32 %s104, 1
        %s267 = smul.addr %s266, 4
        %s268 = scalar_lea.vmem [#allocation8], %s267
        %p269 = pneg %p117
        %p270 = pneg %p114
        %p271 = pneg %p145
        %p272 = pneg %p142
        %s273 = sand.u32 %s132, 1
        %s274 = scalar_lea.sflag [#allocation5], %s273
        %s275 = sand.u32 %s132, 1
        %s276 = smul.addr %s275, 512
        %s277 = scalar_lea.vmem [#allocation9], %s276
        %s278 = smul.u32 32, %s26
        %s279 = smul.u32 4, %s28
        %s280 = smul.u32 64, %s28
        %s281 = smul.u32 4, %s27
        %s282 = smul.u32 4, %s27
        %s283 = smul.u32 32, %s26
        %s284 = smul.u32 4, %s27
        %p285 = scmp.eq.s32.totalorder %s28, 0
        // Predicated region
        $region45: #{tpu_custom_call.1} parent=31 // pred_check
          %p286 = pneg %p285
        $region46: #{tpu_custom_call.1} parent=31 // pred_check_branch
          %288 = sbr.rel (%p286) target = $region48
        $region47: #{tpu_custom_call.1} parent=31 // pred_region
          %289 = vst [vmem:[#allocation2] sm:$0xff] 0.0
          %290 = vst [vmem:[#allocation2 + $0x8] sm:$0xff] 0.0
          %291 = vst [vmem:[#allocation2 + $0x10] sm:$0xff] 0.0
          %292 = vst [vmem:[#allocation2 + $0x18] sm:$0xff] 0.0
          %293 = vst [vmem:[#allocation2 + $0x20] sm:$0xff] 0.0
          %294 = vst [vmem:[#allocation2 + $0x28] sm:$0xff] 0.0
          %295 = vst [vmem:[#allocation2 + $0x30] sm:$0xff] 0.0
          %296 = vst [vmem:[#allocation2 + $0x38] sm:$0xff] 0.0
          %297 = vst [vmem:[#allocation2 + $0x40] sm:$0xff] 0.0
          %298 = vst [vmem:[#allocation2 + $0x48] sm:$0xff] 0.0
          %299 = vst [vmem:[#allocation2 + $0x50] sm:$0xff] 0.0
          %300 = vst [vmem:[#allocation2 + $0x58] sm:$0xff] 0.0
          %301 = vst [vmem:[#allocation2 + $0x60] sm:$0xff] 0.0
          %302 = vst [vmem:[#allocation2 + $0x68] sm:$0xff] 0.0
          %303 = vst [vmem:[#allocation2 + $0x70] sm:$0xff] 0.0
          %304 = vst [vmem:[#allocation2 + $0x78] sm:$0xff] 0.0
          %305 = vst [vmem:[#allocation2 + $0x80] sm:$0xff] 0.0
          %306 = vst [vmem:[#allocation2 + $0x88] sm:$0xff] 0.0
          %307 = vst [vmem:[#allocation2 + $0x90] sm:$0xff] 0.0
          %308 = vst [vmem:[#allocation2 + $0x98] sm:$0xff] 0.0
          %309 = vst [vmem:[#allocation2 + $0xa0] sm:$0xff] 0.0
          %310 = vst [vmem:[#allocation2 + $0xa8] sm:$0xff] 0.0
          %311 = vst [vmem:[#allocation2 + $0xb0] sm:$0xff] 0.0
          %312 = vst [vmem:[#allocation2 + $0xb8] sm:$0xff] 0.0
          %313 = vst [vmem:[#allocation2 + $0xc0] sm:$0xff] 0.0
          %314 = vst [vmem:[#allocation2 + $0xc8] sm:$0xff] 0.0
          %315 = vst [vmem:[#allocation2 + $0xd0] sm:$0xff] 0.0
          %316 = vst [vmem:[#allocation2 + $0xd8] sm:$0xff] 0.0
          %317 = vst [vmem:[#allocation2 + $0xe0] sm:$0xff] 0.0
          %318 = vst [vmem:[#allocation2 + $0xe8] sm:$0xff] 0.0
          %319 = vst [vmem:[#allocation2 + $0xf0] sm:$0xff] 0.0
          %320 = vst [vmem:[#allocation2 + $0xf8] sm:$0xff] 0.0
          %321 = vst [vmem:[#allocation2 + $0x100] sm:$0xff] 0.0
          %322 = vst [vmem:[#allocation2 + $0x108] sm:$0xff] 0.0
          %323 = vst [vmem:[#allocation2 + $0x110] sm:$0xff] 0.0
          %324 = vst [vmem:[#allocation2 + $0x118] sm:$0xff] 0.0
          %325 = vst [vmem:[#allocation2 + $0x120] sm:$0xff] 0.0
          %326 = vst [vmem:[#allocation2 + $0x128] sm:$0xff] 0.0
          %327 = vst [vmem:[#allocation2 + $0x130] sm:$0xff] 0.0
          %328 = vst [vmem:[#allocation2 + $0x138] sm:$0xff] 0.0
          %329 = vst [vmem:[#allocation2 + $0x140] sm:$0xff] 0.0
          %330 = vst [vmem:[#allocation2 + $0x148] sm:$0xff] 0.0
          %331 = vst [vmem:[#allocation2 + $0x150] sm:$0xff] 0.0
          %332 = vst [vmem:[#allocation2 + $0x158] sm:$0xff] 0.0
          %333 = vst [vmem:[#allocation2 + $0x160] sm:$0xff] 0.0
          %334 = vst [vmem:[#allocation2 + $0x168] sm:$0xff] 0.0
          %335 = vst [vmem:[#allocation2 + $0x170] sm:$0xff] 0.0
          %336 = vst [vmem:[#allocation2 + $0x178] sm:$0xff] 0.0
          %337 = vst [vmem:[#allocation2 + $0x180] sm:$0xff] 0.0
          %338 = vst [vmem:[#allocation2 + $0x188] sm:$0xff] 0.0
          %339 = vst [vmem:[#allocation2 + $0x190] sm:$0xff] 0.0
          %340 = vst [vmem:[#allocation2 + $0x198] sm:$0xff] 0.0
          %341 = vst [vmem:[#allocation2 + $0x1a0] sm:$0xff] 0.0
          %342 = vst [vmem:[#allocation2 + $0x1a8] sm:$0xff] 0.0
          %343 = vst [vmem:[#allocation2 + $0x1b0] sm:$0xff] 0.0
          %344 = vst [vmem:[#allocation2 + $0x1b8] sm:$0xff] 0.0
          %345 = vst [vmem:[#allocation2 + $0x1c0] sm:$0xff] 0.0
          %346 = vst [vmem:[#allocation2 + $0x1c8] sm:$0xff] 0.0
          %347 = vst [vmem:[#allocation2 + $0x1d0] sm:$0xff] 0.0
          %348 = vst [vmem:[#allocation2 + $0x1d8] sm:$0xff] 0.0
          %349 = vst [vmem:[#allocation2 + $0x1e0] sm:$0xff] 0.0
          %350 = vst [vmem:[#allocation2 + $0x1e8] sm:$0xff] 0.0
          %351 = vst [vmem:[#allocation2 + $0x1f0] sm:$0xff] 0.0
          %352 = vst [vmem:[#allocation2 + $0x1f8] sm:$0xff] 0.0
          %353 = vst [vmem:[#allocation2 + $0x200] sm:$0xff] 0.0
          %354 = vst [vmem:[#allocation2 + $0x208] sm:$0xff] 0.0
          %355 = vst [vmem:[#allocation2 + $0x210] sm:$0xff] 0.0
          %356 = vst [vmem:[#allocation2 + $0x218] sm:$0xff] 0.0
          %357 = vst [vmem:[#allocation2 + $0x220] sm:$0xff] 0.0
          %358 = vst [vmem:[#allocation2 + $0x228] sm:$0xff] 0.0
          %359 = vst [vmem:[#allocation2 + $0x230] sm:$0xff] 0.0
          %360 = vst [vmem:[#allocation2 + $0x238] sm:$0xff] 0.0
          %361 = vst [vmem:[#allocation2 + $0x240] sm:$0xff] 0.0
          %362 = vst [vmem:[#allocation2 + $0x248] sm:$0xff] 0.0
          %363 = vst [vmem:[#allocation2 + $0x250] sm:$0xff] 0.0
          %364 = vst [vmem:[#allocation2 + $0x258] sm:$0xff] 0.0
          %365 = vst [vmem:[#allocation2 + $0x260] sm:$0xff] 0.0
          %366 = vst [vmem:[#allocation2 + $0x268] sm:$0xff] 0.0
          %367 = vst [vmem:[#allocation2 + $0x270] sm:$0xff] 0.0
          %368 = vst [vmem:[#allocation2 + $0x278] sm:$0xff] 0.0
          %369 = vst [vmem:[#allocation2 + $0x280] sm:$0xff] 0.0
          %370 = vst [vmem:[#allocation2 + $0x288] sm:$0xff] 0.0
          %371 = vst [vmem:[#allocation2 + $0x290] sm:$0xff] 0.0
          %372 = vst [vmem:[#allocation2 + $0x298] sm:$0xff] 0.0
          %373 = vst [vmem:[#allocation2 + $0x2a0] sm:$0xff] 0.0
          %374 = vst [vmem:[#allocation2 + $0x2a8] sm:$0xff] 0.0
          %375 = vst [vmem:[#allocation2 + $0x2b0] sm:$0xff] 0.0
          %376 = vst [vmem:[#allocation2 + $0x2b8] sm:$0xff] 0.0
          %377 = vst [vmem:[#allocation2 + $0x2c0] sm:$0xff] 0.0
          %378 = vst [vmem:[#allocation2 + $0x2c8] sm:$0xff] 0.0
          %379 = vst [vmem:[#allocation2 + $0x2d0] sm:$0xff] 0.0
          %380 = vst [vmem:[#allocation2 + $0x2d8] sm:$0xff] 0.0
          %381 = vst [vmem:[#allocation2 + $0x2e0] sm:$0xff] 0.0
          %382 = vst [vmem:[#allocation2 + $0x2e8] sm:$0xff] 0.0
          %383 = vst [vmem:[#allocation2 + $0x2f0] sm:$0xff] 0.0
          %384 = vst [vmem:[#allocation2 + $0x2f8] sm:$0xff] 0.0
          %385 = vst [vmem:[#allocation2 + $0x300] sm:$0xff] 0.0
          %386 = vst [vmem:[#allocation2 + $0x308] sm:$0xff] 0.0
          %387 = vst [vmem:[#allocation2 + $0x310] sm:$0xff] 0.0
          %388 = vst [vmem:[#allocation2 + $0x318] sm:$0xff] 0.0
          %389 = vst [vmem:[#allocation2 + $0x320] sm:$0xff] 0.0
          %390 = vst [vmem:[#allocation2 + $0x328] sm:$0xff] 0.0
          %391 = vst [vmem:[#allocation2 + $0x330] sm:$0xff] 0.0
          %392 = vst [vmem:[#allocation2 + $0x338] sm:$0xff] 0.0
          %393 = vst [vmem:[#allocation2 + $0x340] sm:$0xff] 0.0
          %394 = vst [vmem:[#allocation2 + $0x348] sm:$0xff] 0.0
          %395 = vst [vmem:[#allocation2 + $0x350] sm:$0xff] 0.0
          %396 = vst [vmem:[#allocation2 + $0x358] sm:$0xff] 0.0
          %397 = vst [vmem:[#allocation2 + $0x360] sm:$0xff] 0.0
          %398 = vst [vmem:[#allocation2 + $0x368] sm:$0xff] 0.0
          %399 = vst [vmem:[#allocation2 + $0x370] sm:$0xff] 0.0
          %400 = vst [vmem:[#allocation2 + $0x378] sm:$0xff] 0.0
          %401 = vst [vmem:[#allocation2 + $0x380] sm:$0xff] 0.0
          %402 = vst [vmem:[#allocation2 + $0x388] sm:$0xff] 0.0
          %403 = vst [vmem:[#allocation2 + $0x390] sm:$0xff] 0.0
          %404 = vst [vmem:[#allocation2 + $0x398] sm:$0xff] 0.0
          %405 = vst [vmem:[#allocation2 + $0x3a0] sm:$0xff] 0.0
          %406 = vst [vmem:[#allocation2 + $0x3a8] sm:$0xff] 0.0
          %407 = vst [vmem:[#allocation2 + $0x3b0] sm:$0xff] 0.0
          %408 = vst [vmem:[#allocation2 + $0x3b8] sm:$0xff] 0.0
          %409 = vst [vmem:[#allocation2 + $0x3c0] sm:$0xff] 0.0
          %410 = vst [vmem:[#allocation2 + $0x3c8] sm:$0xff] 0.0
          %411 = vst [vmem:[#allocation2 + $0x3d0] sm:$0xff] 0.0
          %412 = vst [vmem:[#allocation2 + $0x3d8] sm:$0xff] 0.0
          %413 = vst [vmem:[#allocation2 + $0x3e0] sm:$0xff] 0.0
          %414 = vst [vmem:[#allocation2 + $0x3e8] sm:$0xff] 0.0
          %415 = vst [vmem:[#allocation2 + $0x3f0] sm:$0xff] 0.0
          %416 = vst [vmem:[#allocation2 + $0x3f8] sm:$0xff] 0.0
        $region48: #{tpu_custom_call.1} parent=31 // pred_fallthru
          _
        %v417 = vld [vmem:[#allocation2] sm:$0xff]
        %v418 = vld [vmem:[#allocation2 + $0x8] sm:$0xff]
        %v419 = vld [vmem:[#allocation2 + $0x10] sm:$0xff]
        %v420 = vld [vmem:[#allocation2 + $0x18] sm:$0xff]
        %v421 = vld [vmem:[#allocation2 + $0x20] sm:$0xff]
        %v422 = vld [vmem:[#allocation2 + $0x28] sm:$0xff]
        %v423 = vld [vmem:[#allocation2 + $0x30] sm:$0xff]
        %v424 = vld [vmem:[#allocation2 + $0x38] sm:$0xff]
        %v425 = vld [vmem:[#allocation2 + $0x40] sm:$0xff]
        %v426 = vld [vmem:[#allocation2 + $0x48] sm:$0xff]
        %v427 = vld [vmem:[#allocation2 + $0x50] sm:$0xff]
        %v428 = vld [vmem:[#allocation2 + $0x58] sm:$0xff]
        %v429 = vld [vmem:[#allocation2 + $0x60] sm:$0xff]
        %v430 = vld [vmem:[#allocation2 + $0x68] sm:$0xff]
        %v431 = vld [vmem:[#allocation2 + $0x70] sm:$0xff]
        %v432 = vld [vmem:[#allocation2 + $0x78] sm:$0xff]
        %v433 = vld [vmem:[#allocation2 + $0x80] sm:$0xff]
        %v434 = vld [vmem:[#allocation2 + $0x88] sm:$0xff]
        %v435 = vld [vmem:[#allocation2 + $0x90] sm:$0xff]
        %v436 = vld [vmem:[#allocation2 + $0x98] sm:$0xff]
        %v437 = vld [vmem:[#allocation2 + $0xa0] sm:$0xff]
        %v438 = vld [vmem:[#allocation2 + $0xa8] sm:$0xff]
        %v439 = vld [vmem:[#allocation2 + $0xb0] sm:$0xff]
        %v440 = vld [vmem:[#allocation2 + $0xb8] sm:$0xff]
        %v441 = vld [vmem:[#allocation2 + $0xc0] sm:$0xff]
        %v442 = vld [vmem:[#allocation2 + $0xc8] sm:$0xff]
        %v443 = vld [vmem:[#allocation2 + $0xd0] sm:$0xff]
        %v444 = vld [vmem:[#allocation2 + $0xd8] sm:$0xff]
        %v445 = vld [vmem:[#allocation2 + $0xe0] sm:$0xff]
        %v446 = vld [vmem:[#allocation2 + $0xe8] sm:$0xff]
        %v447 = vld [vmem:[#allocation2 + $0xf0] sm:$0xff]
        %v448 = vld [vmem:[#allocation2 + $0xf8] sm:$0xff]
        %v449 = vld [vmem:[#allocation2 + $0x100] sm:$0xff]
        %v450 = vld [vmem:[#allocation2 + $0x108] sm:$0xff]
        %v451 = vld [vmem:[#allocation2 + $0x110] sm:$0xff]
        %v452 = vld [vmem:[#allocation2 + $0x118] sm:$0xff]
        %v453 = vld [vmem:[#allocation2 + $0x120] sm:$0xff]
        %v454 = vld [vmem:[#allocation2 + $0x128] sm:$0xff]
        %v455 = vld [vmem:[#allocation2 + $0x130] sm:$0xff]
        %v456 = vld [vmem:[#allocation2 + $0x138] sm:$0xff]
        %v457 = vld [vmem:[#allocation2 + $0x140] sm:$0xff]
        %v458 = vld [vmem:[#allocation2 + $0x148] sm:$0xff]
        %v459 = vld [vmem:[#allocation2 + $0x150] sm:$0xff]
        %v460 = vld [vmem:[#allocation2 + $0x158] sm:$0xff]
        %v461 = vld [vmem:[#allocation2 + $0x160] sm:$0xff]
        %v462 = vld [vmem:[#allocation2 + $0x168] sm:$0xff]
        %v463 = vld [vmem:[#allocation2 + $0x170] sm:$0xff]
        %v464 = vld [vmem:[#allocation2 + $0x178] sm:$0xff]
        %v465 = vld [vmem:[#allocation2 + $0x180] sm:$0xff]
        %v466 = vld [vmem:[#allocation2 + $0x188] sm:$0xff]
        %v467 = vld [vmem:[#allocation2 + $0x190] sm:$0xff]
        %v468 = vld [vmem:[#allocation2 + $0x198] sm:$0xff]
        %v469 = vld [vmem:[#allocation2 + $0x1a0] sm:$0xff]
        %v470 = vld [vmem:[#allocation2 + $0x1a8] sm:$0xff]
        %v471 = vld [vmem:[#allocation2 + $0x1b0] sm:$0xff]
        %v472 = vld [vmem:[#allocation2 + $0x1b8] sm:$0xff]
        %v473 = vld [vmem:[#allocation2 + $0x1c0] sm:$0xff]
        %v474 = vld [vmem:[#allocation2 + $0x1c8] sm:$0xff]
        %v475 = vld [vmem:[#allocation2 + $0x1d0] sm:$0xff]
        %v476 = vld [vmem:[#allocation2 + $0x1d8] sm:$0xff]
        %v477 = vld [vmem:[#allocation2 + $0x1e0] sm:$0xff]
        %v478 = vld [vmem:[#allocation2 + $0x1e8] sm:$0xff]
        %v479 = vld [vmem:[#allocation2 + $0x1f0] sm:$0xff]
        %v480 = vld [vmem:[#allocation2 + $0x1f8] sm:$0xff]
        %v481 = vld [vmem:[#allocation2 + $0x200] sm:$0xff]
        %v482 = vld [vmem:[#allocation2 + $0x208] sm:$0xff]
        %v483 = vld [vmem:[#allocation2 + $0x210] sm:$0xff]
        %v484 = vld [vmem:[#allocation2 + $0x218] sm:$0xff]
        %v485 = vld [vmem:[#allocation2 + $0x220] sm:$0xff]
        %v486 = vld [vmem:[#allocation2 + $0x228] sm:$0xff]
        %v487 = vld [vmem:[#allocation2 + $0x230] sm:$0xff]
        %v488 = vld [vmem:[#allocation2 + $0x238] sm:$0xff]
        %v489 = vld [vmem:[#allocation2 + $0x240] sm:$0xff]
        %v490 = vld [vmem:[#allocation2 + $0x248] sm:$0xff]
        %v491 = vld [vmem:[#allocation2 + $0x250] sm:$0xff]
        %v492 = vld [vmem:[#allocation2 + $0x258] sm:$0xff]
        %v493 = vld [vmem:[#allocation2 + $0x260] sm:$0xff]
        %v494 = vld [vmem:[#allocation2 + $0x268] sm:$0xff]
        %v495 = vld [vmem:[#allocation2 + $0x270] sm:$0xff]
        %v496 = vld [vmem:[#allocation2 + $0x278] sm:$0xff]
        %v497 = vld [vmem:[#allocation2 + $0x280] sm:$0xff]
        %v498 = vld [vmem:[#allocation2 + $0x288] sm:$0xff]
        %v499 = vld [vmem:[#allocation2 + $0x290] sm:$0xff]
        %v500 = vld [vmem:[#allocation2 + $0x298] sm:$0xff]
        %v501 = vld [vmem:[#allocation2 + $0x2a0] sm:$0xff]
        %v502 = vld [vmem:[#allocation2 + $0x2a8] sm:$0xff]
        %v503 = vld [vmem:[#allocation2 + $0x2b0] sm:$0xff]
        %v504 = vld [vmem:[#allocation2 + $0x2b8] sm:$0xff]
        %v505 = vld [vmem:[#allocation2 + $0x2c0] sm:$0xff]
        %v506 = vld [vmem:[#allocation2 + $0x2c8] sm:$0xff]
        %v507 = vld [vmem:[#allocation2 + $0x2d0] sm:$0xff]
        %v508 = vld [vmem:[#allocation2 + $0x2d8] sm:$0xff]
        %v509 = vld [vmem:[#allocation2 + $0x2e0] sm:$0xff]
        %v510 = vld [vmem:[#allocation2 + $0x2e8] sm:$0xff]
        %v511 = vld [vmem:[#allocation2 + $0x2f0] sm:$0xff]
        %v512 = vld [vmem:[#allocation2 + $0x2f8] sm:$0xff]
        %v513 = vld [vmem:[#allocation2 + $0x300] sm:$0xff]
        %v514 = vld [vmem:[#allocation2 + $0x308] sm:$0xff]
        %v515 = vld [vmem:[#allocation2 + $0x310] sm:$0xff]
        %v516 = vld [vmem:[#allocation2 + $0x318] sm:$0xff]
        %v517 = vld [vmem:[#allocation2 + $0x320] sm:$0xff]
        %v518 = vld [vmem:[#allocation2 + $0x328] sm:$0xff]
        %v519 = vld [vmem:[#allocation2 + $0x330] sm:$0xff]
        %v520 = vld [vmem:[#allocation2 + $0x338] sm:$0xff]
        %v521 = vld [vmem:[#allocation2 + $0x340] sm:$0xff]
        %v522 = vld [vmem:[#allocation2 + $0x348] sm:$0xff]
        %v523 = vld [vmem:[#allocation2 + $0x350] sm:$0xff]
        %v524 = vld [vmem:[#allocation2 + $0x358] sm:$0xff]
        %v525 = vld [vmem:[#allocation2 + $0x360] sm:$0xff]
        %v526 = vld [vmem:[#allocation2 + $0x368] sm:$0xff]
        %v527 = vld [vmem:[#allocation2 + $0x370] sm:$0xff]
        %v528 = vld [vmem:[#allocation2 + $0x378] sm:$0xff]
        %v529 = vld [vmem:[#allocation2 + $0x380] sm:$0xff]
        %v530 = vld [vmem:[#allocation2 + $0x388] sm:$0xff]
        %v531 = vld [vmem:[#allocation2 + $0x390] sm:$0xff]
        %v532 = vld [vmem:[#allocation2 + $0x398] sm:$0xff]
        %v533 = vld [vmem:[#allocation2 + $0x3a0] sm:$0xff]
        %v534 = vld [vmem:[#allocation2 + $0x3a8] sm:$0xff]
        %v535 = vld [vmem:[#allocation2 + $0x3b0] sm:$0xff]
        %v536 = vld [vmem:[#allocation2 + $0x3b8] sm:$0xff]
        %v537 = vld [vmem:[#allocation2 + $0x3c0] sm:$0xff]
        %v538 = vld [vmem:[#allocation2 + $0x3c8] sm:$0xff]
        %v539 = vld [vmem:[#allocation2 + $0x3d0] sm:$0xff]
        %v540 = vld [vmem:[#allocation2 + $0x3d8] sm:$0xff]
        %v541 = vld [vmem:[#allocation2 + $0x3e0] sm:$0xff]
        %v542 = vld [vmem:[#allocation2 + $0x3e8] sm:$0xff]
        %v543 = vld [vmem:[#allocation2 + $0x3f0] sm:$0xff]
        %v544 = vld [vmem:[#allocation2 + $0x3f8] sm:$0xff]
        %v545 = vld [vmem:[#allocation3] sm:$0xff]
        %v546 = vld [vmem:[#allocation3 + $0x8] sm:$0xff]
        %v547 = vld [vmem:[#allocation3 + $0x10] sm:$0xff]
        %v548 = vld [vmem:[#allocation3 + $0x18] sm:$0xff]
        %v549 = vld [vmem:[#allocation3 + $0x20] sm:$0xff]
        %v550 = vld [vmem:[#allocation3 + $0x28] sm:$0xff]
        %v551 = vld [vmem:[#allocation3 + $0x30] sm:$0xff]
        %v552 = vld [vmem:[#allocation3 + $0x38] sm:$0xff]
        %v553 = vld [vmem:[#allocation3 + $0x40] sm:$0xff]
        %v554 = vld [vmem:[#allocation3 + $0x48] sm:$0xff]
        %v555 = vld [vmem:[#allocation3 + $0x50] sm:$0xff]
        %v556 = vld [vmem:[#allocation3 + $0x58] sm:$0xff]
        %v557 = vld [vmem:[#allocation3 + $0x60] sm:$0xff]
        %v558 = vld [vmem:[#allocation3 + $0x68] sm:$0xff]
        %v559 = vld [vmem:[#allocation3 + $0x70] sm:$0xff]
        %v560 = vld [vmem:[#allocation3 + $0x78] sm:$0xff]
        %v561 = vld [vmem:[#allocation3 + $0x80] sm:$0xff]
        %v562 = vld [vmem:[#allocation3 + $0x88] sm:$0xff]
        %v563 = vld [vmem:[#allocation3 + $0x90] sm:$0xff]
        %v564 = vld [vmem:[#allocation3 + $0x98] sm:$0xff]
        %v565 = vld [vmem:[#allocation3 + $0xa0] sm:$0xff]
        %v566 = vld [vmem:[#allocation3 + $0xa8] sm:$0xff]
        %v567 = vld [vmem:[#allocation3 + $0xb0] sm:$0xff]
        %v568 = vld [vmem:[#allocation3 + $0xb8] sm:$0xff]
        %v569 = vld [vmem:[#allocation3 + $0xc0] sm:$0xff]
        %v570 = vld [vmem:[#allocation3 + $0xc8] sm:$0xff]
        %v571 = vld [vmem:[#allocation3 + $0xd0] sm:$0xff]
        %v572 = vld [vmem:[#allocation3 + $0xd8] sm:$0xff]
        %v573 = vld [vmem:[#allocation3 + $0xe0] sm:$0xff]
        %v574 = vld [vmem:[#allocation3 + $0xe8] sm:$0xff]
        %v575 = vld [vmem:[#allocation3 + $0xf0] sm:$0xff]
        %v576 = vld [vmem:[#allocation3 + $0xf8] sm:$0xff]
        %v577 = vld [vmem:[#allocation3 + $0x100] sm:$0xff]
        %v578 = vld [vmem:[#allocation3 + $0x108] sm:$0xff]
        %v579 = vld [vmem:[#allocation3 + $0x110] sm:$0xff]
        %v580 = vld [vmem:[#allocation3 + $0x118] sm:$0xff]
        %v581 = vld [vmem:[#allocation3 + $0x120] sm:$0xff]
        %v582 = vld [vmem:[#allocation3 + $0x128] sm:$0xff]
        %v583 = vld [vmem:[#allocation3 + $0x130] sm:$0xff]
        %v584 = vld [vmem:[#allocation3 + $0x138] sm:$0xff]
        %v585 = vld [vmem:[#allocation3 + $0x140] sm:$0xff]
        %v586 = vld [vmem:[#allocation3 + $0x148] sm:$0xff]
        %v587 = vld [vmem:[#allocation3 + $0x150] sm:$0xff]
        %v588 = vld [vmem:[#allocation3 + $0x158] sm:$0xff]
        %v589 = vld [vmem:[#allocation3 + $0x160] sm:$0xff]
        %v590 = vld [vmem:[#allocation3 + $0x168] sm:$0xff]
        %v591 = vld [vmem:[#allocation3 + $0x170] sm:$0xff]
        %v592 = vld [vmem:[#allocation3 + $0x178] sm:$0xff]
        %v593 = vld [vmem:[#allocation3 + $0x180] sm:$0xff]
        %v594 = vld [vmem:[#allocation3 + $0x188] sm:$0xff]
        %v595 = vld [vmem:[#allocation3 + $0x190] sm:$0xff]
        %v596 = vld [vmem:[#allocation3 + $0x198] sm:$0xff]
        %v597 = vld [vmem:[#allocation3 + $0x1a0] sm:$0xff]
        %v598 = vld [vmem:[#allocation3 + $0x1a8] sm:$0xff]
        %v599 = vld [vmem:[#allocation3 + $0x1b0] sm:$0xff]
        %v600 = vld [vmem:[#allocation3 + $0x1b8] sm:$0xff]
        %v601 = vld [vmem:[#allocation3 + $0x1c0] sm:$0xff]
        %v602 = vld [vmem:[#allocation3 + $0x1c8] sm:$0xff]
        %v603 = vld [vmem:[#allocation3 + $0x1d0] sm:$0xff]
        %v604 = vld [vmem:[#allocation3 + $0x1d8] sm:$0xff]
        %v605 = vld [vmem:[#allocation3 + $0x1e0] sm:$0xff]
        %v606 = vld [vmem:[#allocation3 + $0x1e8] sm:$0xff]
        %v607 = vld [vmem:[#allocation3 + $0x1f0] sm:$0xff]
        %v608 = vld [vmem:[#allocation3 + $0x1f8] sm:$0xff]
        %v609 = vld [vmem:[%s241] sm:$0xff]
        %v610 = vld [vmem:[%s241 + $0x8] sm:$0xff]
        %v611 = vld [vmem:[%s241 + $0x10] sm:$0xff]
        %v612 = vld [vmem:[%s241 + $0x18] sm:$0xff]
        %v613 = vld [vmem:[%s241 + $0x20] sm:$0xff]
        %v614 = vld [vmem:[%s241 + $0x28] sm:$0xff]
        %v615 = vld [vmem:[%s241 + $0x30] sm:$0xff]
        %v616 = vld [vmem:[%s241 + $0x38] sm:$0xff]
        %v617 = vld [vmem:[%s241 + $0x40] sm:$0xff]
        %v618 = vld [vmem:[%s241 + $0x48] sm:$0xff]
        %v619 = vld [vmem:[%s241 + $0x50] sm:$0xff]
        %v620 = vld [vmem:[%s241 + $0x58] sm:$0xff]
        %v621 = vld [vmem:[%s241 + $0x60] sm:$0xff]
        %v622 = vld [vmem:[%s241 + $0x68] sm:$0xff]
        %v623 = vld [vmem:[%s241 + $0x70] sm:$0xff]
        %v624 = vld [vmem:[%s241 + $0x78] sm:$0xff]
        %v625 = vld [vmem:[%s241 + $0x80] sm:$0xff]
        %v626 = vld [vmem:[%s241 + $0x88] sm:$0xff]
        %v627 = vld [vmem:[%s241 + $0x90] sm:$0xff]
        %v628 = vld [vmem:[%s241 + $0x98] sm:$0xff]
        %v629 = vld [vmem:[%s241 + $0xa0] sm:$0xff]
        %v630 = vld [vmem:[%s241 + $0xa8] sm:$0xff]
        %v631 = vld [vmem:[%s241 + $0xb0] sm:$0xff]
        %v632 = vld [vmem:[%s241 + $0xb8] sm:$0xff]
        %v633 = vld [vmem:[%s241 + $0xc0] sm:$0xff]
        %v634 = vld [vmem:[%s241 + $0xc8] sm:$0xff]
        %v635 = vld [vmem:[%s241 + $0xd0] sm:$0xff]
        %v636 = vld [vmem:[%s241 + $0xd8] sm:$0xff]
        %v637 = vld [vmem:[%s241 + $0xe0] sm:$0xff]
        %v638 = vld [vmem:[%s241 + $0xe8] sm:$0xff]
        %v639 = vld [vmem:[%s241 + $0xf0] sm:$0xff]
        %v640 = vld [vmem:[%s241 + $0xf8] sm:$0xff]
        %v641 = vld [vmem:[%s241 + $0x100] sm:$0xff]
        %v642 = vld [vmem:[%s241 + $0x108] sm:$0xff]
        %v643 = vld [vmem:[%s241 + $0x110] sm:$0xff]
        %v644 = vld [vmem:[%s241 + $0x118] sm:$0xff]
        %v645 = vld [vmem:[%s241 + $0x120] sm:$0xff]
        %v646 = vld [vmem:[%s241 + $0x128] sm:$0xff]
        %v647 = vld [vmem:[%s241 + $0x130] sm:$0xff]
        %v648 = vld [vmem:[%s241 + $0x138] sm:$0xff]
        %v649 = vld [vmem:[%s241 + $0x140] sm:$0xff]
        %v650 = vld [vmem:[%s241 + $0x148] sm:$0xff]
        %v651 = vld [vmem:[%s241 + $0x150] sm:$0xff]
        %v652 = vld [vmem:[%s241 + $0x158] sm:$0xff]
        %v653 = vld [vmem:[%s241 + $0x160] sm:$0xff]
        %v654 = vld [vmem:[%s241 + $0x168] sm:$0xff]
        %v655 = vld [vmem:[%s241 + $0x170] sm:$0xff]
        %v656 = vld [vmem:[%s241 + $0x178] sm:$0xff]
        %v657 = vld [vmem:[%s241 + $0x180] sm:$0xff]
        %v658 = vld [vmem:[%s241 + $0x188] sm:$0xff]
        %v659 = vld [vmem:[%s241 + $0x190] sm:$0xff]
        %v660 = vld [vmem:[%s241 + $0x198] sm:$0xff]
        %v661 = vld [vmem:[%s241 + $0x1a0] sm:$0xff]
        %v662 = vld [vmem:[%s241 + $0x1a8] sm:$0xff]
        %v663 = vld [vmem:[%s241 + $0x1b0] sm:$0xff]
        %v664 = vld [vmem:[%s241 + $0x1b8] sm:$0xff]
        %v665 = vld [vmem:[%s241 + $0x1c0] sm:$0xff]
        %v666 = vld [vmem:[%s241 + $0x1c8] sm:$0xff]
        %v667 = vld [vmem:[%s241 + $0x1d0] sm:$0xff]
        %v668 = vld [vmem:[%s241 + $0x1d8] sm:$0xff]
        %v669 = vld [vmem:[%s241 + $0x1e0] sm:$0xff]
        %v670 = vld [vmem:[%s241 + $0x1e8] sm:$0xff]
        %v671 = vld [vmem:[%s241 + $0x1f0] sm:$0xff]
        %v672 = vld [vmem:[%s241 + $0x1f8] sm:$0xff]
        %v673 = vld [vmem:[%s241 + $0x200] sm:$0xff]
        %v674 = vld [vmem:[%s241 + $0x208] sm:$0xff]
        %v675 = vld [vmem:[%s241 + $0x210] sm:$0xff]
        %v676 = vld [vmem:[%s241 + $0x218] sm:$0xff]
        %v677 = vld [vmem:[%s241 + $0x220] sm:$0xff]
        %v678 = vld [vmem:[%s241 + $0x228] sm:$0xff]
        %v679 = vld [vmem:[%s241 + $0x230] sm:$0xff]
        %v680 = vld [vmem:[%s241 + $0x238] sm:$0xff]
        %v681 = vld [vmem:[%s241 + $0x240] sm:$0xff]
        %v682 = vld [vmem:[%s241 + $0x248] sm:$0xff]
        %v683 = vld [vmem:[%s241 + $0x250] sm:$0xff]
        %v684 = vld [vmem:[%s241 + $0x258] sm:$0xff]
        %v685 = vld [vmem:[%s241 + $0x260] sm:$0xff]
        %v686 = vld [vmem:[%s241 + $0x268] sm:$0xff]
        %v687 = vld [vmem:[%s241 + $0x270] sm:$0xff]
        %v688 = vld [vmem:[%s241 + $0x278] sm:$0xff]
        %v689 = vld [vmem:[%s241 + $0x280] sm:$0xff]
        %v690 = vld [vmem:[%s241 + $0x288] sm:$0xff]
        %v691 = vld [vmem:[%s241 + $0x290] sm:$0xff]
        %v692 = vld [vmem:[%s241 + $0x298] sm:$0xff]
        %v693 = vld [vmem:[%s241 + $0x2a0] sm:$0xff]
        %v694 = vld [vmem:[%s241 + $0x2a8] sm:$0xff]
        %v695 = vld [vmem:[%s241 + $0x2b0] sm:$0xff]
        %v696 = vld [vmem:[%s241 + $0x2b8] sm:$0xff]
        %v697 = vld [vmem:[%s241 + $0x2c0] sm:$0xff]
        %v698 = vld [vmem:[%s241 + $0x2c8] sm:$0xff]
        %v699 = vld [vmem:[%s241 + $0x2d0] sm:$0xff]
        %v700 = vld [vmem:[%s241 + $0x2d8] sm:$0xff]
        %v701 = vld [vmem:[%s241 + $0x2e0] sm:$0xff]
        %v702 = vld [vmem:[%s241 + $0x2e8] sm:$0xff]
        %v703 = vld [vmem:[%s241 + $0x2f0] sm:$0xff]
        %v704 = vld [vmem:[%s241 + $0x2f8] sm:$0xff]
        %v705 = vld [vmem:[%s241 + $0x300] sm:$0xff]
        %v706 = vld [vmem:[%s241 + $0x308] sm:$0xff]
        %v707 = vld [vmem:[%s241 + $0x310] sm:$0xff]
        %v708 = vld [vmem:[%s241 + $0x318] sm:$0xff]
        %v709 = vld [vmem:[%s241 + $0x320] sm:$0xff]
        %v710 = vld [vmem:[%s241 + $0x328] sm:$0xff]
        %v711 = vld [vmem:[%s241 + $0x330] sm:$0xff]
        %v712 = vld [vmem:[%s241 + $0x338] sm:$0xff]
        %v713 = vld [vmem:[%s241 + $0x340] sm:$0xff]
        %v714 = vld [vmem:[%s241 + $0x348] sm:$0xff]
        %v715 = vld [vmem:[%s241 + $0x350] sm:$0xff]
        %v716 = vld [vmem:[%s241 + $0x358] sm:$0xff]
        %v717 = vld [vmem:[%s241 + $0x360] sm:$0xff]
        %v718 = vld [vmem:[%s241 + $0x368] sm:$0xff]
        %v719 = vld [vmem:[%s241 + $0x370] sm:$0xff]
        %v720 = vld [vmem:[%s241 + $0x378] sm:$0xff]
        %v721 = vld [vmem:[%s241 + $0x380] sm:$0xff]
        %v722 = vld [vmem:[%s241 + $0x388] sm:$0xff]
        %v723 = vld [vmem:[%s241 + $0x390] sm:$0xff]
        %v724 = vld [vmem:[%s241 + $0x398] sm:$0xff]
        %v725 = vld [vmem:[%s241 + $0x3a0] sm:$0xff]
        %v726 = vld [vmem:[%s241 + $0x3a8] sm:$0xff]
        %v727 = vld [vmem:[%s241 + $0x3b0] sm:$0xff]
        %v728 = vld [vmem:[%s241 + $0x3b8] sm:$0xff]
        %v729 = vld [vmem:[%s241 + $0x3c0] sm:$0xff]
        %v730 = vld [vmem:[%s241 + $0x3c8] sm:$0xff]
        %v731 = vld [vmem:[%s241 + $0x3d0] sm:$0xff]
        %v732 = vld [vmem:[%s241 + $0x3d8] sm:$0xff]
        %v733 = vld [vmem:[%s241 + $0x3e0] sm:$0xff]
        %v734 = vld [vmem:[%s241 + $0x3e8] sm:$0xff]
        %v735 = vld [vmem:[%s241 + $0x3f0] sm:$0xff]
        %v736 = vld [vmem:[%s241 + $0x3f8] sm:$0xff]
        %v801 = vunpack.c.l.b16 %v545
        %v802 = vunpack.c.h.b16 %v545
        %v803 = vunpack.c.l.b16 %v546
        %v804 = vunpack.c.h.b16 %v546
        %v805 = vunpack.c.l.b16 %v547
        %v806 = vunpack.c.h.b16 %v547
        %v807 = vunpack.c.l.b16 %v548
        %v808 = vunpack.c.h.b16 %v548
        %v809 = vunpack.c.l.b16 %v549
        %v810 = vunpack.c.h.b16 %v549
        %v811 = vunpack.c.l.b16 %v550
        %v812 = vunpack.c.h.b16 %v550
        %v813 = vunpack.c.l.b16 %v551
        %v814 = vunpack.c.h.b16 %v551
        %v815 = vunpack.c.l.b16 %v552
        %v816 = vunpack.c.h.b16 %v552
        %v817 = vunpack.c.l.b16 %v553
        %v818 = vunpack.c.h.b16 %v553
        %v819 = vunpack.c.l.b16 %v554
        %v820 = vunpack.c.h.b16 %v554
        %v821 = vunpack.c.l.b16 %v555
        %v822 = vunpack.c.h.b16 %v555
        %v823 = vunpack.c.l.b16 %v556
        %v824 = vunpack.c.h.b16 %v556
        %v825 = vunpack.c.l.b16 %v557
        %v826 = vunpack.c.h.b16 %v557
        %v827 = vunpack.c.l.b16 %v558
        %v828 = vunpack.c.h.b16 %v558
        %v829 = vunpack.c.l.b16 %v559
        %v830 = vunpack.c.h.b16 %v559
        %v831 = vunpack.c.l.b16 %v560
        %v832 = vunpack.c.h.b16 %v560
        %v833 = vunpack.c.l.b16 %v561
        %v834 = vunpack.c.h.b16 %v561
        %v835 = vunpack.c.l.b16 %v562
        %v836 = vunpack.c.h.b16 %v562
        %v837 = vunpack.c.l.b16 %v563
        %v838 = vunpack.c.h.b16 %v563
        %v839 = vunpack.c.l.b16 %v564
        %v840 = vunpack.c.h.b16 %v564
        %v841 = vunpack.c.l.b16 %v565
        %v842 = vunpack.c.h.b16 %v565
        %v843 = vunpack.c.l.b16 %v566
        %v844 = vunpack.c.h.b16 %v566
        %v845 = vunpack.c.l.b16 %v567
        %v846 = vunpack.c.h.b16 %v567
        %v847 = vunpack.c.l.b16 %v568
        %v848 = vunpack.c.h.b16 %v568
        %v849 = vunpack.c.l.b16 %v569
        %v850 = vunpack.c.h.b16 %v569
        %v851 = vunpack.c.l.b16 %v570
        %v852 = vunpack.c.h.b16 %v570
        %v853 = vunpack.c.l.b16 %v571
        %v854 = vunpack.c.h.b16 %v571
        %v855 = vunpack.c.l.b16 %v572
        %v856 = vunpack.c.h.b16 %v572
        %v857 = vunpack.c.l.b16 %v573
        %v858 = vunpack.c.h.b16 %v573
        %v859 = vunpack.c.l.b16 %v574
        %v860 = vunpack.c.h.b16 %v574
        %v861 = vunpack.c.l.b16 %v575
        %v862 = vunpack.c.h.b16 %v575
        %v863 = vunpack.c.l.b16 %v576
        %v864 = vunpack.c.h.b16 %v576
        %v865 = vunpack.c.l.b16 %v577
        %v866 = vunpack.c.h.b16 %v577
        %v867 = vunpack.c.l.b16 %v578
        %v868 = vunpack.c.h.b16 %v578
        %v869 = vunpack.c.l.b16 %v579
        %v870 = vunpack.c.h.b16 %v579
        %v871 = vunpack.c.l.b16 %v580
        %v872 = vunpack.c.h.b16 %v580
        %v873 = vunpack.c.l.b16 %v581
        %v874 = vunpack.c.h.b16 %v581
        %v875 = vunpack.c.l.b16 %v582
        %v876 = vunpack.c.h.b16 %v582
        %v877 = vunpack.c.l.b16 %v583
        %v878 = vunpack.c.h.b16 %v583
        %v879 = vunpack.c.l.b16 %v584
        %v880 = vunpack.c.h.b16 %v584
        %v881 = vunpack.c.l.b16 %v585
        %v882 = vunpack.c.h.b16 %v585
        %v883 = vunpack.c.l.b16 %v586
        %v884 = vunpack.c.h.b16 %v586
        %v885 = vunpack.c.l.b16 %v587
        %v886 = vunpack.c.h.b16 %v587
        %v887 = vunpack.c.l.b16 %v588
        %v888 = vunpack.c.h.b16 %v588
        %v889 = vunpack.c.l.b16 %v589
        %v890 = vunpack.c.h.b16 %v589
        %v891 = vunpack.c.l.b16 %v590
        %v892 = vunpack.c.h.b16 %v590
        %v893 = vunpack.c.l.b16 %v591
        %v894 = vunpack.c.h.b16 %v591
        %v895 = vunpack.c.l.b16 %v592
        %v896 = vunpack.c.h.b16 %v592
        %v897 = vunpack.c.l.b16 %v593
        %v898 = vunpack.c.h.b16 %v593
        %v899 = vunpack.c.l.b16 %v594
        %v900 = vunpack.c.h.b16 %v594
        %v901 = vunpack.c.l.b16 %v595
        %v902 = vunpack.c.h.b16 %v595
        %v903 = vunpack.c.l.b16 %v596
        %v904 = vunpack.c.h.b16 %v596
        %v905 = vunpack.c.l.b16 %v597
        %v906 = vunpack.c.h.b16 %v597
        %v907 = vunpack.c.l.b16 %v598
        %v908 = vunpack.c.h.b16 %v598
        %v909 = vunpack.c.l.b16 %v599
        %v910 = vunpack.c.h.b16 %v599
        %v911 = vunpack.c.l.b16 %v600
        %v912 = vunpack.c.h.b16 %v600
        %v913 = vunpack.c.l.b16 %v601
        %v914 = vunpack.c.h.b16 %v601
        %v915 = vunpack.c.l.b16 %v602
        %v916 = vunpack.c.h.b16 %v602
        %v917 = vunpack.c.l.b16 %v603
        %v918 = vunpack.c.h.b16 %v603
        %v919 = vunpack.c.l.b16 %v604
        %v920 = vunpack.c.h.b16 %v604
        %v921 = vunpack.c.l.b16 %v605
        %v922 = vunpack.c.h.b16 %v605
        %v923 = vunpack.c.l.b16 %v606
        %v924 = vunpack.c.h.b16 %v606
        %v925 = vunpack.c.l.b16 %v607
        %v926 = vunpack.c.h.b16 %v607
        %v927 = vunpack.c.l.b16 %v608
        %v928 = vunpack.c.h.b16 %v608
        %v929 = vpack.c.b16 %v805, %v801
        %v930 = vpack.c.b16 %v806, %v802
        %v931 = vpack.c.b16 %v807, %v803
        %v932 = vpack.c.b16 %v808, %v804
        %v933 = vpack.c.b16 %v813, %v809
        %v934 = vpack.c.b16 %v814, %v810
        %v935 = vpack.c.b16 %v815, %v811
        %v936 = vpack.c.b16 %v816, %v812
        %v937 = vpack.c.b16 %v821, %v817
        %v938 = vpack.c.b16 %v822, %v818
        %v939 = vpack.c.b16 %v823, %v819
        %v940 = vpack.c.b16 %v824, %v820
        %v941 = vpack.c.b16 %v829, %v825
        %v942 = vpack.c.b16 %v830, %v826
        %v943 = vpack.c.b16 %v831, %v827
        %v944 = vpack.c.b16 %v832, %v828
        %v945 = vpack.c.b16 %v837, %v833
        %v946 = vpack.c.b16 %v838, %v834
        %v947 = vpack.c.b16 %v839, %v835
        %v948 = vpack.c.b16 %v840, %v836
        %v949 = vpack.c.b16 %v845, %v841
        %v950 = vpack.c.b16 %v846, %v842
        %v951 = vpack.c.b16 %v847, %v843
        %v952 = vpack.c.b16 %v848, %v844
        %v953 = vpack.c.b16 %v853, %v849
        %v954 = vpack.c.b16 %v854, %v850
        %v955 = vpack.c.b16 %v855, %v851
        %v956 = vpack.c.b16 %v856, %v852
        %v957 = vpack.c.b16 %v861, %v857
        %v958 = vpack.c.b16 %v862, %v858
        %v959 = vpack.c.b16 %v863, %v859
        %v960 = vpack.c.b16 %v864, %v860
        %v961 = vpack.c.b16 %v869, %v865
        %v962 = vpack.c.b16 %v870, %v866
        %v963 = vpack.c.b16 %v871, %v867
        %v964 = vpack.c.b16 %v872, %v868
        %v965 = vpack.c.b16 %v877, %v873
        %v966 = vpack.c.b16 %v878, %v874
        %v967 = vpack.c.b16 %v879, %v875
        %v968 = vpack.c.b16 %v880, %v876
        %v969 = vpack.c.b16 %v885, %v881
        %v970 = vpack.c.b16 %v886, %v882
        %v971 = vpack.c.b16 %v887, %v883
        %v972 = vpack.c.b16 %v888, %v884
        %v973 = vpack.c.b16 %v893, %v889
        %v974 = vpack.c.b16 %v894, %v890
        %v975 = vpack.c.b16 %v895, %v891
        %v976 = vpack.c.b16 %v896, %v892
        %v977 = vpack.c.b16 %v901, %v897
        %v978 = vpack.c.b16 %v902, %v898
        %v979 = vpack.c.b16 %v903, %v899
        %v980 = vpack.c.b16 %v904, %v900
        %v981 = vpack.c.b16 %v909, %v905
        %v982 = vpack.c.b16 %v910, %v906
        %v983 = vpack.c.b16 %v911, %v907
        %v984 = vpack.c.b16 %v912, %v908
        %v985 = vpack.c.b16 %v917, %v913
        %v986 = vpack.c.b16 %v918, %v914
        %v987 = vpack.c.b16 %v919, %v915
        %v988 = vpack.c.b16 %v920, %v916
        %v989 = vpack.c.b16 %v925, %v921
        %v990 = vpack.c.b16 %v926, %v922
        %v991 = vpack.c.b16 %v927, %v923
        %v992 = vpack.c.b16 %v928, %v924
        %v1185 = vunpack.c.l.b16 %v609
        %v1186 = vunpack.c.h.b16 %v609
        %v1187 = vunpack.c.l.b16 %v610
        %v1188 = vunpack.c.h.b16 %v610
        %v1189 = vunpack.c.l.b16 %v611
        %v1190 = vunpack.c.h.b16 %v611
        %v1191 = vunpack.c.l.b16 %v612
        %v1192 = vunpack.c.h.b16 %v612
        %v1193 = vunpack.c.l.b16 %v613
        %v1194 = vunpack.c.h.b16 %v613
        %v1195 = vunpack.c.l.b16 %v614
        %v1196 = vunpack.c.h.b16 %v614
        %v1197 = vunpack.c.l.b16 %v615
        %v1198 = vunpack.c.h.b16 %v615
        %v1199 = vunpack.c.l.b16 %v616
        %v1200 = vunpack.c.h.b16 %v616
        %v1201 = vunpack.c.l.b16 %v617
        %v1202 = vunpack.c.h.b16 %v617
        %v1203 = vunpack.c.l.b16 %v618
        %v1204 = vunpack.c.h.b16 %v618
        %v1205 = vunpack.c.l.b16 %v619
        %v1206 = vunpack.c.h.b16 %v619
        %v1207 = vunpack.c.l.b16 %v620
        %v1208 = vunpack.c.h.b16 %v620
        %v1209 = vunpack.c.l.b16 %v621
        %v1210 = vunpack.c.h.b16 %v621
        %v1211 = vunpack.c.l.b16 %v622
        %v1212 = vunpack.c.h.b16 %v622
        %v1213 = vunpack.c.l.b16 %v623
        %v1214 = vunpack.c.h.b16 %v623
        %v1215 = vunpack.c.l.b16 %v624
        %v1216 = vunpack.c.h.b16 %v624
        %v1217 = vunpack.c.l.b16 %v625
        %v1218 = vunpack.c.h.b16 %v625
        %v1219 = vunpack.c.l.b16 %v626
        %v1220 = vunpack.c.h.b16 %v626
        %v1221 = vunpack.c.l.b16 %v627
        %v1222 = vunpack.c.h.b16 %v627
        %v1223 = vunpack.c.l.b16 %v628
        %v1224 = vunpack.c.h.b16 %v628
        %v1225 = vunpack.c.l.b16 %v629
        %v1226 = vunpack.c.h.b16 %v629
        %v1227 = vunpack.c.l.b16 %v630
        %v1228 = vunpack.c.h.b16 %v630
        %v1229 = vunpack.c.l.b16 %v631
        %v1230 = vunpack.c.h.b16 %v631
        %v1231 = vunpack.c.l.b16 %v632
        %v1232 = vunpack.c.h.b16 %v632
        %v1233 = vunpack.c.l.b16 %v633
        %v1234 = vunpack.c.h.b16 %v633
        %v1235 = vunpack.c.l.b16 %v634
        %v1236 = vunpack.c.h.b16 %v634
        %v1237 = vunpack.c.l.b16 %v635
        %v1238 = vunpack.c.h.b16 %v635
        %v1239 = vunpack.c.l.b16 %v636
        %v1240 = vunpack.c.h.b16 %v636
        %v1241 = vunpack.c.l.b16 %v637
        %v1242 = vunpack.c.h.b16 %v637
        %v1243 = vunpack.c.l.b16 %v638
        %v1244 = vunpack.c.h.b16 %v638
        %v1245 = vunpack.c.l.b16 %v639
        %v1246 = vunpack.c.h.b16 %v639
        %v1247 = vunpack.c.l.b16 %v640
        %v1248 = vunpack.c.h.b16 %v640
        %v1249 = vunpack.c.l.b16 %v641
        %v1250 = vunpack.c.h.b16 %v641
        %v1251 = vunpack.c.l.b16 %v642
        %v1252 = vunpack.c.h.b16 %v642
        %v1253 = vunpack.c.l.b16 %v643
        %v1254 = vunpack.c.h.b16 %v643
        %v1255 = vunpack.c.l.b16 %v644
        %v1256 = vunpack.c.h.b16 %v644
        %v1257 = vunpack.c.l.b16 %v645
        %v1258 = vunpack.c.h.b16 %v645
        %v1259 = vunpack.c.l.b16 %v646
        %v1260 = vunpack.c.h.b16 %v646
        %v1261 = vunpack.c.l.b16 %v647
        %v1262 = vunpack.c.h.b16 %v647
        %v1263 = vunpack.c.l.b16 %v648
        %v1264 = vunpack.c.h.b16 %v648
        %v1265 = vunpack.c.l.b16 %v649
        %v1266 = vunpack.c.h.b16 %v649
        %v1267 = vunpack.c.l.b16 %v650
        %v1268 = vunpack.c.h.b16 %v650
        %v1269 = vunpack.c.l.b16 %v651
        %v1270 = vunpack.c.h.b16 %v651
        %v1271 = vunpack.c.l.b16 %v652
        %v1272 = vunpack.c.h.b16 %v652
        %v1273 = vunpack.c.l.b16 %v653
        %v1274 = vunpack.c.h.b16 %v653
        %v1275 = vunpack.c.l.b16 %v654
        %v1276 = vunpack.c.h.b16 %v654
        %v1277 = vunpack.c.l.b16 %v655
        %v1278 = vunpack.c.h.b16 %v655
        %v1279 = vunpack.c.l.b16 %v656
        %v1280 = vunpack.c.h.b16 %v656
        %v1281 = vunpack.c.l.b16 %v657
        %v1282 = vunpack.c.h.b16 %v657
        %v1283 = vunpack.c.l.b16 %v658
        %v1284 = vunpack.c.h.b16 %v658
        %v1285 = vunpack.c.l.b16 %v659
        %v1286 = vunpack.c.h.b16 %v659
        %v1287 = vunpack.c.l.b16 %v660
        %v1288 = vunpack.c.h.b16 %v660
        %v1289 = vunpack.c.l.b16 %v661
        %v1290 = vunpack.c.h.b16 %v661
        %v1291 = vunpack.c.l.b16 %v662
        %v1292 = vunpack.c.h.b16 %v662
        %v1293 = vunpack.c.l.b16 %v663
        %v1294 = vunpack.c.h.b16 %v663
        %v1295 = vunpack.c.l.b16 %v664
        %v1296 = vunpack.c.h.b16 %v664
        %v1297 = vunpack.c.l.b16 %v665
        %v1298 = vunpack.c.h.b16 %v665
        %v1299 = vunpack.c.l.b16 %v666
        %v1300 = vunpack.c.h.b16 %v666
        %v1301 = vunpack.c.l.b16 %v667
        %v1302 = vunpack.c.h.b16 %v667
        %v1303 = vunpack.c.l.b16 %v668
        %v1304 = vunpack.c.h.b16 %v668
        %v1305 = vunpack.c.l.b16 %v669
        %v1306 = vunpack.c.h.b16 %v669
        %v1307 = vunpack.c.l.b16 %v670
        %v1308 = vunpack.c.h.b16 %v670
        %v1309 = vunpack.c.l.b16 %v671
        %v1310 = vunpack.c.h.b16 %v671
        %v1311 = vunpack.c.l.b16 %v672
        %v1312 = vunpack.c.h.b16 %v672
        %v1313 = vunpack.c.l.b16 %v673
        %v1314 = vunpack.c.h.b16 %v673
        %v1315 = vunpack.c.l.b16 %v674
        %v1316 = vunpack.c.h.b16 %v674
        %v1317 = vunpack.c.l.b16 %v675
        %v1318 = vunpack.c.h.b16 %v675
        %v1319 = vunpack.c.l.b16 %v676
        %v1320 = vunpack.c.h.b16 %v676
        %v1321 = vunpack.c.l.b16 %v677
        %v1322 = vunpack.c.h.b16 %v677
        %v1323 = vunpack.c.l.b16 %v678
        %v1324 = vunpack.c.h.b16 %v678
        %v1325 = vunpack.c.l.b16 %v679
        %v1326 = vunpack.c.h.b16 %v679
        %v1327 = vunpack.c.l.b16 %v680
        %v1328 = vunpack.c.h.b16 %v680
        %v1329 = vunpack.c.l.b16 %v681
        %v1330 = vunpack.c.h.b16 %v681
        %v1331 = vunpack.c.l.b16 %v682
        %v1332 = vunpack.c.h.b16 %v682
        %v1333 = vunpack.c.l.b16 %v683
        %v1334 = vunpack.c.h.b16 %v683
        %v1335 = vunpack.c.l.b16 %v684
        %v1336 = vunpack.c.h.b16 %v684
        %v1337 = vunpack.c.l.b16 %v685
        %v1338 = vunpack.c.h.b16 %v685
        %v1339 = vunpack.c.l.b16 %v686
        %v1340 = vunpack.c.h.b16 %v686
        %v1341 = vunpack.c.l.b16 %v687
        %v1342 = vunpack.c.h.b16 %v687
        %v1343 = vunpack.c.l.b16 %v688
        %v1344 = vunpack.c.h.b16 %v688
        %v1345 = vunpack.c.l.b16 %v689
        %v1346 = vunpack.c.h.b16 %v689
        %v1347 = vunpack.c.l.b16 %v690
        %v1348 = vunpack.c.h.b16 %v690
        %v1349 = vunpack.c.l.b16 %v691
        %v1350 = vunpack.c.h.b16 %v691
        %v1351 = vunpack.c.l.b16 %v692
        %v1352 = vunpack.c.h.b16 %v692
        %v1353 = vunpack.c.l.b16 %v693
        %v1354 = vunpack.c.h.b16 %v693
        %v1355 = vunpack.c.l.b16 %v694
        %v1356 = vunpack.c.h.b16 %v694
        %v1357 = vunpack.c.l.b16 %v695
        %v1358 = vunpack.c.h.b16 %v695
        %v1359 = vunpack.c.l.b16 %v696
        %v1360 = vunpack.c.h.b16 %v696
        %v1361 = vunpack.c.l.b16 %v697
        %v1362 = vunpack.c.h.b16 %v697
        %v1363 = vunpack.c.l.b16 %v698
        %v1364 = vunpack.c.h.b16 %v698
        %v1365 = vunpack.c.l.b16 %v699
        %v1366 = vunpack.c.h.b16 %v699
        %v1367 = vunpack.c.l.b16 %v700
        %v1368 = vunpack.c.h.b16 %v700
        %v1369 = vunpack.c.l.b16 %v701
        %v1370 = vunpack.c.h.b16 %v701
        %v1371 = vunpack.c.l.b16 %v702
        %v1372 = vunpack.c.h.b16 %v702
        %v1373 = vunpack.c.l.b16 %v703
        %v1374 = vunpack.c.h.b16 %v703
        %v1375 = vunpack.c.l.b16 %v704
        %v1376 = vunpack.c.h.b16 %v704
        %v1377 = vunpack.c.l.b16 %v705
        %v1378 = vunpack.c.h.b16 %v705
        %v1379 = vunpack.c.l.b16 %v706
        %v1380 = vunpack.c.h.b16 %v706
        %v1381 = vunpack.c.l.b16 %v707
        %v1382 = vunpack.c.h.b16 %v707
        %v1383 = vunpack.c.l.b16 %v708
        %v1384 = vunpack.c.h.b16 %v708
        %v1385 = vunpack.c.l.b16 %v709
        %v1386 = vunpack.c.h.b16 %v709
        %v1387 = vunpack.c.l.b16 %v710
        %v1388 = vunpack.c.h.b16 %v710
        %v1389 = vunpack.c.l.b16 %v711
        %v1390 = vunpack.c.h.b16 %v711
        %v1391 = vunpack.c.l.b16 %v712
        %v1392 = vunpack.c.h.b16 %v712
        %v1393 = vunpack.c.l.b16 %v713
        %v1394 = vunpack.c.h.b16 %v713
        %v1395 = vunpack.c.l.b16 %v714
        %v1396 = vunpack.c.h.b16 %v714
        %v1397 = vunpack.c.l.b16 %v715
        %v1398 = vunpack.c.h.b16 %v715
        %v1399 = vunpack.c.l.b16 %v716
        %v1400 = vunpack.c.h.b16 %v716
        %v1401 = vunpack.c.l.b16 %v717
        %v1402 = vunpack.c.h.b16 %v717
        %v1403 = vunpack.c.l.b16 %v718
        %v1404 = vunpack.c.h.b16 %v718
        %v1405 = vunpack.c.l.b16 %v719
        %v1406 = vunpack.c.h.b16 %v719
        %v1407 = vunpack.c.l.b16 %v720
        %v1408 = vunpack.c.h.b16 %v720
        %v1409 = vunpack.c.l.b16 %v721
        %v1410 = vunpack.c.h.b16 %v721
        %v1411 = vunpack.c.l.b16 %v722
        %v1412 = vunpack.c.h.b16 %v722
        %v1413 = vunpack.c.l.b16 %v723
        %v1414 = vunpack.c.h.b16 %v723
        %v1415 = vunpack.c.l.b16 %v724
        %v1416 = vunpack.c.h.b16 %v724
        %v1417 = vunpack.c.l.b16 %v725
        %v1418 = vunpack.c.h.b16 %v725
        %v1419 = vunpack.c.l.b16 %v726
        %v1420 = vunpack.c.h.b16 %v726
        %v1421 = vunpack.c.l.b16 %v727
        %v1422 = vunpack.c.h.b16 %v727
        %v1423 = vunpack.c.l.b16 %v728
        %v1424 = vunpack.c.h.b16 %v728
        %v1425 = vunpack.c.l.b16 %v729
        %v1426 = vunpack.c.h.b16 %v729
        %v1427 = vunpack.c.l.b16 %v730
        %v1428 = vunpack.c.h.b16 %v730
        %v1429 = vunpack.c.l.b16 %v731
        %v1430 = vunpack.c.h.b16 %v731
        %v1431 = vunpack.c.l.b16 %v732
        %v1432 = vunpack.c.h.b16 %v732
        %v1433 = vunpack.c.l.b16 %v733
        %v1434 = vunpack.c.h.b16 %v733
        %v1435 = vunpack.c.l.b16 %v734
        %v1436 = vunpack.c.h.b16 %v734
        %v1437 = vunpack.c.l.b16 %v735
        %v1438 = vunpack.c.h.b16 %v735
        %v1439 = vunpack.c.l.b16 %v736
        %v1440 = vunpack.c.h.b16 %v736
        %v1441 = vpack.c.b16 %v1189, %v1185
        %v1442 = vpack.c.b16 %v1190, %v1186
        %v1443 = vpack.c.b16 %v1191, %v1187
        %v1444 = vpack.c.b16 %v1192, %v1188
        %v1445 = vpack.c.b16 %v1197, %v1193
        %v1446 = vpack.c.b16 %v1198, %v1194
        %v1447 = vpack.c.b16 %v1199, %v1195
        %v1448 = vpack.c.b16 %v1200, %v1196
        %v1449 = vpack.c.b16 %v1205, %v1201
        %v1450 = vpack.c.b16 %v1206, %v1202
        %v1451 = vpack.c.b16 %v1207, %v1203
        %v1452 = vpack.c.b16 %v1208, %v1204
        %v1453 = vpack.c.b16 %v1213, %v1209
        %v1454 = vpack.c.b16 %v1214, %v1210
        %v1455 = vpack.c.b16 %v1215, %v1211
        %v1456 = vpack.c.b16 %v1216, %v1212
        %v1457 = vpack.c.b16 %v1221, %v1217
        %v1458 = vpack.c.b16 %v1222, %v1218
        %v1459 = vpack.c.b16 %v1223, %v1219
        %v1460 = vpack.c.b16 %v1224, %v1220
        %v1461 = vpack.c.b16 %v1229, %v1225
        %v1462 = vpack.c.b16 %v1230, %v1226
        %v1463 = vpack.c.b16 %v1231, %v1227
        %v1464 = vpack.c.b16 %v1232, %v1228
        %v1465 = vpack.c.b16 %v1237, %v1233
        %v1466 = vpack.c.b16 %v1238, %v1234
        %v1467 = vpack.c.b16 %v1239, %v1235
        %v1468 = vpack.c.b16 %v1240, %v1236
        %v1469 = vpack.c.b16 %v1245, %v1241
        %v1470 = vpack.c.b16 %v1246, %v1242
        %v1471 = vpack.c.b16 %v1247, %v1243
        %v1472 = vpack.c.b16 %v1248, %v1244
        %v1473 = vpack.c.b16 %v1253, %v1249
        %v1474 = vpack.c.b16 %v1254, %v1250
        %v1475 = vpack.c.b16 %v1255, %v1251
        %v1476 = vpack.c.b16 %v1256, %v1252
        %v1477 = vpack.c.b16 %v1261, %v1257
        %v1478 = vpack.c.b16 %v1262, %v1258
        %v1479 = vpack.c.b16 %v1263, %v1259
        %v1480 = vpack.c.b16 %v1264, %v1260
        %v1481 = vpack.c.b16 %v1269, %v1265
        %v1482 = vpack.c.b16 %v1270, %v1266
        %v1483 = vpack.c.b16 %v1271, %v1267
        %v1484 = vpack.c.b16 %v1272, %v1268
        %v1485 = vpack.c.b16 %v1277, %v1273
        %v1486 = vpack.c.b16 %v1278, %v1274
        %v1487 = vpack.c.b16 %v1279, %v1275
        %v1488 = vpack.c.b16 %v1280, %v1276
        %v1489 = vpack.c.b16 %v1285, %v1281
        %v1490 = vpack.c.b16 %v1286, %v1282
        %v1491 = vpack.c.b16 %v1287, %v1283
        %v1492 = vpack.c.b16 %v1288, %v1284
        %v1493 = vpack.c.b16 %v1293, %v1289
        %v1494 = vpack.c.b16 %v1294, %v1290
        %v1495 = vpack.c.b16 %v1295, %v1291
        %v1496 = vpack.c.b16 %v1296, %v1292
        %v1497 = vpack.c.b16 %v1301, %v1297
        %v1498 = vpack.c.b16 %v1302, %v1298
        %v1499 = vpack.c.b16 %v1303, %v1299
        %v1500 = vpack.c.b16 %v1304, %v1300
        %v1501 = vpack.c.b16 %v1309, %v1305
        %v1502 = vpack.c.b16 %v1310, %v1306
        %v1503 = vpack.c.b16 %v1311, %v1307
        %v1504 = vpack.c.b16 %v1312, %v1308
        %v1505 = vpack.c.b16 %v1317, %v1313
        %v1506 = vpack.c.b16 %v1318, %v1314
        %v1507 = vpack.c.b16 %v1319, %v1315
        %v1508 = vpack.c.b16 %v1320, %v1316
        %v1509 = vpack.c.b16 %v1325, %v1321
        %v1510 = vpack.c.b16 %v1326, %v1322
        %v1511 = vpack.c.b16 %v1327, %v1323
        %v1512 = vpack.c.b16 %v1328, %v1324
        %v1513 = vpack.c.b16 %v1333, %v1329
        %v1514 = vpack.c.b16 %v1334, %v1330
        %v1515 = vpack.c.b16 %v1335, %v1331
        %v1516 = vpack.c.b16 %v1336, %v1332
        %v1517 = vpack.c.b16 %v1341, %v1337
        %v1518 = vpack.c.b16 %v1342, %v1338
        %v1519 = vpack.c.b16 %v1343, %v1339
        %v1520 = vpack.c.b16 %v1344, %v1340
        %v1521 = vpack.c.b16 %v1349, %v1345
        %v1522 = vpack.c.b16 %v1350, %v1346
        %v1523 = vpack.c.b16 %v1351, %v1347
        %v1524 = vpack.c.b16 %v1352, %v1348
        %v1525 = vpack.c.b16 %v1357, %v1353
        %v1526 = vpack.c.b16 %v1358, %v1354
        %v1527 = vpack.c.b16 %v1359, %v1355
        %v1528 = vpack.c.b16 %v1360, %v1356
        %v1529 = vpack.c.b16 %v1365, %v1361
        %v1530 = vpack.c.b16 %v1366, %v1362
        %v1531 = vpack.c.b16 %v1367, %v1363
        %v1532 = vpack.c.b16 %v1368, %v1364
        %v1533 = vpack.c.b16 %v1373, %v1369
        %v1534 = vpack.c.b16 %v1374, %v1370
        %v1535 = vpack.c.b16 %v1375, %v1371
        %v1536 = vpack.c.b16 %v1376, %v1372
        %v1537 = vpack.c.b16 %v1381, %v1377
        %v1538 = vpack.c.b16 %v1382, %v1378
        %v1539 = vpack.c.b16 %v1383, %v1379
        %v1540 = vpack.c.b16 %v1384, %v1380
        %v1541 = vpack.c.b16 %v1389, %v1385
        %v1542 = vpack.c.b16 %v1390, %v1386
        %v1543 = vpack.c.b16 %v1391, %v1387
        %v1544 = vpack.c.b16 %v1392, %v1388
        %v1545 = vpack.c.b16 %v1397, %v1393
        %v1546 = vpack.c.b16 %v1398, %v1394
        %v1547 = vpack.c.b16 %v1399, %v1395
        %v1548 = vpack.c.b16 %v1400, %v1396
        %v1549 = vpack.c.b16 %v1405, %v1401
        %v1550 = vpack.c.b16 %v1406, %v1402
        %v1551 = vpack.c.b16 %v1407, %v1403
        %v1552 = vpack.c.b16 %v1408, %v1404
        %v1553 = vpack.c.b16 %v1413, %v1409
        %v1554 = vpack.c.b16 %v1414, %v1410
        %v1555 = vpack.c.b16 %v1415, %v1411
        %v1556 = vpack.c.b16 %v1416, %v1412
        %v1557 = vpack.c.b16 %v1421, %v1417
        %v1558 = vpack.c.b16 %v1422, %v1418
        %v1559 = vpack.c.b16 %v1423, %v1419
        %v1560 = vpack.c.b16 %v1424, %v1420
        %v1561 = vpack.c.b16 %v1429, %v1425
        %v1562 = vpack.c.b16 %v1430, %v1426
        %v1563 = vpack.c.b16 %v1431, %v1427
        %v1564 = vpack.c.b16 %v1432, %v1428
        %v1565 = vpack.c.b16 %v1437, %v1433
        %v1566 = vpack.c.b16 %v1438, %v1434
        %v1567 = vpack.c.b16 %v1439, %v1435
        %v1568 = vpack.c.b16 %v1440, %v1436
        %1697 = vmatprep.subr.bf16.mxu0 %v1470
        %1698 = vmatpush1.bf16.msra.mxu0 %v1469
        %1699 = vmatprep.subr.bf16.mxu0 %v1466
        %1700 = vmatpush1.bf16.msra.mxu0 %v1465
        %1701 = vmatprep.subr.bf16.mxu0 %v1462
        %1702 = vmatpush1.bf16.msra.mxu0 %v1461
        %1703 = vmatprep.subr.bf16.mxu0 %v1458
        %1704 = vmatpush1.bf16.msra.mxu0 %v1457
        %1705 = vmatprep.subr.bf16.mxu0 %v1454
        %1706 = vmatpush1.bf16.msra.mxu0 %v1453
        %1707 = vmatprep.subr.bf16.mxu0 %v1450
        %1708 = vmatpush1.bf16.msra.mxu0 %v1449
        %1709 = vmatprep.subr.bf16.mxu0 %v1446
        %1710 = vmatpush1.bf16.msra.mxu0 %v1445
        %1711 = vmatprep.subr.bf16.mxu0 %v1442
        %1712 = vmatpush1.bf16.msra.mxu0 %v1441
        %1713 = vmatprep.subr.bf16.mxu0 %v1502
        %1714 = vmatpush2.bf16.msra.mxu0 %v1501
        %1715 = vmatprep.subr.bf16.mxu0 %v1498
        %1716 = vmatpush2.bf16.msra.mxu0 %v1497
        %1717 = vmatprep.subr.bf16.mxu0 %v1494
        %1718 = vmatpush2.bf16.msra.mxu0 %v1493
        %1719 = vmatprep.subr.bf16.mxu0 %v1490
        %1720 = vmatpush2.bf16.msra.mxu0 %v1489
        %1721 = vmatprep.subr.bf16.mxu0 %v1486
        %1722 = vmatpush2.bf16.msra.mxu0 %v1485
        %1723 = vmatprep.subr.bf16.mxu0 %v1482
        %1724 = vmatpush2.bf16.msra.mxu0 %v1481
        %1725 = vmatprep.subr.bf16.mxu0 %v1478
        %1726 = vmatpush2.bf16.msra.mxu0 %v1477
        %1727 = vmatprep.subr.bf16.mxu0 %v1474
        %1728 = vmatpush2.bf16.msra.mxu0 %v1473
        %1729 = vmatprep.mubr.bf16.mxu0 %v930
        %1730 = vmatmul.mubr.bf16.gmra.mxu0 %v929
        %v1731 = vpop.f32.mrf.mxu0
        %v1732 = vadd.f32 0.0, %v1731
        %v1733 = vpop.f32.mrf.mxu0
        %v1734 = vadd.f32 0.0, %v1733
        %v1735 = vpop.f32.mrf.mxu0
        %v1736 = vadd.f32 0.0, %v1735
        %v1737 = vpop.f32.mrf.mxu0
        %v1738 = vadd.f32 0.0, %v1737
        %1739 = vmatprep.mubr.bf16.mxu0 %v934
        %1740 = vmatmul.mubr.bf16.gmra.mxu0 %v933
        %v1741 = vpop.f32.mrf.mxu0
        %v1742 = vadd.f32 0.0, %v1741
        %v1743 = vpop.f32.mrf.mxu0
        %v1744 = vadd.f32 0.0, %v1743
        %v1745 = vpop.f32.mrf.mxu0
        %v1746 = vadd.f32 0.0, %v1745
        %v1747 = vpop.f32.mrf.mxu0
        %v1748 = vadd.f32 0.0, %v1747
        %1749 = vmatprep.mubr.bf16.mxu0 %v938
        %1750 = vmatmul.mubr.bf16.gmra.mxu0 %v937
        %v1751 = vpop.f32.mrf.mxu0
        %v1752 = vadd.f32 0.0, %v1751
        %v1753 = vpop.f32.mrf.mxu0
        %v1754 = vadd.f32 0.0, %v1753
        %v1755 = vpop.f32.mrf.mxu0
        %v1756 = vadd.f32 0.0, %v1755
        %v1757 = vpop.f32.mrf.mxu0
        %v1758 = vadd.f32 0.0, %v1757
        %1759 = vmatprep.mubr.bf16.mxu0 %v942
        %1760 = vmatmul.mubr.bf16.gmra.mxu0 %v941
        %v1761 = vpop.f32.mrf.mxu0
        %v1762 = vadd.f32 0.0, %v1761
        %v1763 = vpop.f32.mrf.mxu0
        %v1764 = vadd.f32 0.0, %v1763
        %v1765 = vpop.f32.mrf.mxu0
        %v1766 = vadd.f32 0.0, %v1765
        %v1767 = vpop.f32.mrf.mxu0
        %v1768 = vadd.f32 0.0, %v1767
        %1769 = vmatprep.mubr.bf16.mxu0 %v946
        %1770 = vmatmul.mubr.bf16.gmra.mxu0 %v945
        %v1771 = vpop.f32.mrf.mxu0
        %v1772 = vadd.f32 0.0, %v1771
        %v1773 = vpop.f32.mrf.mxu0
        %v1774 = vadd.f32 0.0, %v1773
        %v1775 = vpop.f32.mrf.mxu0
        %v1776 = vadd.f32 0.0, %v1775
        %v1777 = vpop.f32.mrf.mxu0
        %v1778 = vadd.f32 0.0, %v1777
        %1779 = vmatprep.mubr.bf16.mxu0 %v950
        %1780 = vmatmul.mubr.bf16.gmra.mxu0 %v949
        %v1781 = vpop.f32.mrf.mxu0
        %v1782 = vadd.f32 0.0, %v1781
        %v1783 = vpop.f32.mrf.mxu0
        %v1784 = vadd.f32 0.0, %v1783
        %v1785 = vpop.f32.mrf.mxu0
        %v1786 = vadd.f32 0.0, %v1785
        %v1787 = vpop.f32.mrf.mxu0
        %v1788 = vadd.f32 0.0, %v1787
        %1789 = vmatprep.mubr.bf16.mxu0 %v954
        %1790 = vmatmul.mubr.bf16.gmra.mxu0 %v953
        %v1791 = vpop.f32.mrf.mxu0
        %v1792 = vadd.f32 0.0, %v1791
        %v1793 = vpop.f32.mrf.mxu0
        %v1794 = vadd.f32 0.0, %v1793
        %v1795 = vpop.f32.mrf.mxu0
        %v1796 = vadd.f32 0.0, %v1795
        %v1797 = vpop.f32.mrf.mxu0
        %v1798 = vadd.f32 0.0, %v1797
        %1799 = vmatprep.mubr.bf16.mxu0 %v958
        %1800 = vmatmul.mubr.bf16.gmra.mxu0 %v957
        %v1801 = vpop.f32.mrf.mxu0
        %v1802 = vadd.f32 0.0, %v1801
        %v1803 = vpop.f32.mrf.mxu0
        %v1804 = vadd.f32 0.0, %v1803
        %v1805 = vpop.f32.mrf.mxu0
        %v1806 = vadd.f32 0.0, %v1805
        %v1807 = vpop.f32.mrf.mxu0
        %v1808 = vadd.f32 0.0, %v1807
        %1809 = vmatprep.mubr.bf16.mxu0 %v962
        %1810 = vmatmul.mubr.bf16.gmra.mxu0 %v961
        %v1811 = vpop.f32.mrf.mxu0
        %v1812 = vadd.f32 0.0, %v1811
        %v1813 = vpop.f32.mrf.mxu0
        %v1814 = vadd.f32 0.0, %v1813
        %v1815 = vpop.f32.mrf.mxu0
        %v1816 = vadd.f32 0.0, %v1815
        %v1817 = vpop.f32.mrf.mxu0
        %v1818 = vadd.f32 0.0, %v1817
        %1819 = vmatprep.mubr.bf16.mxu0 %v966
        %1820 = vmatmul.mubr.bf16.gmra.mxu0 %v965
        %v1821 = vpop.f32.mrf.mxu0
        %v1822 = vadd.f32 0.0, %v1821
        %v1823 = vpop.f32.mrf.mxu0
        %v1824 = vadd.f32 0.0, %v1823
        %v1825 = vpop.f32.mrf.mxu0
        %v1826 = vadd.f32 0.0, %v1825
        %v1827 = vpop.f32.mrf.mxu0
        %v1828 = vadd.f32 0.0, %v1827
        %1829 = vmatprep.mubr.bf16.mxu0 %v970
        %1830 = vmatmul.mubr.bf16.gmra.mxu0 %v969
        %v1831 = vpop.f32.mrf.mxu0
        %v1832 = vadd.f32 0.0, %v1831
        %v1833 = vpop.f32.mrf.mxu0
        %v1834 = vadd.f32 0.0, %v1833
        %v1835 = vpop.f32.mrf.mxu0
        %v1836 = vadd.f32 0.0, %v1835
        %v1837 = vpop.f32.mrf.mxu0
        %v1838 = vadd.f32 0.0, %v1837
        %1839 = vmatprep.mubr.bf16.mxu0 %v974
        %1840 = vmatmul.mubr.bf16.gmra.mxu0 %v973
        %v1841 = vpop.f32.mrf.mxu0
        %v1842 = vadd.f32 0.0, %v1841
        %v1843 = vpop.f32.mrf.mxu0
        %v1844 = vadd.f32 0.0, %v1843
        %v1845 = vpop.f32.mrf.mxu0
        %v1846 = vadd.f32 0.0, %v1845
        %v1847 = vpop.f32.mrf.mxu0
        %v1848 = vadd.f32 0.0, %v1847
        %1849 = vmatprep.mubr.bf16.mxu0 %v978
        %1850 = vmatmul.mubr.bf16.gmra.mxu0 %v977
        %v1851 = vpop.f32.mrf.mxu0
        %v1852 = vadd.f32 0.0, %v1851
        %v1853 = vpop.f32.mrf.mxu0
        %v1854 = vadd.f32 0.0, %v1853
        %v1855 = vpop.f32.mrf.mxu0
        %v1856 = vadd.f32 0.0, %v1855
        %v1857 = vpop.f32.mrf.mxu0
        %v1858 = vadd.f32 0.0, %v1857
        %1859 = vmatprep.mubr.bf16.mxu0 %v982
        %1860 = vmatmul.mubr.bf16.gmra.mxu0 %v981
        %v1861 = vpop.f32.mrf.mxu0
        %v1862 = vadd.f32 0.0, %v1861
        %v1863 = vpop.f32.mrf.mxu0
        %v1864 = vadd.f32 0.0, %v1863
        %v1865 = vpop.f32.mrf.mxu0
        %v1866 = vadd.f32 0.0, %v1865
        %v1867 = vpop.f32.mrf.mxu0
        %v1868 = vadd.f32 0.0, %v1867
        %1869 = vmatprep.mubr.bf16.mxu0 %v986
        %1870 = vmatmul.mubr.bf16.gmra.mxu0 %v985
        %v1871 = vpop.f32.mrf.mxu0
        %v1872 = vadd.f32 0.0, %v1871
        %v1873 = vpop.f32.mrf.mxu0
        %v1874 = vadd.f32 0.0, %v1873
        %v1875 = vpop.f32.mrf.mxu0
        %v1876 = vadd.f32 0.0, %v1875
        %v1877 = vpop.f32.mrf.mxu0
        %v1878 = vadd.f32 0.0, %v1877
        %1879 = vmatprep.mubr.bf16.mxu0 %v990
        %1880 = vmatmul.mubr.bf16.gmra.mxu0 %v989
        %v1881 = vpop.f32.mrf.mxu0
        %v1882 = vadd.f32 0.0, %v1881
        %v1883 = vpop.f32.mrf.mxu0
        %v1884 = vadd.f32 0.0, %v1883
        %v1885 = vpop.f32.mrf.mxu0
        %v1886 = vadd.f32 0.0, %v1885
        %v1887 = vpop.f32.mrf.mxu0
        %v1888 = vadd.f32 0.0, %v1887
        %1889 = vdwg.mxu0
        %1890 = vmatprep.subr.bf16.mxu0 %v1534
        %1891 = vmatpush1.bf16.msra.mxu0 %v1533
        %1892 = vmatprep.subr.bf16.mxu0 %v1530
        %1893 = vmatpush1.bf16.msra.mxu0 %v1529
        %1894 = vmatprep.subr.bf16.mxu0 %v1526
        %1895 = vmatpush1.bf16.msra.mxu0 %v1525
        %1896 = vmatprep.subr.bf16.mxu0 %v1522
        %1897 = vmatpush1.bf16.msra.mxu0 %v1521
        %1898 = vmatprep.subr.bf16.mxu0 %v1518
        %1899 = vmatpush1.bf16.msra.mxu0 %v1517
        %1900 = vmatprep.subr.bf16.mxu0 %v1514
        %1901 = vmatpush1.bf16.msra.mxu0 %v1513
        %1902 = vmatprep.subr.bf16.mxu0 %v1510
        %1903 = vmatpush1.bf16.msra.mxu0 %v1509
        %1904 = vmatprep.subr.bf16.mxu0 %v1506
        %1905 = vmatpush1.bf16.msra.mxu0 %v1505
        %1906 = vmatprep.subr.bf16.mxu0 %v1566
        %1907 = vmatpush2.bf16.msra.mxu0 %v1565
        %1908 = vmatprep.subr.bf16.mxu0 %v1562
        %1909 = vmatpush2.bf16.msra.mxu0 %v1561
        %1910 = vmatprep.subr.bf16.mxu0 %v1558
        %1911 = vmatpush2.bf16.msra.mxu0 %v1557
        %1912 = vmatprep.subr.bf16.mxu0 %v1554
        %1913 = vmatpush2.bf16.msra.mxu0 %v1553
        %1914 = vmatprep.subr.bf16.mxu0 %v1550
        %1915 = vmatpush2.bf16.msra.mxu0 %v1549
        %1916 = vmatprep.subr.bf16.mxu0 %v1546
        %1917 = vmatpush2.bf16.msra.mxu0 %v1545
        %1918 = vmatprep.subr.bf16.mxu0 %v1542
        %1919 = vmatpush2.bf16.msra.mxu0 %v1541
        %1920 = vmatprep.subr.bf16.mxu0 %v1538
        %1921 = vmatpush2.bf16.msra.mxu0 %v1537
        %1922 = vmatprep.mubr.bf16.mxu0 %v932
        %1923 = vmatmul.mubr.bf16.gmra.mxu0 %v931
        %v1924 = vpop.f32.mrf.mxu0
        %v1925 = vadd.f32 %v1732, %v1924
        %v1926 = vpop.f32.mrf.mxu0
        %v1927 = vadd.f32 %v1734, %v1926
        %v1928 = vpop.f32.mrf.mxu0
        %v1929 = vadd.f32 %v1736, %v1928
        %v1930 = vpop.f32.mrf.mxu0
        %v1931 = vadd.f32 %v1738, %v1930
        %1932 = vmatprep.mubr.bf16.mxu0 %v936
        %1933 = vmatmul.mubr.bf16.gmra.mxu0 %v935
        %v1934 = vpop.f32.mrf.mxu0
        %v1935 = vadd.f32 %v1742, %v1934
        %v1936 = vpop.f32.mrf.mxu0
        %v1937 = vadd.f32 %v1744, %v1936
        %v1938 = vpop.f32.mrf.mxu0
        %v1939 = vadd.f32 %v1746, %v1938
        %v1940 = vpop.f32.mrf.mxu0
        %v1941 = vadd.f32 %v1748, %v1940
        %1942 = vmatprep.mubr.bf16.mxu0 %v940
        %1943 = vmatmul.mubr.bf16.gmra.mxu0 %v939
        %v1944 = vpop.f32.mrf.mxu0
        %v1945 = vadd.f32 %v1752, %v1944
        %v1946 = vpop.f32.mrf.mxu0
        %v1947 = vadd.f32 %v1754, %v1946
        %v1948 = vpop.f32.mrf.mxu0
        %v1949 = vadd.f32 %v1756, %v1948
        %v1950 = vpop.f32.mrf.mxu0
        %v1951 = vadd.f32 %v1758, %v1950
        %1952 = vmatprep.mubr.bf16.mxu0 %v944
        %1953 = vmatmul.mubr.bf16.gmra.mxu0 %v943
        %v1954 = vpop.f32.mrf.mxu0
        %v1955 = vadd.f32 %v1762, %v1954
        %v1956 = vpop.f32.mrf.mxu0
        %v1957 = vadd.f32 %v1764, %v1956
        %v1958 = vpop.f32.mrf.mxu0
        %v1959 = vadd.f32 %v1766, %v1958
        %v1960 = vpop.f32.mrf.mxu0
        %v1961 = vadd.f32 %v1768, %v1960
        %1962 = vmatprep.mubr.bf16.mxu0 %v948
        %1963 = vmatmul.mubr.bf16.gmra.mxu0 %v947
        %v1964 = vpop.f32.mrf.mxu0
        %v1965 = vadd.f32 %v1772, %v1964
        %v1966 = vpop.f32.mrf.mxu0
        %v1967 = vadd.f32 %v1774, %v1966
        %v1968 = vpop.f32.mrf.mxu0
        %v1969 = vadd.f32 %v1776, %v1968
        %v1970 = vpop.f32.mrf.mxu0
        %v1971 = vadd.f32 %v1778, %v1970
        %1972 = vmatprep.mubr.bf16.mxu0 %v952
        %1973 = vmatmul.mubr.bf16.gmra.mxu0 %v951
        %v1974 = vpop.f32.mrf.mxu0
        %v1975 = vadd.f32 %v1782, %v1974
        %v1976 = vpop.f32.mrf.mxu0
        %v1977 = vadd.f32 %v1784, %v1976
        %v1978 = vpop.f32.mrf.mxu0
        %v1979 = vadd.f32 %v1786, %v1978
        %v1980 = vpop.f32.mrf.mxu0
        %v1981 = vadd.f32 %v1788, %v1980
        %1982 = vmatprep.mubr.bf16.mxu0 %v956
        %1983 = vmatmul.mubr.bf16.gmra.mxu0 %v955
        %v1984 = vpop.f32.mrf.mxu0
        %v1985 = vadd.f32 %v1792, %v1984
        %v1986 = vpop.f32.mrf.mxu0
        %v1987 = vadd.f32 %v1794, %v1986
        %v1988 = vpop.f32.mrf.mxu0
        %v1989 = vadd.f32 %v1796, %v1988
        %v1990 = vpop.f32.mrf.mxu0
        %v1991 = vadd.f32 %v1798, %v1990
        %1992 = vmatprep.mubr.bf16.mxu0 %v960
        %1993 = vmatmul.mubr.bf16.gmra.mxu0 %v959
        %v1994 = vpop.f32.mrf.mxu0
        %v1995 = vadd.f32 %v1802, %v1994
        %v1996 = vpop.f32.mrf.mxu0
        %v1997 = vadd.f32 %v1804, %v1996
        %v1998 = vpop.f32.mrf.mxu0
        %v1999 = vadd.f32 %v1806, %v1998
        %v2000 = vpop.f32.mrf.mxu0
        %v2001 = vadd.f32 %v1808, %v2000
        %2002 = vmatprep.mubr.bf16.mxu0 %v964
        %2003 = vmatmul.mubr.bf16.gmra.mxu0 %v963
        %v2004 = vpop.f32.mrf.mxu0
        %v2005 = vadd.f32 %v1812, %v2004
        %v2006 = vpop.f32.mrf.mxu0
        %v2007 = vadd.f32 %v1814, %v2006
        %v2008 = vpop.f32.mrf.mxu0
        %v2009 = vadd.f32 %v1816, %v2008
        %v2010 = vpop.f32.mrf.mxu0
        %v2011 = vadd.f32 %v1818, %v2010
        %2012 = vmatprep.mubr.bf16.mxu0 %v968
        %2013 = vmatmul.mubr.bf16.gmra.mxu0 %v967
        %v2014 = vpop.f32.mrf.mxu0
        %v2015 = vadd.f32 %v1822, %v2014
        %v2016 = vpop.f32.mrf.mxu0
        %v2017 = vadd.f32 %v1824, %v2016
        %v2018 = vpop.f32.mrf.mxu0
        %v2019 = vadd.f32 %v1826, %v2018
        %v2020 = vpop.f32.mrf.mxu0
        %v2021 = vadd.f32 %v1828, %v2020
        %2022 = vmatprep.mubr.bf16.mxu0 %v972
        %2023 = vmatmul.mubr.bf16.gmra.mxu0 %v971
        %v2024 = vpop.f32.mrf.mxu0
        %v2025 = vadd.f32 %v1832, %v2024
        %v2026 = vpop.f32.mrf.mxu0
        %v2027 = vadd.f32 %v1834, %v2026
        %v2028 = vpop.f32.mrf.mxu0
        %v2029 = vadd.f32 %v1836, %v2028
        %v2030 = vpop.f32.mrf.mxu0
        %v2031 = vadd.f32 %v1838, %v2030
        %2032 = vmatprep.mubr.bf16.mxu0 %v976
        %2033 = vmatmul.mubr.bf16.gmra.mxu0 %v975
        %v2034 = vpop.f32.mrf.mxu0
        %v2035 = vadd.f32 %v1842, %v2034
        %v2036 = vpop.f32.mrf.mxu0
        %v2037 = vadd.f32 %v1844, %v2036
        %v2038 = vpop.f32.mrf.mxu0
        %v2039 = vadd.f32 %v1846, %v2038
        %v2040 = vpop.f32.mrf.mxu0
        %v2041 = vadd.f32 %v1848, %v2040
        %2042 = vmatprep.mubr.bf16.mxu0 %v980
        %2043 = vmatmul.mubr.bf16.gmra.mxu0 %v979
        %v2044 = vpop.f32.mrf.mxu0
        %v2045 = vadd.f32 %v1852, %v2044
        %v2046 = vpop.f32.mrf.mxu0
        %v2047 = vadd.f32 %v1854, %v2046
        %v2048 = vpop.f32.mrf.mxu0
        %v2049 = vadd.f32 %v1856, %v2048
        %v2050 = vpop.f32.mrf.mxu0
        %v2051 = vadd.f32 %v1858, %v2050
        %2052 = vmatprep.mubr.bf16.mxu0 %v984
        %2053 = vmatmul.mubr.bf16.gmra.mxu0 %v983
        %v2054 = vpop.f32.mrf.mxu0
        %v2055 = vadd.f32 %v1862, %v2054
        %v2056 = vpop.f32.mrf.mxu0
        %v2057 = vadd.f32 %v1864, %v2056
        %v2058 = vpop.f32.mrf.mxu0
        %v2059 = vadd.f32 %v1866, %v2058
        %v2060 = vpop.f32.mrf.mxu0
        %v2061 = vadd.f32 %v1868, %v2060
        %2062 = vmatprep.mubr.bf16.mxu0 %v988
        %2063 = vmatmul.mubr.bf16.gmra.mxu0 %v987
        %v2064 = vpop.f32.mrf.mxu0
        %v2065 = vadd.f32 %v1872, %v2064
        %v2066 = vpop.f32.mrf.mxu0
        %v2067 = vadd.f32 %v1874, %v2066
        %v2068 = vpop.f32.mrf.mxu0
        %v2069 = vadd.f32 %v1876, %v2068
        %v2070 = vpop.f32.mrf.mxu0
        %v2071 = vadd.f32 %v1878, %v2070
        %2072 = vmatprep.mubr.bf16.mxu0 %v992
        %2073 = vmatmul.mubr.bf16.gmra.mxu0 %v991
        %v2074 = vpop.f32.mrf.mxu0
        %v2075 = vadd.f32 %v1882, %v2074
        %v2076 = vpop.f32.mrf.mxu0
        %v2077 = vadd.f32 %v1884, %v2076
        %v2078 = vpop.f32.mrf.mxu0
        %v2079 = vadd.f32 %v1886, %v2078
        %v2080 = vpop.f32.mrf.mxu0
        %v2081 = vadd.f32 %v1888, %v2080
        %2082 = vdwg.mxu0
        %2083 = vmatprep.subr.bf16.mxu0 %v1472
        %2084 = vmatpush1.bf16.msra.mxu0 %v1471
        %2085 = vmatprep.subr.bf16.mxu0 %v1468
        %2086 = vmatpush1.bf16.msra.mxu0 %v1467
        %2087 = vmatprep.subr.bf16.mxu0 %v1464
        %2088 = vmatpush1.bf16.msra.mxu0 %v1463
        %2089 = vmatprep.subr.bf16.mxu0 %v1460
        %2090 = vmatpush1.bf16.msra.mxu0 %v1459
        %2091 = vmatprep.subr.bf16.mxu0 %v1456
        %2092 = vmatpush1.bf16.msra.mxu0 %v1455
        %2093 = vmatprep.subr.bf16.mxu0 %v1452
        %2094 = vmatpush1.bf16.msra.mxu0 %v1451
        %2095 = vmatprep.subr.bf16.mxu0 %v1448
        %2096 = vmatpush1.bf16.msra.mxu0 %v1447
        %2097 = vmatprep.subr.bf16.mxu0 %v1444
        %2098 = vmatpush1.bf16.msra.mxu0 %v1443
        %2099 = vmatprep.subr.bf16.mxu0 %v1504
        %2100 = vmatpush2.bf16.msra.mxu0 %v1503
        %2101 = vmatprep.subr.bf16.mxu0 %v1500
        %2102 = vmatpush2.bf16.msra.mxu0 %v1499
        %2103 = vmatprep.subr.bf16.mxu0 %v1496
        %2104 = vmatpush2.bf16.msra.mxu0 %v1495
        %2105 = vmatprep.subr.bf16.mxu0 %v1492
        %2106 = vmatpush2.bf16.msra.mxu0 %v1491
        %2107 = vmatprep.subr.bf16.mxu0 %v1488
        %2108 = vmatpush2.bf16.msra.mxu0 %v1487
        %2109 = vmatprep.subr.bf16.mxu0 %v1484
        %2110 = vmatpush2.bf16.msra.mxu0 %v1483
        %2111 = vmatprep.subr.bf16.mxu0 %v1480
        %2112 = vmatpush2.bf16.msra.mxu0 %v1479
        %2113 = vmatprep.subr.bf16.mxu0 %v1476
        %2114 = vmatpush2.bf16.msra.mxu0 %v1475
        %2115 = vmatprep.mubr.bf16.mxu0 %v930
        %2116 = vmatmul.mubr.bf16.gmra.mxu0 %v929
        %v2117 = vpop.f32.mrf.mxu0
        %v2118 = vadd.f32 0.0, %v2117
        %v2119 = vpop.f32.mrf.mxu0
        %v2120 = vadd.f32 0.0, %v2119
        %v2121 = vpop.f32.mrf.mxu0
        %v2122 = vadd.f32 0.0, %v2121
        %v2123 = vpop.f32.mrf.mxu0
        %v2124 = vadd.f32 0.0, %v2123
        %2125 = vmatprep.mubr.bf16.mxu0 %v934
        %2126 = vmatmul.mubr.bf16.gmra.mxu0 %v933
        %v2127 = vpop.f32.mrf.mxu0
        %v2128 = vadd.f32 0.0, %v2127
        %v2129 = vpop.f32.mrf.mxu0
        %v2130 = vadd.f32 0.0, %v2129
        %v2131 = vpop.f32.mrf.mxu0
        %v2132 = vadd.f32 0.0, %v2131
        %v2133 = vpop.f32.mrf.mxu0
        %v2134 = vadd.f32 0.0, %v2133
        %2135 = vmatprep.mubr.bf16.mxu0 %v938
        %2136 = vmatmul.mubr.bf16.gmra.mxu0 %v937
        %v2137 = vpop.f32.mrf.mxu0
        %v2138 = vadd.f32 0.0, %v2137
        %v2139 = vpop.f32.mrf.mxu0
        %v2140 = vadd.f32 0.0, %v2139
        %v2141 = vpop.f32.mrf.mxu0
        %v2142 = vadd.f32 0.0, %v2141
        %v2143 = vpop.f32.mrf.mxu0
        %v2144 = vadd.f32 0.0, %v2143
        %2145 = vmatprep.mubr.bf16.mxu0 %v942
        %2146 = vmatmul.mubr.bf16.gmra.mxu0 %v941
        %v2147 = vpop.f32.mrf.mxu0
        %v2148 = vadd.f32 0.0, %v2147
        %v2149 = vpop.f32.mrf.mxu0
        %v2150 = vadd.f32 0.0, %v2149
        %v2151 = vpop.f32.mrf.mxu0
        %v2152 = vadd.f32 0.0, %v2151
        %v2153 = vpop.f32.mrf.mxu0
        %v2154 = vadd.f32 0.0, %v2153
        %2155 = vmatprep.mubr.bf16.mxu0 %v946
        %2156 = vmatmul.mubr.bf16.gmra.mxu0 %v945
        %v2157 = vpop.f32.mrf.mxu0
        %v2158 = vadd.f32 0.0, %v2157
        %v2159 = vpop.f32.mrf.mxu0
        %v2160 = vadd.f32 0.0, %v2159
        %v2161 = vpop.f32.mrf.mxu0
        %v2162 = vadd.f32 0.0, %v2161
        %v2163 = vpop.f32.mrf.mxu0
        %v2164 = vadd.f32 0.0, %v2163
        %2165 = vmatprep.mubr.bf16.mxu0 %v950
        %2166 = vmatmul.mubr.bf16.gmra.mxu0 %v949
        %v2167 = vpop.f32.mrf.mxu0
        %v2168 = vadd.f32 0.0, %v2167
        %v2169 = vpop.f32.mrf.mxu0
        %v2170 = vadd.f32 0.0, %v2169
        %v2171 = vpop.f32.mrf.mxu0
        %v2172 = vadd.f32 0.0, %v2171
        %v2173 = vpop.f32.mrf.mxu0
        %v2174 = vadd.f32 0.0, %v2173
        %2175 = vmatprep.mubr.bf16.mxu0 %v954
        %2176 = vmatmul.mubr.bf16.gmra.mxu0 %v953
        %v2177 = vpop.f32.mrf.mxu0
        %v2178 = vadd.f32 0.0, %v2177
        %v2179 = vpop.f32.mrf.mxu0
        %v2180 = vadd.f32 0.0, %v2179
        %v2181 = vpop.f32.mrf.mxu0
        %v2182 = vadd.f32 0.0, %v2181
        %v2183 = vpop.f32.mrf.mxu0
        %v2184 = vadd.f32 0.0, %v2183
        %2185 = vmatprep.mubr.bf16.mxu0 %v958
        %2186 = vmatmul.mubr.bf16.gmra.mxu0 %v957
        %v2187 = vpop.f32.mrf.mxu0
        %v2188 = vadd.f32 0.0, %v2187
        %v2189 = vpop.f32.mrf.mxu0
        %v2190 = vadd.f32 0.0, %v2189
        %v2191 = vpop.f32.mrf.mxu0
        %v2192 = vadd.f32 0.0, %v2191
        %v2193 = vpop.f32.mrf.mxu0
        %v2194 = vadd.f32 0.0, %v2193
        %2195 = vmatprep.mubr.bf16.mxu0 %v962
        %2196 = vmatmul.mubr.bf16.gmra.mxu0 %v961
        %v2197 = vpop.f32.mrf.mxu0
        %v2198 = vadd.f32 0.0, %v2197
        %v2199 = vpop.f32.mrf.mxu0
        %v2200 = vadd.f32 0.0, %v2199
        %v2201 = vpop.f32.mrf.mxu0
        %v2202 = vadd.f32 0.0, %v2201
        %v2203 = vpop.f32.mrf.mxu0
        %v2204 = vadd.f32 0.0, %v2203
        %2205 = vmatprep.mubr.bf16.mxu0 %v966
        %2206 = vmatmul.mubr.bf16.gmra.mxu0 %v965
        %v2207 = vpop.f32.mrf.mxu0
        %v2208 = vadd.f32 0.0, %v2207
        %v2209 = vpop.f32.mrf.mxu0
        %v2210 = vadd.f32 0.0, %v2209
        %v2211 = vpop.f32.mrf.mxu0
        %v2212 = vadd.f32 0.0, %v2211
        %v2213 = vpop.f32.mrf.mxu0
        %v2214 = vadd.f32 0.0, %v2213
        %2215 = vmatprep.mubr.bf16.mxu0 %v970
        %2216 = vmatmul.mubr.bf16.gmra.mxu0 %v969
        %v2217 = vpop.f32.mrf.mxu0
        %v2218 = vadd.f32 0.0, %v2217
        %v2219 = vpop.f32.mrf.mxu0
        %v2220 = vadd.f32 0.0, %v2219
        %v2221 = vpop.f32.mrf.mxu0
        %v2222 = vadd.f32 0.0, %v2221
        %v2223 = vpop.f32.mrf.mxu0
        %v2224 = vadd.f32 0.0, %v2223
        %2225 = vmatprep.mubr.bf16.mxu0 %v974
        %2226 = vmatmul.mubr.bf16.gmra.mxu0 %v973
        %v2227 = vpop.f32.mrf.mxu0
        %v2228 = vadd.f32 0.0, %v2227
        %v2229 = vpop.f32.mrf.mxu0
        %v2230 = vadd.f32 0.0, %v2229
        %v2231 = vpop.f32.mrf.mxu0
        %v2232 = vadd.f32 0.0, %v2231
        %v2233 = vpop.f32.mrf.mxu0
        %v2234 = vadd.f32 0.0, %v2233
        %2235 = vmatprep.mubr.bf16.mxu0 %v978
        %2236 = vmatmul.mubr.bf16.gmra.mxu0 %v977
        %v2237 = vpop.f32.mrf.mxu0
        %v2238 = vadd.f32 0.0, %v2237
        %v2239 = vpop.f32.mrf.mxu0
        %v2240 = vadd.f32 0.0, %v2239
        %v2241 = vpop.f32.mrf.mxu0
        %v2242 = vadd.f32 0.0, %v2241
        %v2243 = vpop.f32.mrf.mxu0
        %v2244 = vadd.f32 0.0, %v2243
        %2245 = vmatprep.mubr.bf16.mxu0 %v982
        %2246 = vmatmul.mubr.bf16.gmra.mxu0 %v981
        %v2247 = vpop.f32.mrf.mxu0
        %v2248 = vadd.f32 0.0, %v2247
        %v2249 = vpop.f32.mrf.mxu0
        %v2250 = vadd.f32 0.0, %v2249
        %v2251 = vpop.f32.mrf.mxu0
        %v2252 = vadd.f32 0.0, %v2251
        %v2253 = vpop.f32.mrf.mxu0
        %v2254 = vadd.f32 0.0, %v2253
        %2255 = vmatprep.mubr.bf16.mxu0 %v986
        %2256 = vmatmul.mubr.bf16.gmra.mxu0 %v985
        %v2257 = vpop.f32.mrf.mxu0
        %v2258 = vadd.f32 0.0, %v2257
        %v2259 = vpop.f32.mrf.mxu0
        %v2260 = vadd.f32 0.0, %v2259
        %v2261 = vpop.f32.mrf.mxu0
        %v2262 = vadd.f32 0.0, %v2261
        %v2263 = vpop.f32.mrf.mxu0
        %v2264 = vadd.f32 0.0, %v2263
        %2265 = vmatprep.mubr.bf16.mxu0 %v990
        %2266 = vmatmul.mubr.bf16.gmra.mxu0 %v989
        %v2267 = vpop.f32.mrf.mxu0
        %v2268 = vadd.f32 0.0, %v2267
        %v2269 = vpop.f32.mrf.mxu0
        %v2270 = vadd.f32 0.0, %v2269
        %v2271 = vpop.f32.mrf.mxu0
        %v2272 = vadd.f32 0.0, %v2271
        %v2273 = vpop.f32.mrf.mxu0
        %v2274 = vadd.f32 0.0, %v2273
        %2275 = vdwg.mxu0
        %2276 = vmatprep.subr.bf16.mxu0 %v1536
        %2277 = vmatpush1.bf16.msra.mxu0 %v1535
        %2278 = vmatprep.subr.bf16.mxu0 %v1532
        %2279 = vmatpush1.bf16.msra.mxu0 %v1531
        %2280 = vmatprep.subr.bf16.mxu0 %v1528
        %2281 = vmatpush1.bf16.msra.mxu0 %v1527
        %2282 = vmatprep.subr.bf16.mxu0 %v1524
        %2283 = vmatpush1.bf16.msra.mxu0 %v1523
        %2284 = vmatprep.subr.bf16.mxu0 %v1520
        %2285 = vmatpush1.bf16.msra.mxu0 %v1519
        %2286 = vmatprep.subr.bf16.mxu0 %v1516
        %2287 = vmatpush1.bf16.msra.mxu0 %v1515
        %2288 = vmatprep.subr.bf16.mxu0 %v1512
        %2289 = vmatpush1.bf16.msra.mxu0 %v1511
        %2290 = vmatprep.subr.bf16.mxu0 %v1508
        %2291 = vmatpush1.bf16.msra.mxu0 %v1507
        %2292 = vmatprep.subr.bf16.mxu0 %v1568
        %2293 = vmatpush2.bf16.msra.mxu0 %v1567
        %2294 = vmatprep.subr.bf16.mxu0 %v1564
        %2295 = vmatpush2.bf16.msra.mxu0 %v1563
        %2296 = vmatprep.subr.bf16.mxu0 %v1560
        %2297 = vmatpush2.bf16.msra.mxu0 %v1559
        %2298 = vmatprep.subr.bf16.mxu0 %v1556
        %2299 = vmatpush2.bf16.msra.mxu0 %v1555
        %2300 = vmatprep.subr.bf16.mxu0 %v1552
        %2301 = vmatpush2.bf16.msra.mxu0 %v1551
        %2302 = vmatprep.subr.bf16.mxu0 %v1548
        %2303 = vmatpush2.bf16.msra.mxu0 %v1547
        %2304 = vmatprep.subr.bf16.mxu0 %v1544
        %2305 = vmatpush2.bf16.msra.mxu0 %v1543
        %2306 = vmatprep.subr.bf16.mxu0 %v1540
        %2307 = vmatpush2.bf16.msra.mxu0 %v1539
        %2308 = vmatprep.mubr.bf16.mxu0 %v932
        %2309 = vmatmul.mubr.bf16.gmra.mxu0 %v931
        %v2310 = vpop.f32.mrf.mxu0
        %v2311 = vadd.f32 %v2118, %v2310
        %v2312 = vpop.f32.mrf.mxu0
        %v2313 = vadd.f32 %v2120, %v2312
        %v2314 = vpop.f32.mrf.mxu0
        %v2315 = vadd.f32 %v2122, %v2314
        %v2316 = vpop.f32.mrf.mxu0
        %v2317 = vadd.f32 %v2124, %v2316
        %2318 = vmatprep.mubr.bf16.mxu0 %v936
        %2319 = vmatmul.mubr.bf16.gmra.mxu0 %v935
        %v2320 = vpop.f32.mrf.mxu0
        %v2321 = vadd.f32 %v2128, %v2320
        %v2322 = vpop.f32.mrf.mxu0
        %v2323 = vadd.f32 %v2130, %v2322
        %v2324 = vpop.f32.mrf.mxu0
        %v2325 = vadd.f32 %v2132, %v2324
        %v2326 = vpop.f32.mrf.mxu0
        %v2327 = vadd.f32 %v2134, %v2326
        %2328 = vmatprep.mubr.bf16.mxu0 %v940
        %2329 = vmatmul.mubr.bf16.gmra.mxu0 %v939
        %v2330 = vpop.f32.mrf.mxu0
        %v2331 = vadd.f32 %v2138, %v2330
        %v2332 = vpop.f32.mrf.mxu0
        %v2333 = vadd.f32 %v2140, %v2332
        %v2334 = vpop.f32.mrf.mxu0
        %v2335 = vadd.f32 %v2142, %v2334
        %v2336 = vpop.f32.mrf.mxu0
        %v2337 = vadd.f32 %v2144, %v2336
        %2338 = vmatprep.mubr.bf16.mxu0 %v944
        %2339 = vmatmul.mubr.bf16.gmra.mxu0 %v943
        %v2340 = vpop.f32.mrf.mxu0
        %v2341 = vadd.f32 %v2148, %v2340
        %v2342 = vpop.f32.mrf.mxu0
        %v2343 = vadd.f32 %v2150, %v2342
        %v2344 = vpop.f32.mrf.mxu0
        %v2345 = vadd.f32 %v2152, %v2344
        %v2346 = vpop.f32.mrf.mxu0
        %v2347 = vadd.f32 %v2154, %v2346
        %2348 = vmatprep.mubr.bf16.mxu0 %v948
        %2349 = vmatmul.mubr.bf16.gmra.mxu0 %v947
        %v2350 = vpop.f32.mrf.mxu0
        %v2351 = vadd.f32 %v2158, %v2350
        %v2352 = vpop.f32.mrf.mxu0
        %v2353 = vadd.f32 %v2160, %v2352
        %v2354 = vpop.f32.mrf.mxu0
        %v2355 = vadd.f32 %v2162, %v2354
        %v2356 = vpop.f32.mrf.mxu0
        %v2357 = vadd.f32 %v2164, %v2356
        %2358 = vmatprep.mubr.bf16.mxu0 %v952
        %2359 = vmatmul.mubr.bf16.gmra.mxu0 %v951
        %v2360 = vpop.f32.mrf.mxu0
        %v2361 = vadd.f32 %v2168, %v2360
        %v2362 = vpop.f32.mrf.mxu0
        %v2363 = vadd.f32 %v2170, %v2362
        %v2364 = vpop.f32.mrf.mxu0
        %v2365 = vadd.f32 %v2172, %v2364
        %v2366 = vpop.f32.mrf.mxu0
        %v2367 = vadd.f32 %v2174, %v2366
        %2368 = vmatprep.mubr.bf16.mxu0 %v956
        %2369 = vmatmul.mubr.bf16.gmra.mxu0 %v955
        %v2370 = vpop.f32.mrf.mxu0
        %v2371 = vadd.f32 %v2178, %v2370
        %v2372 = vpop.f32.mrf.mxu0
        %v2373 = vadd.f32 %v2180, %v2372
        %v2374 = vpop.f32.mrf.mxu0
        %v2375 = vadd.f32 %v2182, %v2374
        %v2376 = vpop.f32.mrf.mxu0
        %v2377 = vadd.f32 %v2184, %v2376
        %2378 = vmatprep.mubr.bf16.mxu0 %v960
        %2379 = vmatmul.mubr.bf16.gmra.mxu0 %v959
        %v2380 = vpop.f32.mrf.mxu0
        %v2381 = vadd.f32 %v2188, %v2380
        %v2382 = vpop.f32.mrf.mxu0
        %v2383 = vadd.f32 %v2190, %v2382
        %v2384 = vpop.f32.mrf.mxu0
        %v2385 = vadd.f32 %v2192, %v2384
        %v2386 = vpop.f32.mrf.mxu0
        %v2387 = vadd.f32 %v2194, %v2386
        %2388 = vmatprep.mubr.bf16.mxu0 %v964
        %2389 = vmatmul.mubr.bf16.gmra.mxu0 %v963
        %v2390 = vpop.f32.mrf.mxu0
        %v2391 = vadd.f32 %v2198, %v2390
        %v2392 = vpop.f32.mrf.mxu0
        %v2393 = vadd.f32 %v2200, %v2392
        %v2394 = vpop.f32.mrf.mxu0
        %v2395 = vadd.f32 %v2202, %v2394
        %v2396 = vpop.f32.mrf.mxu0
        %v2397 = vadd.f32 %v2204, %v2396
        %2398 = vmatprep.mubr.bf16.mxu0 %v968
        %2399 = vmatmul.mubr.bf16.gmra.mxu0 %v967
        %v2400 = vpop.f32.mrf.mxu0
        %v2401 = vadd.f32 %v2208, %v2400
        %v2402 = vpop.f32.mrf.mxu0
        %v2403 = vadd.f32 %v2210, %v2402
        %v2404 = vpop.f32.mrf.mxu0
        %v2405 = vadd.f32 %v2212, %v2404
        %v2406 = vpop.f32.mrf.mxu0
        %v2407 = vadd.f32 %v2214, %v2406
        %2408 = vmatprep.mubr.bf16.mxu0 %v972
        %2409 = vmatmul.mubr.bf16.gmra.mxu0 %v971
        %v2410 = vpop.f32.mrf.mxu0
        %v2411 = vadd.f32 %v2218, %v2410
        %v2412 = vpop.f32.mrf.mxu0
        %v2413 = vadd.f32 %v2220, %v2412
        %v2414 = vpop.f32.mrf.mxu0
        %v2415 = vadd.f32 %v2222, %v2414
        %v2416 = vpop.f32.mrf.mxu0
        %v2417 = vadd.f32 %v2224, %v2416
        %2418 = vmatprep.mubr.bf16.mxu0 %v976
        %2419 = vmatmul.mubr.bf16.gmra.mxu0 %v975
        %v2420 = vpop.f32.mrf.mxu0
        %v2421 = vadd.f32 %v2228, %v2420
        %v2422 = vpop.f32.mrf.mxu0
        %v2423 = vadd.f32 %v2230, %v2422
        %v2424 = vpop.f32.mrf.mxu0
        %v2425 = vadd.f32 %v2232, %v2424
        %v2426 = vpop.f32.mrf.mxu0
        %v2427 = vadd.f32 %v2234, %v2426
        %2428 = vmatprep.mubr.bf16.mxu0 %v980
        %2429 = vmatmul.mubr.bf16.gmra.mxu0 %v979
        %v2430 = vpop.f32.mrf.mxu0
        %v2431 = vadd.f32 %v2238, %v2430
        %v2432 = vpop.f32.mrf.mxu0
        %v2433 = vadd.f32 %v2240, %v2432
        %v2434 = vpop.f32.mrf.mxu0
        %v2435 = vadd.f32 %v2242, %v2434
        %v2436 = vpop.f32.mrf.mxu0
        %v2437 = vadd.f32 %v2244, %v2436
        %2438 = vmatprep.mubr.bf16.mxu0 %v984
        %2439 = vmatmul.mubr.bf16.gmra.mxu0 %v983
        %v2440 = vpop.f32.mrf.mxu0
        %v2441 = vadd.f32 %v2248, %v2440
        %v2442 = vpop.f32.mrf.mxu0
        %v2443 = vadd.f32 %v2250, %v2442
        %v2444 = vpop.f32.mrf.mxu0
        %v2445 = vadd.f32 %v2252, %v2444
        %v2446 = vpop.f32.mrf.mxu0
        %v2447 = vadd.f32 %v2254, %v2446
        %2448 = vmatprep.mubr.bf16.mxu0 %v988
        %2449 = vmatmul.mubr.bf16.gmra.mxu0 %v987
        %v2450 = vpop.f32.mrf.mxu0
        %v2451 = vadd.f32 %v2258, %v2450
        %v2452 = vpop.f32.mrf.mxu0
        %v2453 = vadd.f32 %v2260, %v2452
        %v2454 = vpop.f32.mrf.mxu0
        %v2455 = vadd.f32 %v2262, %v2454
        %v2456 = vpop.f32.mrf.mxu0
        %v2457 = vadd.f32 %v2264, %v2456
        %2458 = vmatprep.mubr.bf16.mxu0 %v992
        %2459 = vmatmul.mubr.bf16.gmra.mxu0 %v991
        %v2460 = vpop.f32.mrf.mxu0
        %v2461 = vadd.f32 %v2268, %v2460
        %v2462 = vpop.f32.mrf.mxu0
        %v2463 = vadd.f32 %v2270, %v2462
        %v2464 = vpop.f32.mrf.mxu0
        %v2465 = vadd.f32 %v2272, %v2464
        %v2466 = vpop.f32.mrf.mxu0
        %v2467 = vadd.f32 %v2274, %v2466
        %2468 = vdwg.mxu0
        %v2469 = vadd.f32 %v417, %v1925
        %v2470 = vadd.f32 %v418, %v1927
        %v2471 = vadd.f32 %v419, %v2311
        %v2472 = vadd.f32 %v420, %v2313
        %v2473 = vadd.f32 %v421, %v1929
        %v2474 = vadd.f32 %v422, %v1931
        %v2475 = vadd.f32 %v423, %v2315
        %v2476 = vadd.f32 %v424, %v2317
        %v2477 = vadd.f32 %v425, %v1935
        %v2478 = vadd.f32 %v426, %v1937
        %v2479 = vadd.f32 %v427, %v2321
        %v2480 = vadd.f32 %v428, %v2323
        %v2481 = vadd.f32 %v429, %v1939
        %v2482 = vadd.f32 %v430, %v1941
        %v2483 = vadd.f32 %v431, %v2325
        %v2484 = vadd.f32 %v432, %v2327
        %v2485 = vadd.f32 %v433, %v1945
        %v2486 = vadd.f32 %v434, %v1947
        %v2487 = vadd.f32 %v435, %v2331
        %v2488 = vadd.f32 %v436, %v2333
        %v2489 = vadd.f32 %v437, %v1949
        %v2490 = vadd.f32 %v438, %v1951
        %v2491 = vadd.f32 %v439, %v2335
        %v2492 = vadd.f32 %v440, %v2337
        %v2493 = vadd.f32 %v441, %v1955
        %v2494 = vadd.f32 %v442, %v1957
        %v2495 = vadd.f32 %v443, %v2341
        %v2496 = vadd.f32 %v444, %v2343
        %v2497 = vadd.f32 %v445, %v1959
        %v2498 = vadd.f32 %v446, %v1961
        %v2499 = vadd.f32 %v447, %v2345
        %v2500 = vadd.f32 %v448, %v2347
        %v2501 = vadd.f32 %v449, %v1965
        %v2502 = vadd.f32 %v450, %v1967
        %v2503 = vadd.f32 %v451, %v2351
        %v2504 = vadd.f32 %v452, %v2353
        %v2505 = vadd.f32 %v453, %v1969
        %v2506 = vadd.f32 %v454, %v1971
        %v2507 = vadd.f32 %v455, %v2355
        %v2508 = vadd.f32 %v456, %v2357
        %v2509 = vadd.f32 %v457, %v1975
        %v2510 = vadd.f32 %v458, %v1977
        %v2511 = vadd.f32 %v459, %v2361
        %v2512 = vadd.f32 %v460, %v2363
        %v2513 = vadd.f32 %v461, %v1979
        %v2514 = vadd.f32 %v462, %v1981
        %v2515 = vadd.f32 %v463, %v2365
        %v2516 = vadd.f32 %v464, %v2367
        %v2517 = vadd.f32 %v465, %v1985
        %v2518 = vadd.f32 %v466, %v1987
        %v2519 = vadd.f32 %v467, %v2371
        %v2520 = vadd.f32 %v468, %v2373
        %v2521 = vadd.f32 %v469, %v1989
        %v2522 = vadd.f32 %v470, %v1991
        %v2523 = vadd.f32 %v471, %v2375
        %v2524 = vadd.f32 %v472, %v2377
        %v2525 = vadd.f32 %v473, %v1995
        %v2526 = vadd.f32 %v474, %v1997
        %v2527 = vadd.f32 %v475, %v2381
        %v2528 = vadd.f32 %v476, %v2383
        %v2529 = vadd.f32 %v477, %v1999
        %v2530 = vadd.f32 %v478, %v2001
        %v2531 = vadd.f32 %v479, %v2385
        %v2532 = vadd.f32 %v480, %v2387
        %v2533 = vadd.f32 %v481, %v2005
        %v2534 = vadd.f32 %v482, %v2007
        %v2535 = vadd.f32 %v483, %v2391
        %v2536 = vadd.f32 %v484, %v2393
        %v2537 = vadd.f32 %v485, %v2009
        %v2538 = vadd.f32 %v486, %v2011
        %v2539 = vadd.f32 %v487, %v2395
        %v2540 = vadd.f32 %v488, %v2397
        %v2541 = vadd.f32 %v489, %v2015
        %v2542 = vadd.f32 %v490, %v2017
        %v2543 = vadd.f32 %v491, %v2401
        %v2544 = vadd.f32 %v492, %v2403
        %v2545 = vadd.f32 %v493, %v2019
        %v2546 = vadd.f32 %v494, %v2021
        %v2547 = vadd.f32 %v495, %v2405
        %v2548 = vadd.f32 %v496, %v2407
        %v2549 = vadd.f32 %v497, %v2025
        %v2550 = vadd.f32 %v498, %v2027
        %v2551 = vadd.f32 %v499, %v2411
        %v2552 = vadd.f32 %v500, %v2413
        %v2553 = vadd.f32 %v501, %v2029
        %v2554 = vadd.f32 %v502, %v2031
        %v2555 = vadd.f32 %v503, %v2415
        %v2556 = vadd.f32 %v504, %v2417
        %v2557 = vadd.f32 %v505, %v2035
        %v2558 = vadd.f32 %v506, %v2037
        %v2559 = vadd.f32 %v507, %v2421
        %v2560 = vadd.f32 %v508, %v2423
        %v2561 = vadd.f32 %v509, %v2039
        %v2562 = vadd.f32 %v510, %v2041
        %v2563 = vadd.f32 %v511, %v2425
        %v2564 = vadd.f32 %v512, %v2427
        %v2565 = vadd.f32 %v513, %v2045
        %v2566 = vadd.f32 %v514, %v2047
        %v2567 = vadd.f32 %v515, %v2431
        %v2568 = vadd.f32 %v516, %v2433
        %v2569 = vadd.f32 %v517, %v2049
        %v2570 = vadd.f32 %v518, %v2051
        %v2571 = vadd.f32 %v519, %v2435
        %v2572 = vadd.f32 %v520, %v2437
        %v2573 = vadd.f32 %v521, %v2055
        %v2574 = vadd.f32 %v522, %v2057
        %v2575 = vadd.f32 %v523, %v2441
        %v2576 = vadd.f32 %v524, %v2443
        %v2577 = vadd.f32 %v525, %v2059
        %v2578 = vadd.f32 %v526, %v2061
        %v2579 = vadd.f32 %v527, %v2445
        %v2580 = vadd.f32 %v528, %v2447
        %v2581 = vadd.f32 %v529, %v2065
        %v2582 = vadd.f32 %v530, %v2067
        %v2583 = vadd.f32 %v531, %v2451
        %v2584 = vadd.f32 %v532, %v2453
        %v2585 = vadd.f32 %v533, %v2069
        %v2586 = vadd.f32 %v534, %v2071
        %v2587 = vadd.f32 %v535, %v2455
        %v2588 = vadd.f32 %v536, %v2457
        %v2589 = vadd.f32 %v537, %v2075
        %v2590 = vadd.f32 %v538, %v2077
        %v2591 = vadd.f32 %v539, %v2461
        %v2592 = vadd.f32 %v540, %v2463
        %v2593 = vadd.f32 %v541, %v2079
        %v2594 = vadd.f32 %v542, %v2081
        %v2595 = vadd.f32 %v543, %v2465
        %v2596 = vadd.f32 %v544, %v2467
        %2597 = vst [vmem:[#allocation2] sm:$0xff] %v2469
        %2598 = vst [vmem:[#allocation2 + $0x8] sm:$0xff] %v2470
        %2599 = vst [vmem:[#allocation2 + $0x10] sm:$0xff] %v2471
        %2600 = vst [vmem:[#allocation2 + $0x18] sm:$0xff] %v2472
        %2601 = vst [vmem:[#allocation2 + $0x20] sm:$0xff] %v2473
        %2602 = vst [vmem:[#allocation2 + $0x28] sm:$0xff] %v2474
        %2603 = vst [vmem:[#allocation2 + $0x30] sm:$0xff] %v2475
        %2604 = vst [vmem:[#allocation2 + $0x38] sm:$0xff] %v2476
        %2605 = vst [vmem:[#allocation2 + $0x40] sm:$0xff] %v2477
        %2606 = vst [vmem:[#allocation2 + $0x48] sm:$0xff] %v2478
        %2607 = vst [vmem:[#allocation2 + $0x50] sm:$0xff] %v2479
        %2608 = vst [vmem:[#allocation2 + $0x58] sm:$0xff] %v2480
        %2609 = vst [vmem:[#allocation2 + $0x60] sm:$0xff] %v2481
        %2610 = vst [vmem:[#allocation2 + $0x68] sm:$0xff] %v2482
        %2611 = vst [vmem:[#allocation2 + $0x70] sm:$0xff] %v2483
        %2612 = vst [vmem:[#allocation2 + $0x78] sm:$0xff] %v2484
        %2613 = vst [vmem:[#allocation2 + $0x80] sm:$0xff] %v2485
        %2614 = vst [vmem:[#allocation2 + $0x88] sm:$0xff] %v2486
        %2615 = vst [vmem:[#allocation2 + $0x90] sm:$0xff] %v2487
        %2616 = vst [vmem:[#allocation2 + $0x98] sm:$0xff] %v2488
        %2617 = vst [vmem:[#allocation2 + $0xa0] sm:$0xff] %v2489
        %2618 = vst [vmem:[#allocation2 + $0xa8] sm:$0xff] %v2490
        %2619 = vst [vmem:[#allocation2 + $0xb0] sm:$0xff] %v2491
        %2620 = vst [vmem:[#allocation2 + $0xb8] sm:$0xff] %v2492
        %2621 = vst [vmem:[#allocation2 + $0xc0] sm:$0xff] %v2493
        %2622 = vst [vmem:[#allocation2 + $0xc8] sm:$0xff] %v2494
        %2623 = vst [vmem:[#allocation2 + $0xd0] sm:$0xff] %v2495
        %2624 = vst [vmem:[#allocation2 + $0xd8] sm:$0xff] %v2496
        %2625 = vst [vmem:[#allocation2 + $0xe0] sm:$0xff] %v2497
        %2626 = vst [vmem:[#allocation2 + $0xe8] sm:$0xff] %v2498
        %2627 = vst [vmem:[#allocation2 + $0xf0] sm:$0xff] %v2499
        %2628 = vst [vmem:[#allocation2 + $0xf8] sm:$0xff] %v2500
        %2629 = vst [vmem:[#allocation2 + $0x100] sm:$0xff] %v2501
        %2630 = vst [vmem:[#allocation2 + $0x108] sm:$0xff] %v2502
        %2631 = vst [vmem:[#allocation2 + $0x110] sm:$0xff] %v2503
        %2632 = vst [vmem:[#allocation2 + $0x118] sm:$0xff] %v2504
        %2633 = vst [vmem:[#allocation2 + $0x120] sm:$0xff] %v2505
        %2634 = vst [vmem:[#allocation2 + $0x128] sm:$0xff] %v2506
        %2635 = vst [vmem:[#allocation2 + $0x130] sm:$0xff] %v2507
        %2636 = vst [vmem:[#allocation2 + $0x138] sm:$0xff] %v2508
        %2637 = vst [vmem:[#allocation2 + $0x140] sm:$0xff] %v2509
        %2638 = vst [vmem:[#allocation2 + $0x148] sm:$0xff] %v2510
        %2639 = vst [vmem:[#allocation2 + $0x150] sm:$0xff] %v2511
        %2640 = vst [vmem:[#allocation2 + $0x158] sm:$0xff] %v2512
        %2641 = vst [vmem:[#allocation2 + $0x160] sm:$0xff] %v2513
        %2642 = vst [vmem:[#allocation2 + $0x168] sm:$0xff] %v2514
        %2643 = vst [vmem:[#allocation2 + $0x170] sm:$0xff] %v2515
        %2644 = vst [vmem:[#allocation2 + $0x178] sm:$0xff] %v2516
        %2645 = vst [vmem:[#allocation2 + $0x180] sm:$0xff] %v2517
        %2646 = vst [vmem:[#allocation2 + $0x188] sm:$0xff] %v2518
        %2647 = vst [vmem:[#allocation2 + $0x190] sm:$0xff] %v2519
        %2648 = vst [vmem:[#allocation2 + $0x198] sm:$0xff] %v2520
        %2649 = vst [vmem:[#allocation2 + $0x1a0] sm:$0xff] %v2521
        %2650 = vst [vmem:[#allocation2 + $0x1a8] sm:$0xff] %v2522
        %2651 = vst [vmem:[#allocation2 + $0x1b0] sm:$0xff] %v2523
        %2652 = vst [vmem:[#allocation2 + $0x1b8] sm:$0xff] %v2524
        %2653 = vst [vmem:[#allocation2 + $0x1c0] sm:$0xff] %v2525
        %2654 = vst [vmem:[#allocation2 + $0x1c8] sm:$0xff] %v2526
        %2655 = vst [vmem:[#allocation2 + $0x1d0] sm:$0xff] %v2527
        %2656 = vst [vmem:[#allocation2 + $0x1d8] sm:$0xff] %v2528
        %2657 = vst [vmem:[#allocation2 + $0x1e0] sm:$0xff] %v2529
        %2658 = vst [vmem:[#allocation2 + $0x1e8] sm:$0xff] %v2530
        %2659 = vst [vmem:[#allocation2 + $0x1f0] sm:$0xff] %v2531
        %2660 = vst [vmem:[#allocation2 + $0x1f8] sm:$0xff] %v2532
        %2661 = vst [vmem:[#allocation2 + $0x200] sm:$0xff] %v2533
        %2662 = vst [vmem:[#allocation2 + $0x208] sm:$0xff] %v2534
        %2663 = vst [vmem:[#allocation2 + $0x210] sm:$0xff] %v2535
        %2664 = vst [vmem:[#allocation2 + $0x218] sm:$0xff] %v2536
        %2665 = vst [vmem:[#allocation2 + $0x220] sm:$0xff] %v2537
        %2666 = vst [vmem:[#allocation2 + $0x228] sm:$0xff] %v2538
        %2667 = vst [vmem:[#allocation2 + $0x230] sm:$0xff] %v2539
        %2668 = vst [vmem:[#allocation2 + $0x238] sm:$0xff] %v2540
        %2669 = vst [vmem:[#allocation2 + $0x240] sm:$0xff] %v2541
        %2670 = vst [vmem:[#allocation2 + $0x248] sm:$0xff] %v2542
        %2671 = vst [vmem:[#allocation2 + $0x250] sm:$0xff] %v2543
        %2672 = vst [vmem:[#allocation2 + $0x258] sm:$0xff] %v2544
        %2673 = vst [vmem:[#allocation2 + $0x260] sm:$0xff] %v2545
        %2674 = vst [vmem:[#allocation2 + $0x268] sm:$0xff] %v2546
        %2675 = vst [vmem:[#allocation2 + $0x270] sm:$0xff] %v2547
        %2676 = vst [vmem:[#allocation2 + $0x278] sm:$0xff] %v2548
        %2677 = vst [vmem:[#allocation2 + $0x280] sm:$0xff] %v2549
        %2678 = vst [vmem:[#allocation2 + $0x288] sm:$0xff] %v2550
        %2679 = vst [vmem:[#allocation2 + $0x290] sm:$0xff] %v2551
        %2680 = vst [vmem:[#allocation2 + $0x298] sm:$0xff] %v2552
        %2681 = vst [vmem:[#allocation2 + $0x2a0] sm:$0xff] %v2553
        %2682 = vst [vmem:[#allocation2 + $0x2a8] sm:$0xff] %v2554
        %2683 = vst [vmem:[#allocation2 + $0x2b0] sm:$0xff] %v2555
        %2684 = vst [vmem:[#allocation2 + $0x2b8] sm:$0xff] %v2556
        %2685 = vst [vmem:[#allocation2 + $0x2c0] sm:$0xff] %v2557
        %2686 = vst [vmem:[#allocation2 + $0x2c8] sm:$0xff] %v2558
        %2687 = vst [vmem:[#allocation2 + $0x2d0] sm:$0xff] %v2559
        %2688 = vst [vmem:[#allocation2 + $0x2d8] sm:$0xff] %v2560
        %2689 = vst [vmem:[#allocation2 + $0x2e0] sm:$0xff] %v2561
        %2690 = vst [vmem:[#allocation2 + $0x2e8] sm:$0xff] %v2562
        %2691 = vst [vmem:[#allocation2 + $0x2f0] sm:$0xff] %v2563
        %2692 = vst [vmem:[#allocation2 + $0x2f8] sm:$0xff] %v2564
        %2693 = vst [vmem:[#allocation2 + $0x300] sm:$0xff] %v2565
        %2694 = vst [vmem:[#allocation2 + $0x308] sm:$0xff] %v2566
        %2695 = vst [vmem:[#allocation2 + $0x310] sm:$0xff] %v2567
        %2696 = vst [vmem:[#allocation2 + $0x318] sm:$0xff] %v2568
        %2697 = vst [vmem:[#allocation2 + $0x320] sm:$0xff] %v2569
        %2698 = vst [vmem:[#allocation2 + $0x328] sm:$0xff] %v2570
        %2699 = vst [vmem:[#allocation2 + $0x330] sm:$0xff] %v2571
        %2700 = vst [vmem:[#allocation2 + $0x338] sm:$0xff] %v2572
        %2701 = vst [vmem:[#allocation2 + $0x340] sm:$0xff] %v2573
        %2702 = vst [vmem:[#allocation2 + $0x348] sm:$0xff] %v2574
        %2703 = vst [vmem:[#allocation2 + $0x350] sm:$0xff] %v2575
        %2704 = vst [vmem:[#allocation2 + $0x358] sm:$0xff] %v2576
        %2705 = vst [vmem:[#allocation2 + $0x360] sm:$0xff] %v2577
        %2706 = vst [vmem:[#allocation2 + $0x368] sm:$0xff] %v2578
        %2707 = vst [vmem:[#allocation2 + $0x370] sm:$0xff] %v2579
        %2708 = vst [vmem:[#allocation2 + $0x378] sm:$0xff] %v2580
        %2709 = vst [vmem:[#allocation2 + $0x380] sm:$0xff] %v2581
        %2710 = vst [vmem:[#allocation2 + $0x388] sm:$0xff] %v2582
        %2711 = vst [vmem:[#allocation2 + $0x390] sm:$0xff] %v2583
        %2712 = vst [vmem:[#allocation2 + $0x398] sm:$0xff] %v2584
        %2713 = vst [vmem:[#allocation2 + $0x3a0] sm:$0xff] %v2585
        %2714 = vst [vmem:[#allocation2 + $0x3a8] sm:$0xff] %v2586
        %2715 = vst [vmem:[#allocation2 + $0x3b0] sm:$0xff] %v2587
        %2716 = vst [vmem:[#allocation2 + $0x3b8] sm:$0xff] %v2588
        %2717 = vst [vmem:[#allocation2 + $0x3c0] sm:$0xff] %v2589
        %2718 = vst [vmem:[#allocation2 + $0x3c8] sm:$0xff] %v2590
        %2719 = vst [vmem:[#allocation2 + $0x3d0] sm:$0xff] %v2591
        %2720 = vst [vmem:[#allocation2 + $0x3d8] sm:$0xff] %v2592
        %2721 = vst [vmem:[#allocation2 + $0x3e0] sm:$0xff] %v2593
        %2722 = vst [vmem:[#allocation2 + $0x3e8] sm:$0xff] %v2594
        %2723 = vst [vmem:[#allocation2 + $0x3f0] sm:$0xff] %v2595
        %2724 = vst [vmem:[#allocation2 + $0x3f8] sm:$0xff] %v2596
        // Predicated region
        $region49: #{tpu_custom_call.1} parent=31 // pred_check
          %p2725 = pneg %p285
        $region50: #{tpu_custom_call.1} parent=31 // pred_check_branch
          %2727 = sbr.rel (%p2725) target = $region52
        $region51: #{tpu_custom_call.1} parent=31 // pred_region
          %v2728 = vld [vmem:[#allocation2] sm:$0xff]
          %v2729 = vld [vmem:[#allocation2 + $0x8] sm:$0xff]
          %v2730 = vld [vmem:[#allocation2 + $0x10] sm:$0xff]
          %v2731 = vld [vmem:[#allocation2 + $0x18] sm:$0xff]
          %v2732 = vld [vmem:[#allocation2 + $0x20] sm:$0xff]
          %v2733 = vld [vmem:[#allocation2 + $0x28] sm:$0xff]
          %v2734 = vld [vmem:[#allocation2 + $0x30] sm:$0xff]
          %v2735 = vld [vmem:[#allocation2 + $0x38] sm:$0xff]
          %v2736 = vld [vmem:[#allocation2 + $0x40] sm:$0xff]
          %v2737 = vld [vmem:[#allocation2 + $0x48] sm:$0xff]
          %v2738 = vld [vmem:[#allocation2 + $0x50] sm:$0xff]
          %v2739 = vld [vmem:[#allocation2 + $0x58] sm:$0xff]
          %v2740 = vld [vmem:[#allocation2 + $0x60] sm:$0xff]
          %v2741 = vld [vmem:[#allocation2 + $0x68] sm:$0xff]
          %v2742 = vld [vmem:[#allocation2 + $0x70] sm:$0xff]
          %v2743 = vld [vmem:[#allocation2 + $0x78] sm:$0xff]
          %v2744 = vld [vmem:[#allocation2 + $0x80] sm:$0xff]
          %v2745 = vld [vmem:[#allocation2 + $0x88] sm:$0xff]
          %v2746 = vld [vmem:[#allocation2 + $0x90] sm:$0xff]
          %v2747 = vld [vmem:[#allocation2 + $0x98] sm:$0xff]
          %v2748 = vld [vmem:[#allocation2 + $0xa0] sm:$0xff]
          %v2749 = vld [vmem:[#allocation2 + $0xa8] sm:$0xff]
          %v2750 = vld [vmem:[#allocation2 + $0xb0] sm:$0xff]
          %v2751 = vld [vmem:[#allocation2 + $0xb8] sm:$0xff]
          %v2752 = vld [vmem:[#allocation2 + $0xc0] sm:$0xff]
          %v2753 = vld [vmem:[#allocation2 + $0xc8] sm:$0xff]
          %v2754 = vld [vmem:[#allocation2 + $0xd0] sm:$0xff]
          %v2755 = vld [vmem:[#allocation2 + $0xd8] sm:$0xff]
          %v2756 = vld [vmem:[#allocation2 + $0xe0] sm:$0xff]
          %v2757 = vld [vmem:[#allocation2 + $0xe8] sm:$0xff]
          %v2758 = vld [vmem:[#allocation2 + $0xf0] sm:$0xff]
          %v2759 = vld [vmem:[#allocation2 + $0xf8] sm:$0xff]
          %v2760 = vld [vmem:[#allocation2 + $0x100] sm:$0xff]
          %v2761 = vld [vmem:[#allocation2 + $0x108] sm:$0xff]
          %v2762 = vld [vmem:[#allocation2 + $0x110] sm:$0xff]
          %v2763 = vld [vmem:[#allocation2 + $0x118] sm:$0xff]
          %v2764 = vld [vmem:[#allocation2 + $0x120] sm:$0xff]
          %v2765 = vld [vmem:[#allocation2 + $0x128] sm:$0xff]
          %v2766 = vld [vmem:[#allocation2 + $0x130] sm:$0xff]
          %v2767 = vld [vmem:[#allocation2 + $0x138] sm:$0xff]
          %v2768 = vld [vmem:[#allocation2 + $0x140] sm:$0xff]
          %v2769 = vld [vmem:[#allocation2 + $0x148] sm:$0xff]
          %v2770 = vld [vmem:[#allocation2 + $0x150] sm:$0xff]
          %v2771 = vld [vmem:[#allocation2 + $0x158] sm:$0xff]
          %v2772 = vld [vmem:[#allocation2 + $0x160] sm:$0xff]
          %v2773 = vld [vmem:[#allocation2 + $0x168] sm:$0xff]
          %v2774 = vld [vmem:[#allocation2 + $0x170] sm:$0xff]
          %v2775 = vld [vmem:[#allocation2 + $0x178] sm:$0xff]
          %v2776 = vld [vmem:[#allocation2 + $0x180] sm:$0xff]
          %v2777 = vld [vmem:[#allocation2 + $0x188] sm:$0xff]
          %v2778 = vld [vmem:[#allocation2 + $0x190] sm:$0xff]
          %v2779 = vld [vmem:[#allocation2 + $0x198] sm:$0xff]
          %v2780 = vld [vmem:[#allocation2 + $0x1a0] sm:$0xff]
          %v2781 = vld [vmem:[#allocation2 + $0x1a8] sm:$0xff]
          %v2782 = vld [vmem:[#allocation2 + $0x1b0] sm:$0xff]
          %v2783 = vld [vmem:[#allocation2 + $0x1b8] sm:$0xff]
          %v2784 = vld [vmem:[#allocation2 + $0x1c0] sm:$0xff]
          %v2785 = vld [vmem:[#allocation2 + $0x1c8] sm:$0xff]
          %v2786 = vld [vmem:[#allocation2 + $0x1d0] sm:$0xff]
          %v2787 = vld [vmem:[#allocation2 + $0x1d8] sm:$0xff]
          %v2788 = vld [vmem:[#allocation2 + $0x1e0] sm:$0xff]
          %v2789 = vld [vmem:[#allocation2 + $0x1e8] sm:$0xff]
          %v2790 = vld [vmem:[#allocation2 + $0x1f0] sm:$0xff]
          %v2791 = vld [vmem:[#allocation2 + $0x1f8] sm:$0xff]
          %v2792 = vld [vmem:[#allocation2 + $0x200] sm:$0xff]
          %v2793 = vld [vmem:[#allocation2 + $0x208] sm:$0xff]
          %v2794 = vld [vmem:[#allocation2 + $0x210] sm:$0xff]
          %v2795 = vld [vmem:[#allocation2 + $0x218] sm:$0xff]
          %v2796 = vld [vmem:[#allocation2 + $0x220] sm:$0xff]
          %v2797 = vld [vmem:[#allocation2 + $0x228] sm:$0xff]
          %v2798 = vld [vmem:[#allocation2 + $0x230] sm:$0xff]
          %v2799 = vld [vmem:[#allocation2 + $0x238] sm:$0xff]
          %v2800 = vld [vmem:[#allocation2 + $0x240] sm:$0xff]
          %v2801 = vld [vmem:[#allocation2 + $0x248] sm:$0xff]
          %v2802 = vld [vmem:[#allocation2 + $0x250] sm:$0xff]
          %v2803 = vld [vmem:[#allocation2 + $0x258] sm:$0xff]
          %v2804 = vld [vmem:[#allocation2 + $0x260] sm:$0xff]
          %v2805 = vld [vmem:[#allocation2 + $0x268] sm:$0xff]
          %v2806 = vld [vmem:[#allocation2 + $0x270] sm:$0xff]
          %v2807 = vld [vmem:[#allocation2 + $0x278] sm:$0xff]
          %v2808 = vld [vmem:[#allocation2 + $0x280] sm:$0xff]
          %v2809 = vld [vmem:[#allocation2 + $0x288] sm:$0xff]
          %v2810 = vld [vmem:[#allocation2 + $0x290] sm:$0xff]
          %v2811 = vld [vmem:[#allocation2 + $0x298] sm:$0xff]
          %v2812 = vld [vmem:[#allocation2 + $0x2a0] sm:$0xff]
          %v2813 = vld [vmem:[#allocation2 + $0x2a8] sm:$0xff]
          %v2814 = vld [vmem:[#allocation2 + $0x2b0] sm:$0xff]
          %v2815 = vld [vmem:[#allocation2 + $0x2b8] sm:$0xff]
          %v2816 = vld [vmem:[#allocation2 + $0x2c0] sm:$0xff]
          %v2817 = vld [vmem:[#allocation2 + $0x2c8] sm:$0xff]
          %v2818 = vld [vmem:[#allocation2 + $0x2d0] sm:$0xff]
          %v2819 = vld [vmem:[#allocation2 + $0x2d8] sm:$0xff]
          %v2820 = vld [vmem:[#allocation2 + $0x2e0] sm:$0xff]
          %v2821 = vld [vmem:[#allocation2 + $0x2e8] sm:$0xff]
          %v2822 = vld [vmem:[#allocation2 + $0x2f0] sm:$0xff]
          %v2823 = vld [vmem:[#allocation2 + $0x2f8] sm:$0xff]
          %v2824 = vld [vmem:[#allocation2 + $0x300] sm:$0xff]
          %v2825 = vld [vmem:[#allocation2 + $0x308] sm:$0xff]
          %v2826 = vld [vmem:[#allocation2 + $0x310] sm:$0xff]
          %v2827 = vld [vmem:[#allocation2 + $0x318] sm:$0xff]
          %v2828 = vld [vmem:[#allocation2 + $0x320] sm:$0xff]
          %v2829 = vld [vmem:[#allocation2 + $0x328] sm:$0xff]
          %v2830 = vld [vmem:[#allocation2 + $0x330] sm:$0xff]
          %v2831 = vld [vmem:[#allocation2 + $0x338] sm:$0xff]
          %v2832 = vld [vmem:[#allocation2 + $0x340] sm:$0xff]
          %v2833 = vld [vmem:[#allocation2 + $0x348] sm:$0xff]
          %v2834 = vld [vmem:[#allocation2 + $0x350] sm:$0xff]
          %v2835 = vld [vmem:[#allocation2 + $0x358] sm:$0xff]
          %v2836 = vld [vmem:[#allocation2 + $0x360] sm:$0xff]
          %v2837 = vld [vmem:[#allocation2 + $0x368] sm:$0xff]
          %v2838 = vld [vmem:[#allocation2 + $0x370] sm:$0xff]
          %v2839 = vld [vmem:[#allocation2 + $0x378] sm:$0xff]
          %v2840 = vld [vmem:[#allocation2 + $0x380] sm:$0xff]
          %v2841 = vld [vmem:[#allocation2 + $0x388] sm:$0xff]
          %v2842 = vld [vmem:[#allocation2 + $0x390] sm:$0xff]
          %v2843 = vld [vmem:[#allocation2 + $0x398] sm:$0xff]
          %v2844 = vld [vmem:[#allocation2 + $0x3a0] sm:$0xff]
          %v2845 = vld [vmem:[#allocation2 + $0x3a8] sm:$0xff]
          %v2846 = vld [vmem:[#allocation2 + $0x3b0] sm:$0xff]
          %v2847 = vld [vmem:[#allocation2 + $0x3b8] sm:$0xff]
          %v2848 = vld [vmem:[#allocation2 + $0x3c0] sm:$0xff]
          %v2849 = vld [vmem:[#allocation2 + $0x3c8] sm:$0xff]
          %v2850 = vld [vmem:[#allocation2 + $0x3d0] sm:$0xff]
          %v2851 = vld [vmem:[#allocation2 + $0x3d8] sm:$0xff]
          %v2852 = vld [vmem:[#allocation2 + $0x3e0] sm:$0xff]
          %v2853 = vld [vmem:[#allocation2 + $0x3e8] sm:$0xff]
          %v2854 = vld [vmem:[#allocation2 + $0x3f0] sm:$0xff]
          %v2855 = vld [vmem:[#allocation2 + $0x3f8] sm:$0xff]
          %v2856 = vld [vmem:[%s250] sm:$0xf]
          %v2858 = vlaneseq
          %v2859 = vshrl.u32 %v2858, 7
          %v2860 = vsub.s32 0, %v2859
          %v2861 = vrot.slane %v2856, %v2860
          %v2862 = vlaneseq
          %v2863 = vshrl.u32 %v2862, 7
          %v2864 = vsub.s32 1, %v2863
          %v2865 = vrot.slane %v2856, %v2864
          %v2866 = vlaneseq
          %v2867 = vshrl.u32 %v2866, 7
          %v2868 = vsub.s32 2, %v2867
          %v2869 = vrot.slane %v2856, %v2868
          %v2870 = vlaneseq
          %v2871 = vshrl.u32 %v2870, 7
          %v2872 = vsub.s32 3, %v2871
          %v2873 = vrot.slane %v2856, %v2872
          %v2878 = vadd.f32 %v2728, %v2861
          %v2879 = vadd.f32 %v2729, %v2865
          %v2880 = vadd.f32 %v2730, %v2869
          %v2881 = vadd.f32 %v2731, %v2873
          %v2882 = vadd.f32 %v2732, %v2861
          %v2883 = vadd.f32 %v2733, %v2865
          %v2884 = vadd.f32 %v2734, %v2869
          %v2885 = vadd.f32 %v2735, %v2873
          %v2886 = vadd.f32 %v2736, %v2861
          %v2887 = vadd.f32 %v2737, %v2865
          %v2888 = vadd.f32 %v2738, %v2869
          %v2889 = vadd.f32 %v2739, %v2873
          %v2890 = vadd.f32 %v2740, %v2861
          %v2891 = vadd.f32 %v2741, %v2865
          %v2892 = vadd.f32 %v2742, %v2869
          %v2893 = vadd.f32 %v2743, %v2873
          %v2894 = vadd.f32 %v2744, %v2861
          %v2895 = vadd.f32 %v2745, %v2865
          %v2896 = vadd.f32 %v2746, %v2869
          %v2897 = vadd.f32 %v2747, %v2873
          %v2898 = vadd.f32 %v2748, %v2861
          %v2899 = vadd.f32 %v2749, %v2865
          %v2900 = vadd.f32 %v2750, %v2869
          %v2901 = vadd.f32 %v2751, %v2873
          %v2902 = vadd.f32 %v2752, %v2861
          %v2903 = vadd.f32 %v2753, %v2865
          %v2904 = vadd.f32 %v2754, %v2869
          %v2905 = vadd.f32 %v2755, %v2873
          %v2906 = vadd.f32 %v2756, %v2861
          %v2907 = vadd.f32 %v2757, %v2865
          %v2908 = vadd.f32 %v2758, %v2869
          %v2909 = vadd.f32 %v2759, %v2873
          %v2910 = vadd.f32 %v2760, %v2861
          %v2911 = vadd.f32 %v2761, %v2865
          %v2912 = vadd.f32 %v2762, %v2869
          %v2913 = vadd.f32 %v2763, %v2873
          %v2914 = vadd.f32 %v2764, %v2861
          %v2915 = vadd.f32 %v2765, %v2865
          %v2916 = vadd.f32 %v2766, %v2869
          %v2917 = vadd.f32 %v2767, %v2873
          %v2918 = vadd.f32 %v2768, %v2861
          %v2919 = vadd.f32 %v2769, %v2865
          %v2920 = vadd.f32 %v2770, %v2869
          %v2921 = vadd.f32 %v2771, %v2873
          %v2922 = vadd.f32 %v2772, %v2861
          %v2923 = vadd.f32 %v2773, %v2865
          %v2924 = vadd.f32 %v2774, %v2869
          %v2925 = vadd.f32 %v2775, %v2873
          %v2926 = vadd.f32 %v2776, %v2861
          %v2927 = vadd.f32 %v2777, %v2865
          %v2928 = vadd.f32 %v2778, %v2869
          %v2929 = vadd.f32 %v2779, %v2873
          %v2930 = vadd.f32 %v2780, %v2861
          %v2931 = vadd.f32 %v2781, %v2865
          %v2932 = vadd.f32 %v2782, %v2869
          %v2933 = vadd.f32 %v2783, %v2873
          %v2934 = vadd.f32 %v2784, %v2861
          %v2935 = vadd.f32 %v2785, %v2865
          %v2936 = vadd.f32 %v2786, %v2869
          %v2937 = vadd.f32 %v2787, %v2873
          %v2938 = vadd.f32 %v2788, %v2861
          %v2939 = vadd.f32 %v2789, %v2865
          %v2940 = vadd.f32 %v2790, %v2869
          %v2941 = vadd.f32 %v2791, %v2873
          %v2942 = vadd.f32 %v2792, %v2861
          %v2943 = vadd.f32 %v2793, %v2865
          %v2944 = vadd.f32 %v2794, %v2869
          %v2945 = vadd.f32 %v2795, %v2873
          %v2946 = vadd.f32 %v2796, %v2861
          %v2947 = vadd.f32 %v2797, %v2865
          %v2948 = vadd.f32 %v2798, %v2869
          %v2949 = vadd.f32 %v2799, %v2873
          %v2950 = vadd.f32 %v2800, %v2861
          %v2951 = vadd.f32 %v2801, %v2865
          %v2952 = vadd.f32 %v2802, %v2869
          %v2953 = vadd.f32 %v2803, %v2873
          %v2954 = vadd.f32 %v2804, %v2861
          %v2955 = vadd.f32 %v2805, %v2865
          %v2956 = vadd.f32 %v2806, %v2869
          %v2957 = vadd.f32 %v2807, %v2873
          %v2958 = vadd.f32 %v2808, %v2861
          %v2959 = vadd.f32 %v2809, %v2865
          %v2960 = vadd.f32 %v2810, %v2869
          %v2961 = vadd.f32 %v2811, %v2873
          %v2962 = vadd.f32 %v2812, %v2861
          %v2963 = vadd.f32 %v2813, %v2865
          %v2964 = vadd.f32 %v2814, %v2869
          %v2965 = vadd.f32 %v2815, %v2873
          %v2966 = vadd.f32 %v2816, %v2861
          %v2967 = vadd.f32 %v2817, %v2865
          %v2968 = vadd.f32 %v2818, %v2869
          %v2969 = vadd.f32 %v2819, %v2873
          %v2970 = vadd.f32 %v2820, %v2861
          %v2971 = vadd.f32 %v2821, %v2865
          %v2972 = vadd.f32 %v2822, %v2869
          %v2973 = vadd.f32 %v2823, %v2873
          %v2974 = vadd.f32 %v2824, %v2861
          %v2975 = vadd.f32 %v2825, %v2865
          %v2976 = vadd.f32 %v2826, %v2869
          %v2977 = vadd.f32 %v2827, %v2873
          %v2978 = vadd.f32 %v2828, %v2861
          %v2979 = vadd.f32 %v2829, %v2865
          %v2980 = vadd.f32 %v2830, %v2869
          %v2981 = vadd.f32 %v2831, %v2873
          %v2982 = vadd.f32 %v2832, %v2861
          %v2983 = vadd.f32 %v2833, %v2865
          %v2984 = vadd.f32 %v2834, %v2869
          %v2985 = vadd.f32 %v2835, %v2873
          %v2986 = vadd.f32 %v2836, %v2861
          %v2987 = vadd.f32 %v2837, %v2865
          %v2988 = vadd.f32 %v2838, %v2869
          %v2989 = vadd.f32 %v2839, %v2873
          %v2990 = vadd.f32 %v2840, %v2861
          %v2991 = vadd.f32 %v2841, %v2865
          %v2992 = vadd.f32 %v2842, %v2869
          %v2993 = vadd.f32 %v2843, %v2873
          %v2994 = vadd.f32 %v2844, %v2861
          %v2995 = vadd.f32 %v2845, %v2865
          %v2996 = vadd.f32 %v2846, %v2869
          %v2997 = vadd.f32 %v2847, %v2873
          %v2998 = vadd.f32 %v2848, %v2861
          %v2999 = vadd.f32 %v2849, %v2865
          %v3000 = vadd.f32 %v2850, %v2869
          %v3001 = vadd.f32 %v2851, %v2873
          %v3002 = vadd.f32 %v2852, %v2861
          %v3003 = vadd.f32 %v2853, %v2865
          %v3004 = vadd.f32 %v2854, %v2869
          %v3005 = vadd.f32 %v2855, %v2873
          %v3006 = vpack.c.bf16 %v2882, %v2878
          %v3007 = vpack.c.bf16 %v2883, %v2879
          %v3008 = vpack.c.bf16 %v2884, %v2880
          %v3009 = vpack.c.bf16 %v2885, %v2881
          %v3010 = vpack.c.bf16 %v2890, %v2886
          %v3011 = vpack.c.bf16 %v2891, %v2887
          %v3012 = vpack.c.bf16 %v2892, %v2888
          %v3013 = vpack.c.bf16 %v2893, %v2889
          %v3014 = vpack.c.bf16 %v2898, %v2894
          %v3015 = vpack.c.bf16 %v2899, %v2895
          %v3016 = vpack.c.bf16 %v2900, %v2896
          %v3017 = vpack.c.bf16 %v2901, %v2897
          %v3018 = vpack.c.bf16 %v2906, %v2902
          %v3019 = vpack.c.bf16 %v2907, %v2903
          %v3020 = vpack.c.bf16 %v2908, %v2904
          %v3021 = vpack.c.bf16 %v2909, %v2905
          %v3022 = vpack.c.bf16 %v2914, %v2910
          %v3023 = vpack.c.bf16 %v2915, %v2911
          %v3024 = vpack.c.bf16 %v2916, %v2912
          %v3025 = vpack.c.bf16 %v2917, %v2913
          %v3026 = vpack.c.bf16 %v2922, %v2918
          %v3027 = vpack.c.bf16 %v2923, %v2919
          %v3028 = vpack.c.bf16 %v2924, %v2920
          %v3029 = vpack.c.bf16 %v2925, %v2921
          %v3030 = vpack.c.bf16 %v2930, %v2926
          %v3031 = vpack.c.bf16 %v2931, %v2927
          %v3032 = vpack.c.bf16 %v2932, %v2928
          %v3033 = vpack.c.bf16 %v2933, %v2929
          %v3034 = vpack.c.bf16 %v2938, %v2934
          %v3035 = vpack.c.bf16 %v2939, %v2935
          %v3036 = vpack.c.bf16 %v2940, %v2936
          %v3037 = vpack.c.bf16 %v2941, %v2937
          %v3038 = vpack.c.bf16 %v2946, %v2942
          %v3039 = vpack.c.bf16 %v2947, %v2943
          %v3040 = vpack.c.bf16 %v2948, %v2944
          %v3041 = vpack.c.bf16 %v2949, %v2945
          %v3042 = vpack.c.bf16 %v2954, %v2950
          %v3043 = vpack.c.bf16 %v2955, %v2951
          %v3044 = vpack.c.bf16 %v2956, %v2952
          %v3045 = vpack.c.bf16 %v2957, %v2953
          %v3046 = vpack.c.bf16 %v2962, %v2958
          %v3047 = vpack.c.bf16 %v2963, %v2959
          %v3048 = vpack.c.bf16 %v2964, %v2960
          %v3049 = vpack.c.bf16 %v2965, %v2961
          %v3050 = vpack.c.bf16 %v2970, %v2966
          %v3051 = vpack.c.bf16 %v2971, %v2967
          %v3052 = vpack.c.bf16 %v2972, %v2968
          %v3053 = vpack.c.bf16 %v2973, %v2969
          %v3054 = vpack.c.bf16 %v2978, %v2974
          %v3055 = vpack.c.bf16 %v2979, %v2975
          %v3056 = vpack.c.bf16 %v2980, %v2976
          %v3057 = vpack.c.bf16 %v2981, %v2977
          %v3058 = vpack.c.bf16 %v2986, %v2982
          %v3059 = vpack.c.bf16 %v2987, %v2983
          %v3060 = vpack.c.bf16 %v2988, %v2984
          %v3061 = vpack.c.bf16 %v2989, %v2985
          %v3062 = vpack.c.bf16 %v2994, %v2990
          %v3063 = vpack.c.bf16 %v2995, %v2991
          %v3064 = vpack.c.bf16 %v2996, %v2992
          %v3065 = vpack.c.bf16 %v2997, %v2993
          %v3066 = vpack.c.bf16 %v3002, %v2998
          %v3067 = vpack.c.bf16 %v3003, %v2999
          %v3068 = vpack.c.bf16 %v3004, %v3000
          %v3069 = vpack.c.bf16 %v3005, %v3001
          %v3134 = vunpack.c.l.b16 %v3006
          %v3135 = vunpack.c.l.b16 %v3007
          %v3136 = vunpack.c.l.b16 %v3008
          %v3137 = vunpack.c.l.b16 %v3009
          %v3138 = vunpack.c.h.b16 %v3006
          %v3139 = vunpack.c.h.b16 %v3007
          %v3140 = vunpack.c.h.b16 %v3008
          %v3141 = vunpack.c.h.b16 %v3009
          %v3142 = vunpack.c.l.b16 %v3010
          %v3143 = vunpack.c.l.b16 %v3011
          %v3144 = vunpack.c.l.b16 %v3012
          %v3145 = vunpack.c.l.b16 %v3013
          %v3146 = vunpack.c.h.b16 %v3010
          %v3147 = vunpack.c.h.b16 %v3011
          %v3148 = vunpack.c.h.b16 %v3012
          %v3149 = vunpack.c.h.b16 %v3013
          %v3150 = vunpack.c.l.b16 %v3014
          %v3151 = vunpack.c.l.b16 %v3015
          %v3152 = vunpack.c.l.b16 %v3016
          %v3153 = vunpack.c.l.b16 %v3017
          %v3154 = vunpack.c.h.b16 %v3014
          %v3155 = vunpack.c.h.b16 %v3015
          %v3156 = vunpack.c.h.b16 %v3016
          %v3157 = vunpack.c.h.b16 %v3017
          %v3158 = vunpack.c.l.b16 %v3018
          %v3159 = vunpack.c.l.b16 %v3019
          %v3160 = vunpack.c.l.b16 %v3020
          %v3161 = vunpack.c.l.b16 %v3021
          %v3162 = vunpack.c.h.b16 %v3018
          %v3163 = vunpack.c.h.b16 %v3019
          %v3164 = vunpack.c.h.b16 %v3020
          %v3165 = vunpack.c.h.b16 %v3021
          %v3166 = vunpack.c.l.b16 %v3022
          %v3167 = vunpack.c.l.b16 %v3023
          %v3168 = vunpack.c.l.b16 %v3024
          %v3169 = vunpack.c.l.b16 %v3025
          %v3170 = vunpack.c.h.b16 %v3022
          %v3171 = vunpack.c.h.b16 %v3023
          %v3172 = vunpack.c.h.b16 %v3024
          %v3173 = vunpack.c.h.b16 %v3025
          %v3174 = vunpack.c.l.b16 %v3026
          %v3175 = vunpack.c.l.b16 %v3027
          %v3176 = vunpack.c.l.b16 %v3028
          %v3177 = vunpack.c.l.b16 %v3029
          %v3178 = vunpack.c.h.b16 %v3026
          %v3179 = vunpack.c.h.b16 %v3027
          %v3180 = vunpack.c.h.b16 %v3028
          %v3181 = vunpack.c.h.b16 %v3029
          %v3182 = vunpack.c.l.b16 %v3030
          %v3183 = vunpack.c.l.b16 %v3031
          %v3184 = vunpack.c.l.b16 %v3032
          %v3185 = vunpack.c.l.b16 %v3033
          %v3186 = vunpack.c.h.b16 %v3030
          %v3187 = vunpack.c.h.b16 %v3031
          %v3188 = vunpack.c.h.b16 %v3032
          %v3189 = vunpack.c.h.b16 %v3033
          %v3190 = vunpack.c.l.b16 %v3034
          %v3191 = vunpack.c.l.b16 %v3035
          %v3192 = vunpack.c.l.b16 %v3036
          %v3193 = vunpack.c.l.b16 %v3037
          %v3194 = vunpack.c.h.b16 %v3034
          %v3195 = vunpack.c.h.b16 %v3035
          %v3196 = vunpack.c.h.b16 %v3036
          %v3197 = vunpack.c.h.b16 %v3037
          %v3198 = vunpack.c.l.b16 %v3038
          %v3199 = vunpack.c.l.b16 %v3039
          %v3200 = vunpack.c.l.b16 %v3040
          %v3201 = vunpack.c.l.b16 %v3041
          %v3202 = vunpack.c.h.b16 %v3038
          %v3203 = vunpack.c.h.b16 %v3039
          %v3204 = vunpack.c.h.b16 %v3040
          %v3205 = vunpack.c.h.b16 %v3041
          %v3206 = vunpack.c.l.b16 %v3042
          %v3207 = vunpack.c.l.b16 %v3043
          %v3208 = vunpack.c.l.b16 %v3044
          %v3209 = vunpack.c.l.b16 %v3045
          %v3210 = vunpack.c.h.b16 %v3042
          %v3211 = vunpack.c.h.b16 %v3043
          %v3212 = vunpack.c.h.b16 %v3044
          %v3213 = vunpack.c.h.b16 %v3045
          %v3214 = vunpack.c.l.b16 %v3046
          %v3215 = vunpack.c.l.b16 %v3047
          %v3216 = vunpack.c.l.b16 %v3048
          %v3217 = vunpack.c.l.b16 %v3049
          %v3218 = vunpack.c.h.b16 %v3046
          %v3219 = vunpack.c.h.b16 %v3047
          %v3220 = vunpack.c.h.b16 %v3048
          %v3221 = vunpack.c.h.b16 %v3049
          %v3222 = vunpack.c.l.b16 %v3050
          %v3223 = vunpack.c.l.b16 %v3051
          %v3224 = vunpack.c.l.b16 %v3052
          %v3225 = vunpack.c.l.b16 %v3053
          %v3226 = vunpack.c.h.b16 %v3050
          %v3227 = vunpack.c.h.b16 %v3051
          %v3228 = vunpack.c.h.b16 %v3052
          %v3229 = vunpack.c.h.b16 %v3053
          %v3230 = vunpack.c.l.b16 %v3054
          %v3231 = vunpack.c.l.b16 %v3055
          %v3232 = vunpack.c.l.b16 %v3056
          %v3233 = vunpack.c.l.b16 %v3057
          %v3234 = vunpack.c.h.b16 %v3054
          %v3235 = vunpack.c.h.b16 %v3055
          %v3236 = vunpack.c.h.b16 %v3056
          %v3237 = vunpack.c.h.b16 %v3057
          %v3238 = vunpack.c.l.b16 %v3058
          %v3239 = vunpack.c.l.b16 %v3059
          %v3240 = vunpack.c.l.b16 %v3060
          %v3241 = vunpack.c.l.b16 %v3061
          %v3242 = vunpack.c.h.b16 %v3058
          %v3243 = vunpack.c.h.b16 %v3059
          %v3244 = vunpack.c.h.b16 %v3060
          %v3245 = vunpack.c.h.b16 %v3061
          %v3246 = vunpack.c.l.b16 %v3062
          %v3247 = vunpack.c.l.b16 %v3063
          %v3248 = vunpack.c.l.b16 %v3064
          %v3249 = vunpack.c.l.b16 %v3065
          %v3250 = vunpack.c.h.b16 %v3062
          %v3251 = vunpack.c.h.b16 %v3063
          %v3252 = vunpack.c.h.b16 %v3064
          %v3253 = vunpack.c.h.b16 %v3065
          %v3254 = vunpack.c.l.b16 %v3066
          %v3255 = vunpack.c.l.b16 %v3067
          %v3256 = vunpack.c.l.b16 %v3068
          %v3257 = vunpack.c.l.b16 %v3069
          %v3258 = vunpack.c.h.b16 %v3066
          %v3259 = vunpack.c.h.b16 %v3067
          %v3260 = vunpack.c.h.b16 %v3068
          %v3261 = vunpack.c.h.b16 %v3069
          %v3262 = vpack.c.b16 %v3135, %v3134
          %v3263 = vpack.c.b16 %v3137, %v3136
          %v3264 = vpack.c.b16 %v3139, %v3138
          %v3265 = vpack.c.b16 %v3141, %v3140
          %v3266 = vpack.c.b16 %v3143, %v3142
          %v3267 = vpack.c.b16 %v3145, %v3144
          %v3268 = vpack.c.b16 %v3147, %v3146
          %v3269 = vpack.c.b16 %v3149, %v3148
          %v3270 = vpack.c.b16 %v3151, %v3150
          %v3271 = vpack.c.b16 %v3153, %v3152
          %v3272 = vpack.c.b16 %v3155, %v3154
          %v3273 = vpack.c.b16 %v3157, %v3156
          %v3274 = vpack.c.b16 %v3159, %v3158
          %v3275 = vpack.c.b16 %v3161, %v3160
          %v3276 = vpack.c.b16 %v3163, %v3162
          %v3277 = vpack.c.b16 %v3165, %v3164
          %v3278 = vpack.c.b16 %v3167, %v3166
          %v3279 = vpack.c.b16 %v3169, %v3168
          %v3280 = vpack.c.b16 %v3171, %v3170
          %v3281 = vpack.c.b16 %v3173, %v3172
          %v3282 = vpack.c.b16 %v3175, %v3174
          %v3283 = vpack.c.b16 %v3177, %v3176
          %v3284 = vpack.c.b16 %v3179, %v3178
          %v3285 = vpack.c.b16 %v3181, %v3180
          %v3286 = vpack.c.b16 %v3183, %v3182
          %v3287 = vpack.c.b16 %v3185, %v3184
          %v3288 = vpack.c.b16 %v3187, %v3186
          %v3289 = vpack.c.b16 %v3189, %v3188
          %v3290 = vpack.c.b16 %v3191, %v3190
          %v3291 = vpack.c.b16 %v3193, %v3192
          %v3292 = vpack.c.b16 %v3195, %v3194
          %v3293 = vpack.c.b16 %v3197, %v3196
          %v3294 = vpack.c.b16 %v3199, %v3198
          %v3295 = vpack.c.b16 %v3201, %v3200
          %v3296 = vpack.c.b16 %v3203, %v3202
          %v3297 = vpack.c.b16 %v3205, %v3204
          %v3298 = vpack.c.b16 %v3207, %v3206
          %v3299 = vpack.c.b16 %v3209, %v3208
          %v3300 = vpack.c.b16 %v3211, %v3210
          %v3301 = vpack.c.b16 %v3213, %v3212
          %v3302 = vpack.c.b16 %v3215, %v3214
          %v3303 = vpack.c.b16 %v3217, %v3216
          %v3304 = vpack.c.b16 %v3219, %v3218
          %v3305 = vpack.c.b16 %v3221, %v3220
          %v3306 = vpack.c.b16 %v3223, %v3222
          %v3307 = vpack.c.b16 %v3225, %v3224
          %v3308 = vpack.c.b16 %v3227, %v3226
          %v3309 = vpack.c.b16 %v3229, %v3228
          %v3310 = vpack.c.b16 %v3231, %v3230
          %v3311 = vpack.c.b16 %v3233, %v3232
          %v3312 = vpack.c.b16 %v3235, %v3234
          %v3313 = vpack.c.b16 %v3237, %v3236
          %v3314 = vpack.c.b16 %v3239, %v3238
          %v3315 = vpack.c.b16 %v3241, %v3240
          %v3316 = vpack.c.b16 %v3243, %v3242
          %v3317 = vpack.c.b16 %v3245, %v3244
          %v3318 = vpack.c.b16 %v3247, %v3246
          %v3319 = vpack.c.b16 %v3249, %v3248
          %v3320 = vpack.c.b16 %v3251, %v3250
          %v3321 = vpack.c.b16 %v3253, %v3252
          %v3322 = vpack.c.b16 %v3255, %v3254
          %v3323 = vpack.c.b16 %v3257, %v3256
          %v3324 = vpack.c.b16 %v3259, %v3258
          %v3325 = vpack.c.b16 %v3261, %v3260
          %3390 = vst [vmem:[%s277] sm:$0xff] %v3262
          %3391 = vst [vmem:[%s277 + $0x8] sm:$0xff] %v3263
          %3392 = vst [vmem:[%s277 + $0x10] sm:$0xff] %v3264
          %3393 = vst [vmem:[%s277 + $0x18] sm:$0xff] %v3265
          %3394 = vst [vmem:[%s277 + $0x20] sm:$0xff] %v3266
          %3395 = vst [vmem:[%s277 + $0x28] sm:$0xff] %v3267
          %3396 = vst [vmem:[%s277 + $0x30] sm:$0xff] %v3268
          %3397 = vst [vmem:[%s277 + $0x38] sm:$0xff] %v3269
          %3398 = vst [vmem:[%s277 + $0x40] sm:$0xff] %v3270
          %3399 = vst [vmem:[%s277 + $0x48] sm:$0xff] %v3271
          %3400 = vst [vmem:[%s277 + $0x50] sm:$0xff] %v3272
          %3401 = vst [vmem:[%s277 + $0x58] sm:$0xff] %v3273
          %3402 = vst [vmem:[%s277 + $0x60] sm:$0xff] %v3274
          %3403 = vst [vmem:[%s277 + $0x68] sm:$0xff] %v3275
          %3404 = vst [vmem:[%s277 + $0x70] sm:$0xff] %v3276
          %3405 = vst [vmem:[%s277 + $0x78] sm:$0xff] %v3277
          %3406 = vst [vmem:[%s277 + $0x80] sm:$0xff] %v3278
          %3407 = vst [vmem:[%s277 + $0x88] sm:$0xff] %v3279
          %3408 = vst [vmem:[%s277 + $0x90] sm:$0xff] %v3280
          %3409 = vst [vmem:[%s277 + $0x98] sm:$0xff] %v3281
          %3410 = vst [vmem:[%s277 + $0xa0] sm:$0xff] %v3282
          %3411 = vst [vmem:[%s277 + $0xa8] sm:$0xff] %v3283
          %3412 = vst [vmem:[%s277 + $0xb0] sm:$0xff] %v3284
          %3413 = vst [vmem:[%s277 + $0xb8] sm:$0xff] %v3285
          %3414 = vst [vmem:[%s277 + $0xc0] sm:$0xff] %v3286
          %3415 = vst [vmem:[%s277 + $0xc8] sm:$0xff] %v3287
          %3416 = vst [vmem:[%s277 + $0xd0] sm:$0xff] %v3288
          %3417 = vst [vmem:[%s277 + $0xd8] sm:$0xff] %v3289
          %3418 = vst [vmem:[%s277 + $0xe0] sm:$0xff] %v3290
          %3419 = vst [vmem:[%s277 + $0xe8] sm:$0xff] %v3291
          %3420 = vst [vmem:[%s277 + $0xf0] sm:$0xff] %v3292
          %3421 = vst [vmem:[%s277 + $0xf8] sm:$0xff] %v3293
          %3422 = vst [vmem:[%s277 + $0x100] sm:$0xff] %v3294
          %3423 = vst [vmem:[%s277 + $0x108] sm:$0xff] %v3295
          %3424 = vst [vmem:[%s277 + $0x110] sm:$0xff] %v3296
          %3425 = vst [vmem:[%s277 + $0x118] sm:$0xff] %v3297
          %3426 = vst [vmem:[%s277 + $0x120] sm:$0xff] %v3298
          %3427 = vst [vmem:[%s277 + $0x128] sm:$0xff] %v3299
          %3428 = vst [vmem:[%s277 + $0x130] sm:$0xff] %v3300
          %3429 = vst [vmem:[%s277 + $0x138] sm:$0xff] %v3301
          %3430 = vst [vmem:[%s277 + $0x140] sm:$0xff] %v3302
          %3431 = vst [vmem:[%s277 + $0x148] sm:$0xff] %v3303
          %3432 = vst [vmem:[%s277 + $0x150] sm:$0xff] %v3304
          %3433 = vst [vmem:[%s277 + $0x158] sm:$0xff] %v3305
          %3434 = vst [vmem:[%s277 + $0x160] sm:$0xff] %v3306
          %3435 = vst [vmem:[%s277 + $0x168] sm:$0xff] %v3307
          %3436 = vst [vmem:[%s277 + $0x170] sm:$0xff] %v3308
          %3437 = vst [vmem:[%s277 + $0x178] sm:$0xff] %v3309
          %3438 = vst [vmem:[%s277 + $0x180] sm:$0xff] %v3310
          %3439 = vst [vmem:[%s277 + $0x188] sm:$0xff] %v3311
          %3440 = vst [vmem:[%s277 + $0x190] sm:$0xff] %v3312
          %3441 = vst [vmem:[%s277 + $0x198] sm:$0xff] %v3313
          %3442 = vst [vmem:[%s277 + $0x1a0] sm:$0xff] %v3314
          %3443 = vst [vmem:[%s277 + $0x1a8] sm:$0xff] %v3315
          %3444 = vst [vmem:[%s277 + $0x1b0] sm:$0xff] %v3316
          %3445 = vst [vmem:[%s277 + $0x1b8] sm:$0xff] %v3317
          %3446 = vst [vmem:[%s277 + $0x1c0] sm:$0xff] %v3318
          %3447 = vst [vmem:[%s277 + $0x1c8] sm:$0xff] %v3319
          %3448 = vst [vmem:[%s277 + $0x1d0] sm:$0xff] %v3320
          %3449 = vst [vmem:[%s277 + $0x1d8] sm:$0xff] %v3321
          %3450 = vst [vmem:[%s277 + $0x1e0] sm:$0xff] %v3322
          %3451 = vst [vmem:[%s277 + $0x1e8] sm:$0xff] %v3323
          %3452 = vst [vmem:[%s277 + $0x1f0] sm:$0xff] %v3324
          %3453 = vst [vmem:[%s277 + $0x1f8] sm:$0xff] %v3325
        $region52: #{tpu_custom_call.1} parent=31 // pred_fallthru
          _
        %s3454 = sand.u32 %s132, 1
        %s3455 = scalar_lea.sflag [#allocation5], %s3454
        %s3456 = sand.u32 %s132, 1
        %s3457 = smul.addr %s3456, 512
        %s3458 = scalar_lea.vmem [#allocation9], %s3457
        // Predicated region
        $region53: #{tpu_custom_call.1} parent=31 // pred_check
          %p3459 = pneg %p142
        $region54: #{tpu_custom_call.1} parent=31 // pred_check_branch
          %3461 = sbr.rel (%p3459) target = $region56
        $region55: #{tpu_custom_call.1} parent=31 // pred_region
          %s3462 = smul.u32 32, %s26
          %s3463 = smul.u32 4, %s27
          %s3465 = ssub.s32 8192, 8192
          %3466 = vsyncadd %s3455, %s3465
          %s3467 = smul.addr %s3462, 12
          %s3468 = sadd.s32 %s3463, %s3467
          %s3469 = smul.addr %s3468, 64
          %s3470 = scalar_lea.hbm %s3, %s3469
          %s3471 = sshll.u32 %s3458, 4
          %s3472 = int_to_ptr.vmem [resolvable:$true] %s3471
          %3477 = dma.vmem_to_hbm [thread:$0]  %s3472, 8192, %s3470, %s3455, 256, 768, 16
        $region56: #{tpu_custom_call.1} parent=31 // pred_fallthru
          _
      $region32: #{tpu_custom_call.1} parent=5 // pred_fallthru
        _
      %p3478 = scmp.le.s32.totalorder 2, %s16
      // Predicated region
      $region57: #{tpu_custom_call.1} parent=5 // pred_check
        %p3479 = pneg %p3478
      $region58: #{tpu_custom_call.1} parent=5 // pred_check_branch
        %3481 = sbr.rel (%p3479) target = $region60
      $region59: #{tpu_custom_call.1} parent=5 // pred_region
        %s3482 = ssub.s32 %s16, 2
        // Predicated region
        $region61: #{tpu_custom_call.1} parent=59 // pred_check
          %p3483 = pneg %p148
        $region62: #{tpu_custom_call.1} parent=59 // pred_check_branch
          %3485 = sbr.rel (%p3483) target = $region64
        $region63: #{tpu_custom_call.1} parent=59 // pred_region
          %s3486 = sand.u32 %s133, 1
          %s3487 = scalar_lea.sflag [#allocation5], %s3486
          %s3488 = sand.u32 %s133, 1
          %s3489 = smul.addr %s3488, 512
          %s3490 = scalar_lea.vmem [#allocation9], %s3489
          %3491 = dma.done %s3487, 8192
        $region64: #{tpu_custom_call.1} parent=59 // pred_fallthru
          _
      $region60: #{tpu_custom_call.1} parent=5 // pred_fallthru
        _
    $region6: #{tpu_custom_call.1} parent=1 // loop_footer
      %s20 = sadd.s32 1, %s16
    $region7: #{tpu_custom_call.1} parent=1 // loop_footer_branch
      %15 = sbr.rel target = $region3
    $region8: #{tpu_custom_call.1} parent=1 // loop_exit
      _
    %3492 = vsyncpa [#allocation4], 1
    %s3493 = scalar_lea.sflag [#allocation4], 1
    %3494 = vsyncpa %s3493, 1
    %3495 = vsyncpa [#allocation7], 1
    %s3496 = scalar_lea.sflag [#allocation7], 1
    %3497 = vsyncpa %s3496, 1
    %3498 = vsyncpa [#allocation5], 1
    %s3499 = scalar_lea.sflag [#allocation5], 1
    %3500 = vsyncpa %s3499, 1

</llo_original>
